<compile_context>
chip_gen: v6e
topology: v6e:2x2x1
jax: 0.10.0
libtpu: 0.0.40
codegen_flags: <defaults>
</compile_context>

<pallas_src>
import jax
import jax.numpy as jnp
from jax.experimental import pallas as pl
from jax.experimental.pallas import tpu as pltpu

PRETRAINED_VECTOR_SIZE = 16  # stand-in for the module-level constant


def _round8(x):
    return (x + 7) // 8 * 8


# ------------------------- parameter packing -------------------------------- #

class _RowPacker:
    """Stacks 2-D blocks into one (rows, ncols) f32 buffer.

    Every block starts at an 8-aligned (sublane-aligned) row offset and is
    zero padded on the right to `ncols`, so every in-kernel static slice
    `ref[off:off+r, :]` is layout friendly.
    """

    def __init__(self, ncols):
        self.ncols = ncols
        self._blocks = []
        self._rows = 0

    def add(self, arr):
        arr = jnp.asarray(arr, jnp.float32)
        if arr.ndim == 1:
            arr = arr.reshape(1, -1)
        r, c = arr.shape
        assert c <= self.ncols
        off = self._rows
        rp = _round8(r)
        self._blocks.append((arr, rp))
        self._rows += rp
        return off

    def finalize(self):
        pads = [jnp.pad(a, ((0, rp - a.shape[0]), (0, self.ncols - a.shape[1])))
                for a, rp in self._blocks]
        return jnp.concatenate(pads, axis=0)


def init_params(key, in_feats, n_objects, n_hidden, n_classes, n_layers,
                n_etypes):
    """Builds the packed parameter buffer and the static offset plan."""
    N, H, E, C, P = n_objects, n_hidden, n_etypes, n_classes, PRETRAINED_VECTOR_SIZE
    assert H % 8 == 0 and C <= H

    def dense(k, shape, scale):
        return (scale * jax.random.normal(k, shape)).astype(jnp.float32)

    keys = iter(jax.random.split(key, 1024))
    pk = _RowPacker(H)

    # n_layers + 1 GatedHeteroRGCN layers total (matches the torch module).
    layer_fins = [in_feats] + [H] * n_layers
    wm_off, wg_off, bm_off, bg_off = [], [], [], []
    for fin in layer_fins:
        s = 1.0 / jnp.sqrt(fin)
        wm_off.append([pk.add(dense(next(keys), (fin, H), s)) for _ in range(E)])
        wg_off.append([pk.add(dense(next(keys), (fin, H), s)) for _ in range(E)])
        bm_off.append([pk.add(dense(next(keys), (1, H), 0.01)) for _ in range(E)])
        bg_off.append([pk.add(dense(next(keys), (1, H), 0.01)) for _ in range(E)])

    d_in = H * N + 2 * P
    fc1_w = dense(next(keys), (d_in, H), 1.0 / jnp.sqrt(d_in))
    # Split fc1 so the kernel never materializes the flatten/concat:
    # rows [n*H:(n+1)*H] multiply node n (torch node-major flatten order),
    # then the goalVec rows, then the goalObjectsVec rows.
    fc1_scene = [pk.add(fc1_w[n * H:(n + 1) * H, :]) for n in range(N)]
    fc1_goal = pk.add(fc1_w[N * H:N * H + P, :])
    fc1_gobj = pk.add(fc1_w[N * H + P:, :])
    fc1_b = pk.add(dense(next(keys), (1, H), 0.01))
    fc2_w = pk.add(dense(next(keys), (H, H), 1.0 / jnp.sqrt(H)))
    fc2_b = pk.add(dense(next(keys), (1, H), 0.01))
    fc3_w = pk.add(dense(next(keys), (H, C), 1.0 / jnp.sqrt(H)))
    fc3_b = pk.add(dense(next(keys), (1, C), 0.01))

    wbuf = pk.finalize()

    plan = dict(
        n_objects=N, n_hidden=H, n_etypes=E, n_classes=C, p=P,
        in_feats=in_feats, layer_fins=tuple(layer_fins),
        wm=tuple(map(tuple, wm_off)), wg=tuple(map(tuple, wg_off)),
        bm=tuple(map(tuple, bm_off)), bg=tuple(map(tuple, bg_off)),
        fc1_scene=tuple(fc1_scene), fc1_goal=fc1_goal, fc1_gobj=fc1_gobj,
        fc1_b=fc1_b, fc2_w=fc2_w, fc2_b=fc2_b, fc3_w=fc3_w, fc3_b=fc3_b,
    )
    return wbuf, plan


# ----------------------------- fused kernel --------------------------------- #

def _make_kernel(plan):
    N, H, E = plan["n_objects"], plan["n_hidden"], plan["n_etypes"]
    C, P, F0 = plan["n_classes"], plan["p"], plan["in_feats"]
    fins = plan["layer_fins"]
    Np = _round8(N)
    f32 = jnp.float32

    def kernel(adj_ref, x_ref, w_ref, out_ref):
        def wslice(off, rows):
            return w_ref[off:off + rows, :]          # static, 8-aligned slice

        def mm(a, b):
            return jnp.dot(a, b, preferred_element_type=f32)

        # Per-edge-type dense adjacency, read once (static leading-axis index).
        adjs = [adj_ref[e] for e in range(E)]

        # ---- GatedHeteroRGCN layers: acc += A_e @ (sigmoid(hWg+bg)*(hWm+bm))
        h = x_ref[0:N, 0:F0]
        for l, fin in enumerate(fins):
            acc = jnp.zeros((N, H), f32)
            for e in range(E):
                msg = mm(h, wslice(plan["wm"][l][e], fin)) + wslice(plan["bm"][l][e], 1)
                gate = jax.nn.sigmoid(
                    mm(h, wslice(plan["wg"][l][e], fin)) + wslice(plan["bg"][l][e], 1))
                acc = acc + mm(adjs[e], gate * msg)
            h = jnp.maximum(acc, 0.0)

        # ---- fc1 over [flatten(h), goalVec, goalObjectsVec] without concat --
        goal = x_ref[Np:Np + 1, 0:P]
        gobj = x_ref[Np + 8:Np + 9, 0:P]
        acc1 = (mm(goal, wslice(plan["fc1_goal"], P))
                + mm(gobj, wslice(plan["fc1_gobj"], P))
                + wslice(plan["fc1_b"], 1))
        for n in range(N):
            acc1 = acc1 + mm(h[n:n + 1, :], wslice(plan["fc1_scene"][n], H))
        x1 = jnp.maximum(acc1, 0.0)

        # ---- fc2 (relu) -> fc3 (sigmoid) ------------------------------------
        x2 = jnp.maximum(mm(x1, wslice(plan["fc2_w"], H)) + wslice(plan["fc2_b"], 1), 0.0)
        y = jax.nn.sigmoid(mm(x2, wslice(plan["fc3_w"], H)) + wslice(plan["fc3_b"], 1))
        out_ref[...] = y[:, 0:C]                     # fc3 cols are zero-padded to H

    return kernel


# ----------------------------- wrapper --------------------------------------- #

def build_forward(plan, wbuf):
    N, F0, P, C = plan["n_objects"], plan["in_feats"], plan["p"], plan["n_classes"]
    Np = _round8(N)
    Cx = max(F0, P)
    kernel = _make_kernel(plan)
    vmem = pl.BlockSpec(memory_space=pltpu.MemorySpace.VMEM)

    call = pl.pallas_call(
        kernel,
        out_shape=jax.ShapeDtypeStruct((1, C), jnp.float32),
        in_specs=[vmem, vmem, vmem],
        out_specs=vmem,
    )

    @jax.jit
    def forward(adj, node_feat, goal_vec, goal_objects_vec):
        # One tiny fused XLA op builds the single activation buffer so the
        # kernel sees exactly three input DMAs: adj, x, packed params.
        x = jnp.zeros((Np + 16, Cx), jnp.float32)
        x = x.at[0:N, 0:F0].set(node_feat.astype(jnp.float32))
        x = x.at[Np, 0:P].set(goal_vec.astype(jnp.float32))
        x = x.at[Np + 8, 0:P].set(goal_objects_vec.astype(jnp.float32))
        out = call(adj.astype(jnp.float32), x, wbuf)
        return out.reshape(-1)                        # 1-D, like torch

    return forward


# ----------------------------- pure-JAX reference ---------------------------- #

def reference_forward(plan, wbuf, adj, node_feat, goal_vec, goal_objects_vec):
    N, H, E = plan["n_objects"], plan["n_hidden"], plan["n_etypes"]
    C, P = plan["n_classes"], plan["p"]
    hi = jax.lax.Precision.HIGHEST

    def blk(off, r, c=H):
        return wbuf[off:off + r, :c]

    h = node_feat
    for l, fin in enumerate(plan["layer_fins"]):
        acc = jnp.zeros((N, H), jnp.float32)
        for e in range(E):
            msg = jnp.dot(h, blk(plan["wm"][l][e], fin), precision=hi) + blk(plan["bm"][l][e], 1)
            gate = jax.nn.sigmoid(
                jnp.dot(h, blk(plan["wg"][l][e], fin), precision=hi) + blk(plan["bg"][l][e], 1))
            acc = acc + jnp.dot(adj[e], gate * msg, precision=hi)
        h = jnp.maximum(acc, 0.0)
    flat = jnp.concatenate([h.reshape(-1), goal_vec, goal_objects_vec])[None, :]
    w1 = jnp.concatenate([blk(plan["fc1_scene"][n], H) for n in range(N)]
                         + [blk(plan["fc1_goal"], P), blk(plan["fc1_gobj"], P)], axis=0)
    x = jnp.maximum(jnp.dot(flat, w1, precision=hi) + blk(plan["fc1_b"], 1), 0.0)
    x = jnp.maximum(jnp.dot(x, blk(plan["fc2_w"], H), precision=hi) + blk(plan["fc2_b"], 1), 0.0)
    y = jax.nn.sigmoid(jnp.dot(x, blk(plan["fc3_w"], H, C), precision=hi) + blk(plan["fc3_b"], 1, C))
    return y.reshape(-1)


# ----------------------------- main ------------------------------------------ #

if __name__ == "__main__":
    in_feats = 16
    n_objects = 8          # number of graph nodes
    n_hidden = 32
    n_classes = 4
    n_layers = 2           # -> 3 GatedHeteroRGCN layers total
    n_etypes = 3

    key = jax.random.PRNGKey(0)
    k_param, k_feat, k_adj, k_goal, k_gobj = jax.random.split(key, 5)

    wbuf, plan = init_params(k_param, in_feats, n_objects, n_hidden, n_classes,
                             n_layers, n_etypes)

    # node features g.ndata['feat']
    node_feat = jax.random.normal(k_feat, (n_objects, in_feats), dtype=jnp.float32)

    # dense per-edge-type adjacency, row-normalized by in-degree (+self loop)
    raw = jax.random.uniform(k_adj, (n_etypes, n_objects, n_objects)) > 0.5
    eye = jnp.eye(n_objects, dtype=jnp.float32)[None]
    adj = raw.astype(jnp.float32) + eye
    adj = adj / jnp.sum(adj, axis=-1, keepdims=True)

    goal_vec = jax.random.normal(k_goal, (PRETRAINED_VECTOR_SIZE,), dtype=jnp.float32)
    goal_objects_vec = jax.random.normal(k_gobj, (PRETRAINED_VECTOR_SIZE,), dtype=jnp.float32)

    fwd = build_forward(plan, wbuf)
    out = jax.block_until_ready(fwd(adj, node_feat, goal_vec, goal_objects_vec))

    ref = reference_forward(plan, wbuf, adj, node_feat, goal_vec, goal_objects_vec)

    assert out.shape == (n_classes,)
    assert bool(jnp.all((out >= 0.0) & (out <= 1.0)))
    assert bool(jnp.allclose(out, ref, rtol=2e-2, atol=2e-2))
    print("KERNEL_OK")
</pallas_src>

<mosaic_0001>
module attributes {stable_mosaic.version = 11 : i64} {
  func.func @kernel(%arg0: memref<3x8x8xf32, #tpu.memory_space<vmem>>, %arg1: memref<24x16xf32, #tpu.memory_space<vmem>>, %arg2: memref<1000x32xf32, #tpu.memory_space<vmem>>, %arg3: memref<1x4xf32, #tpu.memory_space<vmem>>) attributes {dimension_semantics = [], scalar_prefetch = 0 : i64, scratch_operands = 0 : i64, tpu.core_type = #tpu.core_type<tc>} {
    %c0 = arith.constant 0 : index
    %c0_0 = arith.constant 0 : index
    %c0_1 = arith.constant 0 : index
    %0 = vector.load %arg0[%c0, %c0_0, %c0_1] : memref<3x8x8xf32, #tpu.memory_space<vmem>>, vector<1x8x8xf32>
    %1 = vector.shape_cast %0 : vector<1x8x8xf32> to vector<8x8xf32>
    %c1 = arith.constant 1 : index
    %c0_2 = arith.constant 0 : index
    %c0_3 = arith.constant 0 : index
    %2 = vector.load %arg0[%c1, %c0_2, %c0_3] : memref<3x8x8xf32, #tpu.memory_space<vmem>>, vector<1x8x8xf32>
    %3 = vector.shape_cast %2 : vector<1x8x8xf32> to vector<8x8xf32>
    %c2 = arith.constant 2 : index
    %c0_4 = arith.constant 0 : index
    %c0_5 = arith.constant 0 : index
    %4 = vector.load %arg0[%c2, %c0_4, %c0_5] : memref<3x8x8xf32, #tpu.memory_space<vmem>>, vector<1x8x8xf32>
    %5 = vector.shape_cast %4 : vector<1x8x8xf32> to vector<8x8xf32>
    %c0_6 = arith.constant 0 : index
    %c0_7 = arith.constant 0 : index
    %6 = vector.load %arg1[%c0_6, %c0_7] : memref<24x16xf32, #tpu.memory_space<vmem>>, vector<8x16xf32>
    %cst = arith.constant 0.000000e+00 : f32
    %7 = vector.broadcast %cst : f32 to vector<8x32xf32>
    %c0_8 = arith.constant 0 : index
    %c0_9 = arith.constant 0 : index
    %8 = vector.load %arg2[%c0_8, %c0_9] : memref<1000x32xf32, #tpu.memory_space<vmem>>, vector<16x32xf32>
    %cst_10 = arith.constant dense<0.000000e+00> : vector<8x32xf32>
    %9 = tpu.matmul %6, %8, %cst_10 {dimension_numbers = #tpu.dot_dimension_numbers<[1], [0], [0], [1], [0, 0, 1, 1], [], []>} : vector<8x16xf32>, vector<16x32xf32>, vector<8x32xf32> -> vector<8x32xf32>
    %c96 = arith.constant 96 : index
    %c0_11 = arith.constant 0 : index
    %10 = vector.load %arg2[%c96, %c0_11] : memref<1000x32xf32, #tpu.memory_space<vmem>>, vector<1x32xf32>
    %11 = vector.broadcast %10 : vector<1x32xf32> to vector<8x32xf32>
    %12 = arith.addf %9, %11 : vector<8x32xf32>
    %c48 = arith.constant 48 : index
    %c0_12 = arith.constant 0 : index
    %13 = vector.load %arg2[%c48, %c0_12] : memref<1000x32xf32, #tpu.memory_space<vmem>>, vector<16x32xf32>
    %cst_13 = arith.constant dense<0.000000e+00> : vector<8x32xf32>
    %14 = tpu.matmul %6, %13, %cst_13 {dimension_numbers = #tpu.dot_dimension_numbers<[1], [0], [0], [1], [0, 0, 1, 1], [], []>} : vector<8x16xf32>, vector<16x32xf32>, vector<8x32xf32> -> vector<8x32xf32>
    %c120 = arith.constant 120 : index
    %c0_14 = arith.constant 0 : index
    %15 = vector.load %arg2[%c120, %c0_14] : memref<1000x32xf32, #tpu.memory_space<vmem>>, vector<1x32xf32>
    %16 = vector.broadcast %15 : vector<1x32xf32> to vector<8x32xf32>
    %17 = arith.addf %14, %16 : vector<8x32xf32>
    %18 = arith.negf %17 : vector<8x32xf32>
    %19 = math.exp %18 : vector<8x32xf32>
    %cst_15 = arith.constant 1.000000e+00 : f32
    %20 = vector.broadcast %cst_15 : f32 to vector<8x32xf32>
    %21 = arith.addf %20, %19 : vector<8x32xf32>
    %22 = arith.divf %20, %21 : vector<8x32xf32>
    %23 = arith.mulf %22, %12 : vector<8x32xf32>
    %cst_16 = arith.constant dense<0.000000e+00> : vector<8x32xf32>
    %24 = tpu.matmul %1, %23, %cst_16 {dimension_numbers = #tpu.dot_dimension_numbers<[1], [0], [0], [1], [0, 0, 1, 1], [], []>} : vector<8x8xf32>, vector<8x32xf32>, vector<8x32xf32> -> vector<8x32xf32>
    %25 = arith.addf %7, %24 : vector<8x32xf32>
    %c16 = arith.constant 16 : index
    %c0_17 = arith.constant 0 : index
    %26 = vector.load %arg2[%c16, %c0_17] : memref<1000x32xf32, #tpu.memory_space<vmem>>, vector<16x32xf32>
    %cst_18 = arith.constant dense<0.000000e+00> : vector<8x32xf32>
    %27 = tpu.matmul %6, %26, %cst_18 {dimension_numbers = #tpu.dot_dimension_numbers<[1], [0], [0], [1], [0, 0, 1, 1], [], []>} : vector<8x16xf32>, vector<16x32xf32>, vector<8x32xf32> -> vector<8x32xf32>
    %c104 = arith.constant 104 : index
    %c0_19 = arith.constant 0 : index
    %28 = vector.load %arg2[%c104, %c0_19] : memref<1000x32xf32, #tpu.memory_space<vmem>>, vector<1x32xf32>
    %29 = vector.broadcast %28 : vector<1x32xf32> to vector<8x32xf32>
    %30 = arith.addf %27, %29 : vector<8x32xf32>
    %c64 = arith.constant 64 : index
    %c0_20 = arith.constant 0 : index
    %31 = vector.load %arg2[%c64, %c0_20] : memref<1000x32xf32, #tpu.memory_space<vmem>>, vector<16x32xf32>
    %cst_21 = arith.constant dense<0.000000e+00> : vector<8x32xf32>
    %32 = tpu.matmul %6, %31, %cst_21 {dimension_numbers = #tpu.dot_dimension_numbers<[1], [0], [0], [1], [0, 0, 1, 1], [], []>} : vector<8x16xf32>, vector<16x32xf32>, vector<8x32xf32> -> vector<8x32xf32>
    %c128 = arith.constant 128 : index
    %c0_22 = arith.constant 0 : index
    %33 = vector.load %arg2[%c128, %c0_22] : memref<1000x32xf32, #tpu.memory_space<vmem>>, vector<1x32xf32>
    %34 = vector.broadcast %33 : vector<1x32xf32> to vector<8x32xf32>
    %35 = arith.addf %32, %34 : vector<8x32xf32>
    %36 = arith.negf %35 : vector<8x32xf32>
    %37 = math.exp %36 : vector<8x32xf32>
    %cst_23 = arith.constant 1.000000e+00 : f32
    %38 = vector.broadcast %cst_23 : f32 to vector<8x32xf32>
    %39 = arith.addf %38, %37 : vector<8x32xf32>
    %40 = arith.divf %38, %39 : vector<8x32xf32>
    %41 = arith.mulf %40, %30 : vector<8x32xf32>
    %cst_24 = arith.constant dense<0.000000e+00> : vector<8x32xf32>
    %42 = tpu.matmul %3, %41, %cst_24 {dimension_numbers = #tpu.dot_dimension_numbers<[1], [0], [0], [1], [0, 0, 1, 1], [], []>} : vector<8x8xf32>, vector<8x32xf32>, vector<8x32xf32> -> vector<8x32xf32>
    %43 = arith.addf %25, %42 : vector<8x32xf32>
    %c32 = arith.constant 32 : index
    %c0_25 = arith.constant 0 : index
    %44 = vector.load %arg2[%c32, %c0_25] : memref<1000x32xf32, #tpu.memory_space<vmem>>, vector<16x32xf32>
    %cst_26 = arith.constant dense<0.000000e+00> : vector<8x32xf32>
    %45 = tpu.matmul %6, %44, %cst_26 {dimension_numbers = #tpu.dot_dimension_numbers<[1], [0], [0], [1], [0, 0, 1, 1], [], []>} : vector<8x16xf32>, vector<16x32xf32>, vector<8x32xf32> -> vector<8x32xf32>
    %c112 = arith.constant 112 : index
    %c0_27 = arith.constant 0 : index
    %46 = vector.load %arg2[%c112, %c0_27] : memref<1000x32xf32, #tpu.memory_space<vmem>>, vector<1x32xf32>
    %47 = vector.broadcast %46 : vector<1x32xf32> to vector<8x32xf32>
    %48 = arith.addf %45, %47 : vector<8x32xf32>
    %c80 = arith.constant 80 : index
    %c0_28 = arith.constant 0 : index
    %49 = vector.load %arg2[%c80, %c0_28] : memref<1000x32xf32, #tpu.memory_space<vmem>>, vector<16x32xf32>
    %cst_29 = arith.constant dense<0.000000e+00> : vector<8x32xf32>
    %50 = tpu.matmul %6, %49, %cst_29 {dimension_numbers = #tpu.dot_dimension_numbers<[1], [0], [0], [1], [0, 0, 1, 1], [], []>} : vector<8x16xf32>, vector<16x32xf32>, vector<8x32xf32> -> vector<8x32xf32>
    %c136 = arith.constant 136 : index
    %c0_30 = arith.constant 0 : index
    %51 = vector.load %arg2[%c136, %c0_30] : memref<1000x32xf32, #tpu.memory_space<vmem>>, vector<1x32xf32>
    %52 = vector.broadcast %51 : vector<1x32xf32> to vector<8x32xf32>
    %53 = arith.addf %50, %52 : vector<8x32xf32>
    %54 = arith.negf %53 : vector<8x32xf32>
    %55 = math.exp %54 : vector<8x32xf32>
    %cst_31 = arith.constant 1.000000e+00 : f32
    %56 = vector.broadcast %cst_31 : f32 to vector<8x32xf32>
    %57 = arith.addf %56, %55 : vector<8x32xf32>
    %58 = arith.divf %56, %57 : vector<8x32xf32>
    %59 = arith.mulf %58, %48 : vector<8x32xf32>
    %cst_32 = arith.constant dense<0.000000e+00> : vector<8x32xf32>
    %60 = tpu.matmul %5, %59, %cst_32 {dimension_numbers = #tpu.dot_dimension_numbers<[1], [0], [0], [1], [0, 0, 1, 1], [], []>} : vector<8x8xf32>, vector<8x32xf32>, vector<8x32xf32> -> vector<8x32xf32>
    %61 = arith.addf %43, %60 : vector<8x32xf32>
    %cst_33 = arith.constant 0.000000e+00 : f32
    %62 = vector.broadcast %cst_33 : f32 to vector<8x32xf32>
    %63 = arith.maximumf %61, %62 : vector<8x32xf32>
    %cst_34 = arith.constant 0.000000e+00 : f32
    %64 = vector.broadcast %cst_34 : f32 to vector<8x32xf32>
    %c144 = arith.constant 144 : index
    %c0_35 = arith.constant 0 : index
    %65 = vector.load %arg2[%c144, %c0_35] : memref<1000x32xf32, #tpu.memory_space<vmem>>, vector<32x32xf32>
    %cst_36 = arith.constant dense<0.000000e+00> : vector<8x32xf32>
    %66 = tpu.matmul %63, %65, %cst_36 {dimension_numbers = #tpu.dot_dimension_numbers<[1], [0], [0], [1], [0, 0, 1, 1], [], []>} : vector<8x32xf32>, vector<32x32xf32>, vector<8x32xf32> -> vector<8x32xf32>
    %c336 = arith.constant 336 : index
    %c0_37 = arith.constant 0 : index
    %67 = vector.load %arg2[%c336, %c0_37] : memref<1000x32xf32, #tpu.memory_space<vmem>>, vector<1x32xf32>
    %68 = vector.broadcast %67 : vector<1x32xf32> to vector<8x32xf32>
    %69 = arith.addf %66, %68 : vector<8x32xf32>
    %c240 = arith.constant 240 : index
    %c0_38 = arith.constant 0 : index
    %70 = vector.load %arg2[%c240, %c0_38] : memref<1000x32xf32, #tpu.memory_space<vmem>>, vector<32x32xf32>
    %cst_39 = arith.constant dense<0.000000e+00> : vector<8x32xf32>
    %71 = tpu.matmul %63, %70, %cst_39 {dimension_numbers = #tpu.dot_dimension_numbers<[1], [0], [0], [1], [0, 0, 1, 1], [], []>} : vector<8x32xf32>, vector<32x32xf32>, vector<8x32xf32> -> vector<8x32xf32>
    %c360 = arith.constant 360 : index
    %c0_40 = arith.constant 0 : index
    %72 = vector.load %arg2[%c360, %c0_40] : memref<1000x32xf32, #tpu.memory_space<vmem>>, vector<1x32xf32>
    %73 = vector.broadcast %72 : vector<1x32xf32> to vector<8x32xf32>
    %74 = arith.addf %71, %73 : vector<8x32xf32>
    %75 = arith.negf %74 : vector<8x32xf32>
    %76 = math.exp %75 : vector<8x32xf32>
    %cst_41 = arith.constant 1.000000e+00 : f32
    %77 = vector.broadcast %cst_41 : f32 to vector<8x32xf32>
    %78 = arith.addf %77, %76 : vector<8x32xf32>
    %79 = arith.divf %77, %78 : vector<8x32xf32>
    %80 = arith.mulf %79, %69 : vector<8x32xf32>
    %cst_42 = arith.constant dense<0.000000e+00> : vector<8x32xf32>
    %81 = tpu.matmul %1, %80, %cst_42 {dimension_numbers = #tpu.dot_dimension_numbers<[1], [0], [0], [1], [0, 0, 1, 1], [], []>} : vector<8x8xf32>, vector<8x32xf32>, vector<8x32xf32> -> vector<8x32xf32>
    %82 = arith.addf %64, %81 : vector<8x32xf32>
    %c176 = arith.constant 176 : index
    %c0_43 = arith.constant 0 : index
    %83 = vector.load %arg2[%c176, %c0_43] : memref<1000x32xf32, #tpu.memory_space<vmem>>, vector<32x32xf32>
    %cst_44 = arith.constant dense<0.000000e+00> : vector<8x32xf32>
    %84 = tpu.matmul %63, %83, %cst_44 {dimension_numbers = #tpu.dot_dimension_numbers<[1], [0], [0], [1], [0, 0, 1, 1], [], []>} : vector<8x32xf32>, vector<32x32xf32>, vector<8x32xf32> -> vector<8x32xf32>
    %c344 = arith.constant 344 : index
    %c0_45 = arith.constant 0 : index
    %85 = vector.load %arg2[%c344, %c0_45] : memref<1000x32xf32, #tpu.memory_space<vmem>>, vector<1x32xf32>
    %86 = vector.broadcast %85 : vector<1x32xf32> to vector<8x32xf32>
    %87 = arith.addf %84, %86 : vector<8x32xf32>
    %c272 = arith.constant 272 : index
    %c0_46 = arith.constant 0 : index
    %88 = vector.load %arg2[%c272, %c0_46] : memref<1000x32xf32, #tpu.memory_space<vmem>>, vector<32x32xf32>
    %cst_47 = arith.constant dense<0.000000e+00> : vector<8x32xf32>
    %89 = tpu.matmul %63, %88, %cst_47 {dimension_numbers = #tpu.dot_dimension_numbers<[1], [0], [0], [1], [0, 0, 1, 1], [], []>} : vector<8x32xf32>, vector<32x32xf32>, vector<8x32xf32> -> vector<8x32xf32>
    %c368 = arith.constant 368 : index
    %c0_48 = arith.constant 0 : index
    %90 = vector.load %arg2[%c368, %c0_48] : memref<1000x32xf32, #tpu.memory_space<vmem>>, vector<1x32xf32>
    %91 = vector.broadcast %90 : vector<1x32xf32> to vector<8x32xf32>
    %92 = arith.addf %89, %91 : vector<8x32xf32>
    %93 = arith.negf %92 : vector<8x32xf32>
    %94 = math.exp %93 : vector<8x32xf32>
    %cst_49 = arith.constant 1.000000e+00 : f32
    %95 = vector.broadcast %cst_49 : f32 to vector<8x32xf32>
    %96 = arith.addf %95, %94 : vector<8x32xf32>
    %97 = arith.divf %95, %96 : vector<8x32xf32>
    %98 = arith.mulf %97, %87 : vector<8x32xf32>
    %cst_50 = arith.constant dense<0.000000e+00> : vector<8x32xf32>
    %99 = tpu.matmul %3, %98, %cst_50 {dimension_numbers = #tpu.dot_dimension_numbers<[1], [0], [0], [1], [0, 0, 1, 1], [], []>} : vector<8x8xf32>, vector<8x32xf32>, vector<8x32xf32> -> vector<8x32xf32>
    %100 = arith.addf %82, %99 : vector<8x32xf32>
    %c208 = arith.constant 208 : index
    %c0_51 = arith.constant 0 : index
    %101 = vector.load %arg2[%c208, %c0_51] : memref<1000x32xf32, #tpu.memory_space<vmem>>, vector<32x32xf32>
    %cst_52 = arith.constant dense<0.000000e+00> : vector<8x32xf32>
    %102 = tpu.matmul %63, %101, %cst_52 {dimension_numbers = #tpu.dot_dimension_numbers<[1], [0], [0], [1], [0, 0, 1, 1], [], []>} : vector<8x32xf32>, vector<32x32xf32>, vector<8x32xf32> -> vector<8x32xf32>
    %c352 = arith.constant 352 : index
    %c0_53 = arith.constant 0 : index
    %103 = vector.load %arg2[%c352, %c0_53] : memref<1000x32xf32, #tpu.memory_space<vmem>>, vector<1x32xf32>
    %104 = vector.broadcast %103 : vector<1x32xf32> to vector<8x32xf32>
    %105 = arith.addf %102, %104 : vector<8x32xf32>
    %c304 = arith.constant 304 : index
    %c0_54 = arith.constant 0 : index
    %106 = vector.load %arg2[%c304, %c0_54] : memref<1000x32xf32, #tpu.memory_space<vmem>>, vector<32x32xf32>
    %cst_55 = arith.constant dense<0.000000e+00> : vector<8x32xf32>
    %107 = tpu.matmul %63, %106, %cst_55 {dimension_numbers = #tpu.dot_dimension_numbers<[1], [0], [0], [1], [0, 0, 1, 1], [], []>} : vector<8x32xf32>, vector<32x32xf32>, vector<8x32xf32> -> vector<8x32xf32>
    %c376 = arith.constant 376 : index
    %c0_56 = arith.constant 0 : index
    %108 = vector.load %arg2[%c376, %c0_56] : memref<1000x32xf32, #tpu.memory_space<vmem>>, vector<1x32xf32>
    %109 = vector.broadcast %108 : vector<1x32xf32> to vector<8x32xf32>
    %110 = arith.addf %107, %109 : vector<8x32xf32>
    %111 = arith.negf %110 : vector<8x32xf32>
    %112 = math.exp %111 : vector<8x32xf32>
    %cst_57 = arith.constant 1.000000e+00 : f32
    %113 = vector.broadcast %cst_57 : f32 to vector<8x32xf32>
    %114 = arith.addf %113, %112 : vector<8x32xf32>
    %115 = arith.divf %113, %114 : vector<8x32xf32>
    %116 = arith.mulf %115, %105 : vector<8x32xf32>
    %cst_58 = arith.constant dense<0.000000e+00> : vector<8x32xf32>
    %117 = tpu.matmul %5, %116, %cst_58 {dimension_numbers = #tpu.dot_dimension_numbers<[1], [0], [0], [1], [0, 0, 1, 1], [], []>} : vector<8x8xf32>, vector<8x32xf32>, vector<8x32xf32> -> vector<8x32xf32>
    %118 = arith.addf %100, %117 : vector<8x32xf32>
    %cst_59 = arith.constant 0.000000e+00 : f32
    %119 = vector.broadcast %cst_59 : f32 to vector<8x32xf32>
    %120 = arith.maximumf %118, %119 : vector<8x32xf32>
    %cst_60 = arith.constant 0.000000e+00 : f32
    %121 = vector.broadcast %cst_60 : f32 to vector<8x32xf32>
    %c384 = arith.constant 384 : index
    %c0_61 = arith.constant 0 : index
    %122 = vector.load %arg2[%c384, %c0_61] : memref<1000x32xf32, #tpu.memory_space<vmem>>, vector<32x32xf32>
    %cst_62 = arith.constant dense<0.000000e+00> : vector<8x32xf32>
    %123 = tpu.matmul %120, %122, %cst_62 {dimension_numbers = #tpu.dot_dimension_numbers<[1], [0], [0], [1], [0, 0, 1, 1], [], []>} : vector<8x32xf32>, vector<32x32xf32>, vector<8x32xf32> -> vector<8x32xf32>
    %c576 = arith.constant 576 : index
    %c0_63 = arith.constant 0 : index
    %124 = vector.load %arg2[%c576, %c0_63] : memref<1000x32xf32, #tpu.memory_space<vmem>>, vector<1x32xf32>
    %125 = vector.broadcast %124 : vector<1x32xf32> to vector<8x32xf32>
    %126 = arith.addf %123, %125 : vector<8x32xf32>
    %c480 = arith.constant 480 : index
    %c0_64 = arith.constant 0 : index
    %127 = vector.load %arg2[%c480, %c0_64] : memref<1000x32xf32, #tpu.memory_space<vmem>>, vector<32x32xf32>
    %cst_65 = arith.constant dense<0.000000e+00> : vector<8x32xf32>
    %128 = tpu.matmul %120, %127, %cst_65 {dimension_numbers = #tpu.dot_dimension_numbers<[1], [0], [0], [1], [0, 0, 1, 1], [], []>} : vector<8x32xf32>, vector<32x32xf32>, vector<8x32xf32> -> vector<8x32xf32>
    %c600 = arith.constant 600 : index
    %c0_66 = arith.constant 0 : index
    %129 = vector.load %arg2[%c600, %c0_66] : memref<1000x32xf32, #tpu.memory_space<vmem>>, vector<1x32xf32>
    %130 = vector.broadcast %129 : vector<1x32xf32> to vector<8x32xf32>
    %131 = arith.addf %128, %130 : vector<8x32xf32>
    %132 = arith.negf %131 : vector<8x32xf32>
    %133 = math.exp %132 : vector<8x32xf32>
    %cst_67 = arith.constant 1.000000e+00 : f32
    %134 = vector.broadcast %cst_67 : f32 to vector<8x32xf32>
    %135 = arith.addf %134, %133 : vector<8x32xf32>
    %136 = arith.divf %134, %135 : vector<8x32xf32>
    %137 = arith.mulf %136, %126 : vector<8x32xf32>
    %cst_68 = arith.constant dense<0.000000e+00> : vector<8x32xf32>
    %138 = tpu.matmul %1, %137, %cst_68 {dimension_numbers = #tpu.dot_dimension_numbers<[1], [0], [0], [1], [0, 0, 1, 1], [], []>} : vector<8x8xf32>, vector<8x32xf32>, vector<8x32xf32> -> vector<8x32xf32>
    %139 = arith.addf %121, %138 : vector<8x32xf32>
    %c416 = arith.constant 416 : index
    %c0_69 = arith.constant 0 : index
    %140 = vector.load %arg2[%c416, %c0_69] : memref<1000x32xf32, #tpu.memory_space<vmem>>, vector<32x32xf32>
    %cst_70 = arith.constant dense<0.000000e+00> : vector<8x32xf32>
    %141 = tpu.matmul %120, %140, %cst_70 {dimension_numbers = #tpu.dot_dimension_numbers<[1], [0], [0], [1], [0, 0, 1, 1], [], []>} : vector<8x32xf32>, vector<32x32xf32>, vector<8x32xf32> -> vector<8x32xf32>
    %c584 = arith.constant 584 : index
    %c0_71 = arith.constant 0 : index
    %142 = vector.load %arg2[%c584, %c0_71] : memref<1000x32xf32, #tpu.memory_space<vmem>>, vector<1x32xf32>
    %143 = vector.broadcast %142 : vector<1x32xf32> to vector<8x32xf32>
    %144 = arith.addf %141, %143 : vector<8x32xf32>
    %c512 = arith.constant 512 : index
    %c0_72 = arith.constant 0 : index
    %145 = vector.load %arg2[%c512, %c0_72] : memref<1000x32xf32, #tpu.memory_space<vmem>>, vector<32x32xf32>
    %cst_73 = arith.constant dense<0.000000e+00> : vector<8x32xf32>
    %146 = tpu.matmul %120, %145, %cst_73 {dimension_numbers = #tpu.dot_dimension_numbers<[1], [0], [0], [1], [0, 0, 1, 1], [], []>} : vector<8x32xf32>, vector<32x32xf32>, vector<8x32xf32> -> vector<8x32xf32>
    %c608 = arith.constant 608 : index
    %c0_74 = arith.constant 0 : index
    %147 = vector.load %arg2[%c608, %c0_74] : memref<1000x32xf32, #tpu.memory_space<vmem>>, vector<1x32xf32>
    %148 = vector.broadcast %147 : vector<1x32xf32> to vector<8x32xf32>
    %149 = arith.addf %146, %148 : vector<8x32xf32>
    %150 = arith.negf %149 : vector<8x32xf32>
    %151 = math.exp %150 : vector<8x32xf32>
    %cst_75 = arith.constant 1.000000e+00 : f32
    %152 = vector.broadcast %cst_75 : f32 to vector<8x32xf32>
    %153 = arith.addf %152, %151 : vector<8x32xf32>
    %154 = arith.divf %152, %153 : vector<8x32xf32>
    %155 = arith.mulf %154, %144 : vector<8x32xf32>
    %cst_76 = arith.constant dense<0.000000e+00> : vector<8x32xf32>
    %156 = tpu.matmul %3, %155, %cst_76 {dimension_numbers = #tpu.dot_dimension_numbers<[1], [0], [0], [1], [0, 0, 1, 1], [], []>} : vector<8x8xf32>, vector<8x32xf32>, vector<8x32xf32> -> vector<8x32xf32>
    %157 = arith.addf %139, %156 : vector<8x32xf32>
    %c448 = arith.constant 448 : index
    %c0_77 = arith.constant 0 : index
    %158 = vector.load %arg2[%c448, %c0_77] : memref<1000x32xf32, #tpu.memory_space<vmem>>, vector<32x32xf32>
    %cst_78 = arith.constant dense<0.000000e+00> : vector<8x32xf32>
    %159 = tpu.matmul %120, %158, %cst_78 {dimension_numbers = #tpu.dot_dimension_numbers<[1], [0], [0], [1], [0, 0, 1, 1], [], []>} : vector<8x32xf32>, vector<32x32xf32>, vector<8x32xf32> -> vector<8x32xf32>
    %c592 = arith.constant 592 : index
    %c0_79 = arith.constant 0 : index
    %160 = vector.load %arg2[%c592, %c0_79] : memref<1000x32xf32, #tpu.memory_space<vmem>>, vector<1x32xf32>
    %161 = vector.broadcast %160 : vector<1x32xf32> to vector<8x32xf32>
    %162 = arith.addf %159, %161 : vector<8x32xf32>
    %c544 = arith.constant 544 : index
    %c0_80 = arith.constant 0 : index
    %163 = vector.load %arg2[%c544, %c0_80] : memref<1000x32xf32, #tpu.memory_space<vmem>>, vector<32x32xf32>
    %cst_81 = arith.constant dense<0.000000e+00> : vector<8x32xf32>
    %164 = tpu.matmul %120, %163, %cst_81 {dimension_numbers = #tpu.dot_dimension_numbers<[1], [0], [0], [1], [0, 0, 1, 1], [], []>} : vector<8x32xf32>, vector<32x32xf32>, vector<8x32xf32> -> vector<8x32xf32>
    %c616 = arith.constant 616 : index
    %c0_82 = arith.constant 0 : index
    %165 = vector.load %arg2[%c616, %c0_82] : memref<1000x32xf32, #tpu.memory_space<vmem>>, vector<1x32xf32>
    %166 = vector.broadcast %165 : vector<1x32xf32> to vector<8x32xf32>
    %167 = arith.addf %164, %166 : vector<8x32xf32>
    %168 = arith.negf %167 : vector<8x32xf32>
    %169 = math.exp %168 : vector<8x32xf32>
    %cst_83 = arith.constant 1.000000e+00 : f32
    %170 = vector.broadcast %cst_83 : f32 to vector<8x32xf32>
    %171 = arith.addf %170, %169 : vector<8x32xf32>
    %172 = arith.divf %170, %171 : vector<8x32xf32>
    %173 = arith.mulf %172, %162 : vector<8x32xf32>
    %cst_84 = arith.constant dense<0.000000e+00> : vector<8x32xf32>
    %174 = tpu.matmul %5, %173, %cst_84 {dimension_numbers = #tpu.dot_dimension_numbers<[1], [0], [0], [1], [0, 0, 1, 1], [], []>} : vector<8x8xf32>, vector<8x32xf32>, vector<8x32xf32> -> vector<8x32xf32>
    %175 = arith.addf %157, %174 : vector<8x32xf32>
    %cst_85 = arith.constant 0.000000e+00 : f32
    %176 = vector.broadcast %cst_85 : f32 to vector<8x32xf32>
    %177 = arith.maximumf %175, %176 : vector<8x32xf32>
    %c8 = arith.constant 8 : index
    %c0_86 = arith.constant 0 : index
    %178 = vector.load %arg1[%c8, %c0_86] : memref<24x16xf32, #tpu.memory_space<vmem>>, vector<1x16xf32>
    %c16_87 = arith.constant 16 : index
    %c0_88 = arith.constant 0 : index
    %179 = vector.load %arg1[%c16_87, %c0_88] : memref<24x16xf32, #tpu.memory_space<vmem>>, vector<1x16xf32>
    %c880 = arith.constant 880 : index
    %c0_89 = arith.constant 0 : index
    %180 = vector.load %arg2[%c880, %c0_89] : memref<1000x32xf32, #tpu.memory_space<vmem>>, vector<16x32xf32>
    %cst_90 = arith.constant dense<0.000000e+00> : vector<1x32xf32>
    %181 = tpu.matmul %178, %180, %cst_90 {dimension_numbers = #tpu.dot_dimension_numbers<[1], [0], [0], [1], [0, 0, 1, 1], [], []>} : vector<1x16xf32>, vector<16x32xf32>, vector<1x32xf32> -> vector<1x32xf32>
    %c896 = arith.constant 896 : index
    %c0_91 = arith.constant 0 : index
    %182 = vector.load %arg2[%c896, %c0_91] : memref<1000x32xf32, #tpu.memory_space<vmem>>, vector<16x32xf32>
    %cst_92 = arith.constant dense<0.000000e+00> : vector<1x32xf32>
    %183 = tpu.matmul %179, %182, %cst_92 {dimension_numbers = #tpu.dot_dimension_numbers<[1], [0], [0], [1], [0, 0, 1, 1], [], []>} : vector<1x16xf32>, vector<16x32xf32>, vector<1x32xf32> -> vector<1x32xf32>
    %184 = arith.addf %181, %183 : vector<1x32xf32>
    %c912 = arith.constant 912 : index
    %c0_93 = arith.constant 0 : index
    %185 = vector.load %arg2[%c912, %c0_93] : memref<1000x32xf32, #tpu.memory_space<vmem>>, vector<1x32xf32>
    %186 = arith.addf %184, %185 : vector<1x32xf32>
    %187 = vector.extract_strided_slice %177 {offsets = [0, 0], sizes = [1, 32], strides = [1, 1]} : vector<8x32xf32> to vector<1x32xf32>
    %c624 = arith.constant 624 : index
    %c0_94 = arith.constant 0 : index
    %188 = vector.load %arg2[%c624, %c0_94] : memref<1000x32xf32, #tpu.memory_space<vmem>>, vector<32x32xf32>
    %cst_95 = arith.constant dense<0.000000e+00> : vector<1x32xf32>
    %189 = tpu.matmul %187, %188, %cst_95 {dimension_numbers = #tpu.dot_dimension_numbers<[1], [0], [0], [1], [0, 0, 1, 1], [], []>} : vector<1x32xf32>, vector<32x32xf32>, vector<1x32xf32> -> vector<1x32xf32>
    %190 = arith.addf %186, %189 : vector<1x32xf32>
    %191 = vector.extract_strided_slice %177 {offsets = [1, 0], sizes = [1, 32], strides = [1, 1]} : vector<8x32xf32> to vector<1x32xf32>
    %c656 = arith.constant 656 : index
    %c0_96 = arith.constant 0 : index
    %192 = vector.load %arg2[%c656, %c0_96] : memref<1000x32xf32, #tpu.memory_space<vmem>>, vector<32x32xf32>
    %cst_97 = arith.constant dense<0.000000e+00> : vector<1x32xf32>
    %193 = tpu.matmul %191, %192, %cst_97 {dimension_numbers = #tpu.dot_dimension_numbers<[1], [0], [0], [1], [0, 0, 1, 1], [], []>} : vector<1x32xf32>, vector<32x32xf32>, vector<1x32xf32> -> vector<1x32xf32>
    %194 = arith.addf %190, %193 : vector<1x32xf32>
    %195 = vector.extract_strided_slice %177 {offsets = [2, 0], sizes = [1, 32], strides = [1, 1]} : vector<8x32xf32> to vector<1x32xf32>
    %c688 = arith.constant 688 : index
    %c0_98 = arith.constant 0 : index
    %196 = vector.load %arg2[%c688, %c0_98] : memref<1000x32xf32, #tpu.memory_space<vmem>>, vector<32x32xf32>
    %cst_99 = arith.constant dense<0.000000e+00> : vector<1x32xf32>
    %197 = tpu.matmul %195, %196, %cst_99 {dimension_numbers = #tpu.dot_dimension_numbers<[1], [0], [0], [1], [0, 0, 1, 1], [], []>} : vector<1x32xf32>, vector<32x32xf32>, vector<1x32xf32> -> vector<1x32xf32>
    %198 = arith.addf %194, %197 : vector<1x32xf32>
    %199 = vector.extract_strided_slice %177 {offsets = [3, 0], sizes = [1, 32], strides = [1, 1]} : vector<8x32xf32> to vector<1x32xf32>
    %c720 = arith.constant 720 : index
    %c0_100 = arith.constant 0 : index
    %200 = vector.load %arg2[%c720, %c0_100] : memref<1000x32xf32, #tpu.memory_space<vmem>>, vector<32x32xf32>
    %cst_101 = arith.constant dense<0.000000e+00> : vector<1x32xf32>
    %201 = tpu.matmul %199, %200, %cst_101 {dimension_numbers = #tpu.dot_dimension_numbers<[1], [0], [0], [1], [0, 0, 1, 1], [], []>} : vector<1x32xf32>, vector<32x32xf32>, vector<1x32xf32> -> vector<1x32xf32>
    %202 = arith.addf %198, %201 : vector<1x32xf32>
    %203 = vector.extract_strided_slice %177 {offsets = [4, 0], sizes = [1, 32], strides = [1, 1]} : vector<8x32xf32> to vector<1x32xf32>
    %c752 = arith.constant 752 : index
    %c0_102 = arith.constant 0 : index
    %204 = vector.load %arg2[%c752, %c0_102] : memref<1000x32xf32, #tpu.memory_space<vmem>>, vector<32x32xf32>
    %cst_103 = arith.constant dense<0.000000e+00> : vector<1x32xf32>
    %205 = tpu.matmul %203, %204, %cst_103 {dimension_numbers = #tpu.dot_dimension_numbers<[1], [0], [0], [1], [0, 0, 1, 1], [], []>} : vector<1x32xf32>, vector<32x32xf32>, vector<1x32xf32> -> vector<1x32xf32>
    %206 = arith.addf %202, %205 : vector<1x32xf32>
    %207 = vector.extract_strided_slice %177 {offsets = [5, 0], sizes = [1, 32], strides = [1, 1]} : vector<8x32xf32> to vector<1x32xf32>
    %c784 = arith.constant 784 : index
    %c0_104 = arith.constant 0 : index
    %208 = vector.load %arg2[%c784, %c0_104] : memref<1000x32xf32, #tpu.memory_space<vmem>>, vector<32x32xf32>
    %cst_105 = arith.constant dense<0.000000e+00> : vector<1x32xf32>
    %209 = tpu.matmul %207, %208, %cst_105 {dimension_numbers = #tpu.dot_dimension_numbers<[1], [0], [0], [1], [0, 0, 1, 1], [], []>} : vector<1x32xf32>, vector<32x32xf32>, vector<1x32xf32> -> vector<1x32xf32>
    %210 = arith.addf %206, %209 : vector<1x32xf32>
    %211 = vector.extract_strided_slice %177 {offsets = [6, 0], sizes = [1, 32], strides = [1, 1]} : vector<8x32xf32> to vector<1x32xf32>
    %c816 = arith.constant 816 : index
    %c0_106 = arith.constant 0 : index
    %212 = vector.load %arg2[%c816, %c0_106] : memref<1000x32xf32, #tpu.memory_space<vmem>>, vector<32x32xf32>
    %cst_107 = arith.constant dense<0.000000e+00> : vector<1x32xf32>
    %213 = tpu.matmul %211, %212, %cst_107 {dimension_numbers = #tpu.dot_dimension_numbers<[1], [0], [0], [1], [0, 0, 1, 1], [], []>} : vector<1x32xf32>, vector<32x32xf32>, vector<1x32xf32> -> vector<1x32xf32>
    %214 = arith.addf %210, %213 : vector<1x32xf32>
    %215 = vector.extract_strided_slice %177 {offsets = [7, 0], sizes = [1, 32], strides = [1, 1]} : vector<8x32xf32> to vector<1x32xf32>
    %c848 = arith.constant 848 : index
    %c0_108 = arith.constant 0 : index
    %216 = vector.load %arg2[%c848, %c0_108] : memref<1000x32xf32, #tpu.memory_space<vmem>>, vector<32x32xf32>
    %cst_109 = arith.constant dense<0.000000e+00> : vector<1x32xf32>
    %217 = tpu.matmul %215, %216, %cst_109 {dimension_numbers = #tpu.dot_dimension_numbers<[1], [0], [0], [1], [0, 0, 1, 1], [], []>} : vector<1x32xf32>, vector<32x32xf32>, vector<1x32xf32> -> vector<1x32xf32>
    %218 = arith.addf %214, %217 : vector<1x32xf32>
    %cst_110 = arith.constant 0.000000e+00 : f32
    %219 = vector.broadcast %cst_110 : f32 to vector<1x32xf32>
    %220 = arith.maximumf %218, %219 : vector<1x32xf32>
    %c920 = arith.constant 920 : index
    %c0_111 = arith.constant 0 : index
    %221 = vector.load %arg2[%c920, %c0_111] : memref<1000x32xf32, #tpu.memory_space<vmem>>, vector<32x32xf32>
    %cst_112 = arith.constant dense<0.000000e+00> : vector<1x32xf32>
    %222 = tpu.matmul %220, %221, %cst_112 {dimension_numbers = #tpu.dot_dimension_numbers<[1], [0], [0], [1], [0, 0, 1, 1], [], []>} : vector<1x32xf32>, vector<32x32xf32>, vector<1x32xf32> -> vector<1x32xf32>
    %c952 = arith.constant 952 : index
    %c0_113 = arith.constant 0 : index
    %223 = vector.load %arg2[%c952, %c0_113] : memref<1000x32xf32, #tpu.memory_space<vmem>>, vector<1x32xf32>
    %224 = arith.addf %222, %223 : vector<1x32xf32>
    %cst_114 = arith.constant 0.000000e+00 : f32
    %225 = vector.broadcast %cst_114 : f32 to vector<1x32xf32>
    %226 = arith.maximumf %224, %225 : vector<1x32xf32>
    %c960 = arith.constant 960 : index
    %c0_115 = arith.constant 0 : index
    %227 = vector.load %arg2[%c960, %c0_115] : memref<1000x32xf32, #tpu.memory_space<vmem>>, vector<32x32xf32>
    %cst_116 = arith.constant dense<0.000000e+00> : vector<1x32xf32>
    %228 = tpu.matmul %226, %227, %cst_116 {dimension_numbers = #tpu.dot_dimension_numbers<[1], [0], [0], [1], [0, 0, 1, 1], [], []>} : vector<1x32xf32>, vector<32x32xf32>, vector<1x32xf32> -> vector<1x32xf32>
    %c992 = arith.constant 992 : index
    %c0_117 = arith.constant 0 : index
    %229 = vector.load %arg2[%c992, %c0_117] : memref<1000x32xf32, #tpu.memory_space<vmem>>, vector<1x32xf32>
    %230 = arith.addf %228, %229 : vector<1x32xf32>
    %231 = arith.negf %230 : vector<1x32xf32>
    %232 = math.exp %231 : vector<1x32xf32>
    %cst_118 = arith.constant 1.000000e+00 : f32
    %233 = vector.broadcast %cst_118 : f32 to vector<1x32xf32>
    %234 = arith.addf %233, %232 : vector<1x32xf32>
    %235 = arith.divf %233, %234 : vector<1x32xf32>
    %236 = vector.extract_strided_slice %235 {offsets = [0, 0], sizes = [1, 4], strides = [1, 1]} : vector<1x32xf32> to vector<1x4xf32>
    %c0_119 = arith.constant 0 : index
    %c0_120 = arith.constant 0 : index
    %237 = vector.load %arg3[%c0_119, %c0_120] : memref<1x4xf32, #tpu.memory_space<vmem>>, vector<1x4xf32>
    tpu.vector_store %arg3[%c0_119, %c0_120], %236 {strides = array<i32>} : memref<1x4xf32, #tpu.memory_space<vmem>>, vector<1x4xf32>,
    return
  }
}

</mosaic_0001>

<llo_original>
// kernel: forward.1
$region0: #{forward.1}
  #allocation0 [shape = 'u32[]', space=smem, size = 0x4, offset = 0x4, fixed_abs, tag = 'smem constant byte address 0x4 - core index']
  #allocation1 [shape = 'u32[144,128]{1,0:T(1,128)}', space=vmem, size = 0x12000, scoped, tag = 'internal scratch']
  %s0 = inlined_call_operand.vmem [shape: f32[3,8,8], index: 0, kind: input, shape index: {}]
  %s1 = inlined_call_operand.vmem [shape: f32[24,16], index: 1, kind: input, shape index: {}]
  %s2 = inlined_call_operand.hbm [shape: f32[1000,32], index: 2, kind: input, shape index: {}]
  %s3 = inlined_call_operand.hbm [shape: f32[1,4], index: 3, kind: output, shape index: {}]
  %s4 = sld [smem:[#allocation0]]
  $region26: #{forward.1} parent=0
    _
  %s6 = ssub.s32 1, %s4
  %s7 = scalar_select 0, %s6, %s4
  $region1: #{forward.1} parent=0
    #allocation2 [shape = 'u8[512000]{0}', space=vmem, size = 0x7d000, scoped, tag = 'input window, operand 2, single buffered']
    #allocation3 [shape = 's32[1]{0}', space=sflag, size = 0x4, scoped, tag = 'scoped memory for forward.1']
    #allocation4 [shape = 's32[1]{0}', space=sflag, size = 0x4, scoped, tag = 'scoped memory for forward.1']
    #allocation5 [shape = 'u8[512]{0}', space=vmem, size = 0x400, scoped, tag = 'output window, operand 0, single buffered']
    %8 = vsyncpa [#allocation3], 0
    %9 = vsyncpa [#allocation4], 0
    // Predicated region
    $region2: #{forward.1} parent=1 // pred_check
      _
    $region3: #{forward.1} parent=1 // pred_check_branch
      %11 = sbr.rel (0) target = $region5
    $region4: #{forward.1} parent=1 // pred_region
      _
    $region5: #{forward.1} parent=1 // pred_fallthru
      _
    // Predicated region
    $region6: #{forward.1} parent=1 // pred_check
      _
    $region7: #{forward.1} parent=1 // pred_check_branch
      %13 = sbr.rel (0) target = $region9
    $region8: #{forward.1} parent=1 // pred_region
      _
    $region9: #{forward.1} parent=1 // pred_fallthru
      _
    // Predicated region
    $region10: #{forward.1} parent=1 // pred_check
      _
    $region11: #{forward.1} parent=1 // pred_check_branch
      %15 = sbr.rel (0) target = $region13
    $region12: #{forward.1} parent=1 // pred_region
      %s17 = ssub.s32 16000, 16000
      %18 = vsyncadd [#allocation3], %s17
      %s19 = sshll.u32 [#allocation2], 4
      %s20 = int_to_ptr.vmem [resolvable:$true] %s19
      %25 = dma.hbm_to_vmem [thread:$0]  %s2, 16000, %s20, [#allocation3], 128, 128, 8
    $region13: #{forward.1} parent=1 // pred_fallthru
      _
    // Predicated region
    $region14: #{forward.1} parent=1 // pred_check
      _
    $region15: #{forward.1} parent=1 // pred_check_branch
      %27 = sbr.rel (0) target = $region17
    $region16: #{forward.1} parent=1 // pred_region
      %28 = dma.done [#allocation3], 16000
    $region17: #{forward.1} parent=1 // pred_fallthru
      _
    %v29 = vld [vmem:[%s0] sm:$0xff]
    %s30 = scalar_lea.vmem %s0, 8
    %v31 = vld [vmem:[%s30] sm:$0xff]
    %s32 = scalar_lea.vmem %s0, 16
    %v33 = vld [vmem:[%s32] sm:$0xff]
    %v34 = vld [vmem:[%s1] sm:$0xff]
    %v35 = vld [vmem:[#allocation2] sm:$0xff]
    %v36 = vld [vmem:[#allocation2 + $0x8] sm:$0xff]
    %v37 = vld [vmem:[#allocation2 + $0x60] sm:$0x1]
    %v38 = vlaneseq
    %v39 = vshrl.u32 %v38, 7
    %v40 = vsub.s32 0, %v39
    %v41 = vrot.slane %v37, %v40
    %vm42 = vcmask 130048
    %v44 = vsel %vm42, %v34, 0
    %46 = vmatprep.subr.mxu0 0.0
    %47 = vmatpush1.msra.mxu0 0.0
    %48 = vmatprep.subr.mxu0 0.0
    %49 = vmatpush1.msra.mxu0 0.0
    %50 = vmatprep.subr.mxu0 0.0
    %51 = vmatpush1.msra.mxu0 0.0
    %52 = vmatprep.subr.mxu0 0.0
    %53 = vmatpush1.msra.mxu0 0.0
    %54 = vmatprep.subr.mxu0 0.0
    %55 = vmatpush1.msra.mxu0 0.0
    %56 = vmatprep.subr.mxu0 0.0
    %57 = vmatpush1.msra.mxu0 0.0
    %58 = vmatprep.subr.mxu0 0.0
    %59 = vmatpush1.msra.mxu0 0.0
    %60 = vmatprep.subr.mxu0 0.0
    %61 = vmatpush1.msra.mxu0 0.0
    %62 = vmatprep.subr.mxu0 0.0
    %63 = vmatpush1.msra.mxu0 0.0
    %64 = vmatprep.subr.mxu0 0.0
    %65 = vmatpush1.msra.mxu0 0.0
    %66 = vmatprep.subr.mxu0 0.0
    %67 = vmatpush1.msra.mxu0 0.0
    %68 = vmatprep.subr.mxu0 0.0
    %69 = vmatpush1.msra.mxu0 0.0
    %70 = vmatprep.subr.mxu0 0.0
    %71 = vmatpush1.msra.mxu0 0.0
    %72 = vmatprep.subr.mxu0 0.0
    %73 = vmatpush1.msra.mxu0 0.0
    %74 = vmatprep.subr.mxu0 0.0
    %75 = vmatpush1.msra.mxu0 %v36
    %76 = vmatprep.subr.mxu0 0.0
    %77 = vmatpush1.msra.mxu0 %v35
    %78 = vmatprep.subr.mxu0 0.0
    %79 = vmatpush2.msra.mxu0 0.0
    %80 = vmatprep.subr.mxu0 0.0
    %81 = vmatpush2.msra.mxu0 0.0
    %82 = vmatprep.subr.mxu0 0.0
    %83 = vmatpush2.msra.mxu0 0.0
    %84 = vmatprep.subr.mxu0 0.0
    %85 = vmatpush2.msra.mxu0 0.0
    %86 = vmatprep.subr.mxu0 0.0
    %87 = vmatpush2.msra.mxu0 0.0
    %88 = vmatprep.subr.mxu0 0.0
    %89 = vmatpush2.msra.mxu0 0.0
    %90 = vmatprep.subr.mxu0 0.0
    %91 = vmatpush2.msra.mxu0 0.0
    %92 = vmatprep.subr.mxu0 0.0
    %93 = vmatpush2.msra.mxu0 0.0
    %94 = vmatprep.subr.mxu0 0.0
    %95 = vmatpush2.msra.mxu0 0.0
    %96 = vmatprep.subr.mxu0 0.0
    %97 = vmatpush2.msra.mxu0 0.0
    %98 = vmatprep.subr.mxu0 0.0
    %99 = vmatpush2.msra.mxu0 0.0
    %100 = vmatprep.subr.mxu0 0.0
    %101 = vmatpush2.msra.mxu0 0.0
    %102 = vmatprep.subr.mxu0 0.0
    %103 = vmatpush2.msra.mxu0 0.0
    %104 = vmatprep.subr.mxu0 0.0
    %105 = vmatpush2.msra.mxu0 0.0
    %106 = vmatprep.subr.mxu0 0.0
    %107 = vmatpush2.msra.mxu0 0.0
    %108 = vmatprep.subr.mxu0 0.0
    %109 = vmatpush2.msra.mxu0 0.0
    %110 = vmatprep.mubr.f32.mxu0 0.0
    %111 = vmatmul.mubr.f32.gmra.mxu0 %v44
    %v112 = vpop.f32.mrf.mxu0
    %v113 = vadd.f32 %v41, %v112
    %v114 = vpop.f32.mrf.mxu0
    %115 = vdwg.mxu0
    %v116 = vld [vmem:[#allocation2 + $0x30] sm:$0xff]
    %v117 = vld [vmem:[#allocation2 + $0x38] sm:$0xff]
    %v118 = vld [vmem:[#allocation2 + $0x78] sm:$0x1]
    %v119 = vlaneseq
    %v120 = vshrl.u32 %v119, 7
    %v121 = vsub.s32 0, %v120
    %v122 = vrot.slane %v118, %v121
    %123 = vmatprep.subr.mxu0 0.0
    %124 = vmatpush1.msra.mxu0 0.0
    %125 = vmatprep.subr.mxu0 0.0
    %126 = vmatpush1.msra.mxu0 0.0
    %127 = vmatprep.subr.mxu0 0.0
    %128 = vmatpush1.msra.mxu0 0.0
    %129 = vmatprep.subr.mxu0 0.0
    %130 = vmatpush1.msra.mxu0 0.0
    %131 = vmatprep.subr.mxu0 0.0
    %132 = vmatpush1.msra.mxu0 0.0
    %133 = vmatprep.subr.mxu0 0.0
    %134 = vmatpush1.msra.mxu0 0.0
    %135 = vmatprep.subr.mxu0 0.0
    %136 = vmatpush1.msra.mxu0 0.0
    %137 = vmatprep.subr.mxu0 0.0
    %138 = vmatpush1.msra.mxu0 0.0
    %139 = vmatprep.subr.mxu0 0.0
    %140 = vmatpush1.msra.mxu0 0.0
    %141 = vmatprep.subr.mxu0 0.0
    %142 = vmatpush1.msra.mxu0 0.0
    %143 = vmatprep.subr.mxu0 0.0
    %144 = vmatpush1.msra.mxu0 0.0
    %145 = vmatprep.subr.mxu0 0.0
    %146 = vmatpush1.msra.mxu0 0.0
    %147 = vmatprep.subr.mxu0 0.0
    %148 = vmatpush1.msra.mxu0 0.0
    %149 = vmatprep.subr.mxu0 0.0
    %150 = vmatpush1.msra.mxu0 0.0
    %151 = vmatprep.subr.mxu0 0.0
    %152 = vmatpush1.msra.mxu0 %v117
    %153 = vmatprep.subr.mxu0 0.0
    %154 = vmatpush1.msra.mxu0 %v116
    %155 = vmatprep.subr.mxu0 0.0
    %156 = vmatpush2.msra.mxu0 0.0
    %157 = vmatprep.subr.mxu0 0.0
    %158 = vmatpush2.msra.mxu0 0.0
    %159 = vmatprep.subr.mxu0 0.0
    %160 = vmatpush2.msra.mxu0 0.0
    %161 = vmatprep.subr.mxu0 0.0
    %162 = vmatpush2.msra.mxu0 0.0
    %163 = vmatprep.subr.mxu0 0.0
    %164 = vmatpush2.msra.mxu0 0.0
    %165 = vmatprep.subr.mxu0 0.0
    %166 = vmatpush2.msra.mxu0 0.0
    %167 = vmatprep.subr.mxu0 0.0
    %168 = vmatpush2.msra.mxu0 0.0
    %169 = vmatprep.subr.mxu0 0.0
    %170 = vmatpush2.msra.mxu0 0.0
    %171 = vmatprep.subr.mxu0 0.0
    %172 = vmatpush2.msra.mxu0 0.0
    %173 = vmatprep.subr.mxu0 0.0
    %174 = vmatpush2.msra.mxu0 0.0
    %175 = vmatprep.subr.mxu0 0.0
    %176 = vmatpush2.msra.mxu0 0.0
    %177 = vmatprep.subr.mxu0 0.0
    %178 = vmatpush2.msra.mxu0 0.0
    %179 = vmatprep.subr.mxu0 0.0
    %180 = vmatpush2.msra.mxu0 0.0
    %181 = vmatprep.subr.mxu0 0.0
    %182 = vmatpush2.msra.mxu0 0.0
    %183 = vmatprep.subr.mxu0 0.0
    %184 = vmatpush2.msra.mxu0 0.0
    %185 = vmatprep.subr.mxu0 0.0
    %186 = vmatpush2.msra.mxu0 0.0
    %187 = vmatprep.mubr.f32.mxu0 0.0
    %188 = vmatmul.mubr.f32.gmra.mxu0 %v44
    %v189 = vpop.f32.mrf.mxu0
    %v190 = vadd.f32 %v122, %v189
    %v191 = vpop.f32.mrf.mxu0
    %192 = vdwg.mxu0
    %v193 = vxor.u32 %v190, 2147483648
    %v194 = vmul.f32 %v193, 1.442695
    %v195 = vpow.pop %v194
    %v196 = vadd.f32 %v195, 1.0
    %v197 = vrcp.pop %v196
    %v198 = vmul.f32 1.0, %v197
    %v199 = vmul.f32 %v198, %v113
    %v200 = vld [vmem:[#allocation2 + $0x10] sm:$0xff]
    %v201 = vld [vmem:[#allocation2 + $0x18] sm:$0xff]
    %v202 = vld [vmem:[#allocation2 + $0x68] sm:$0x1]
    %v203 = vlaneseq
    %v204 = vshrl.u32 %v203, 7
    %v205 = vsub.s32 0, %v204
    %v206 = vrot.slane %v202, %v205
    %207 = vmatprep.subr.mxu0 0.0
    %208 = vmatpush1.msra.mxu0 0.0
    %209 = vmatprep.subr.mxu0 0.0
    %210 = vmatpush1.msra.mxu0 0.0
    %211 = vmatprep.subr.mxu0 0.0
    %212 = vmatpush1.msra.mxu0 0.0
    %213 = vmatprep.subr.mxu0 0.0
    %214 = vmatpush1.msra.mxu0 0.0
    %215 = vmatprep.subr.mxu0 0.0
    %216 = vmatpush1.msra.mxu0 0.0
    %217 = vmatprep.subr.mxu0 0.0
    %218 = vmatpush1.msra.mxu0 0.0
    %219 = vmatprep.subr.mxu0 0.0
    %220 = vmatpush1.msra.mxu0 0.0
    %221 = vmatprep.subr.mxu0 0.0
    %222 = vmatpush1.msra.mxu0 0.0
    %223 = vmatprep.subr.mxu0 0.0
    %224 = vmatpush1.msra.mxu0 0.0
    %225 = vmatprep.subr.mxu0 0.0
    %226 = vmatpush1.msra.mxu0 0.0
    %227 = vmatprep.subr.mxu0 0.0
    %228 = vmatpush1.msra.mxu0 0.0
    %229 = vmatprep.subr.mxu0 0.0
    %230 = vmatpush1.msra.mxu0 0.0
    %231 = vmatprep.subr.mxu0 0.0
    %232 = vmatpush1.msra.mxu0 0.0
    %233 = vmatprep.subr.mxu0 0.0
    %234 = vmatpush1.msra.mxu0 0.0
    %235 = vmatprep.subr.mxu0 0.0
    %236 = vmatpush1.msra.mxu0 %v201
    %237 = vmatprep.subr.mxu0 0.0
    %238 = vmatpush1.msra.mxu0 %v200
    %239 = vmatprep.subr.mxu0 0.0
    %240 = vmatpush2.msra.mxu0 0.0
    %241 = vmatprep.subr.mxu0 0.0
    %242 = vmatpush2.msra.mxu0 0.0
    %243 = vmatprep.subr.mxu0 0.0
    %244 = vmatpush2.msra.mxu0 0.0
    %245 = vmatprep.subr.mxu0 0.0
    %246 = vmatpush2.msra.mxu0 0.0
    %247 = vmatprep.subr.mxu0 0.0
    %248 = vmatpush2.msra.mxu0 0.0
    %249 = vmatprep.subr.mxu0 0.0
    %250 = vmatpush2.msra.mxu0 0.0
    %251 = vmatprep.subr.mxu0 0.0
    %252 = vmatpush2.msra.mxu0 0.0
    %253 = vmatprep.subr.mxu0 0.0
    %254 = vmatpush2.msra.mxu0 0.0
    %255 = vmatprep.subr.mxu0 0.0
    %256 = vmatpush2.msra.mxu0 0.0
    %257 = vmatprep.subr.mxu0 0.0
    %258 = vmatpush2.msra.mxu0 0.0
    %259 = vmatprep.subr.mxu0 0.0
    %260 = vmatpush2.msra.mxu0 0.0
    %261 = vmatprep.subr.mxu0 0.0
    %262 = vmatpush2.msra.mxu0 0.0
    %263 = vmatprep.subr.mxu0 0.0
    %264 = vmatpush2.msra.mxu0 0.0
    %265 = vmatprep.subr.mxu0 0.0
    %266 = vmatpush2.msra.mxu0 0.0
    %267 = vmatprep.subr.mxu0 0.0
    %268 = vmatpush2.msra.mxu0 0.0
    %269 = vmatprep.subr.mxu0 0.0
    %270 = vmatpush2.msra.mxu0 0.0
    %271 = vmatprep.mubr.f32.mxu0 0.0
    %272 = vmatmul.mubr.f32.gmra.mxu0 %v44
    %v273 = vpop.f32.mrf.mxu0
    %v274 = vadd.f32 %v206, %v273
    %v275 = vpop.f32.mrf.mxu0
    %276 = vdwg.mxu0
    %v277 = vld [vmem:[#allocation2 + $0x40] sm:$0xff]
    %v278 = vld [vmem:[#allocation2 + $0x48] sm:$0xff]
    %v279 = vld [vmem:[#allocation2 + $0x80] sm:$0x1]
    %v280 = vlaneseq
    %v281 = vshrl.u32 %v280, 7
    %v282 = vsub.s32 0, %v281
    %v283 = vrot.slane %v279, %v282
    %284 = vmatprep.subr.mxu0 0.0
    %285 = vmatpush1.msra.mxu0 0.0
    %286 = vmatprep.subr.mxu0 0.0
    %287 = vmatpush1.msra.mxu0 0.0
    %288 = vmatprep.subr.mxu0 0.0
    %289 = vmatpush1.msra.mxu0 0.0
    %290 = vmatprep.subr.mxu0 0.0
    %291 = vmatpush1.msra.mxu0 0.0
    %292 = vmatprep.subr.mxu0 0.0
    %293 = vmatpush1.msra.mxu0 0.0
    %294 = vmatprep.subr.mxu0 0.0
    %295 = vmatpush1.msra.mxu0 0.0
    %296 = vmatprep.subr.mxu0 0.0
    %297 = vmatpush1.msra.mxu0 0.0
    %298 = vmatprep.subr.mxu0 0.0
    %299 = vmatpush1.msra.mxu0 0.0
    %300 = vmatprep.subr.mxu0 0.0
    %301 = vmatpush1.msra.mxu0 0.0
    %302 = vmatprep.subr.mxu0 0.0
    %303 = vmatpush1.msra.mxu0 0.0
    %304 = vmatprep.subr.mxu0 0.0
    %305 = vmatpush1.msra.mxu0 0.0
    %306 = vmatprep.subr.mxu0 0.0
    %307 = vmatpush1.msra.mxu0 0.0
    %308 = vmatprep.subr.mxu0 0.0
    %309 = vmatpush1.msra.mxu0 0.0
    %310 = vmatprep.subr.mxu0 0.0
    %311 = vmatpush1.msra.mxu0 0.0
    %312 = vmatprep.subr.mxu0 0.0
    %313 = vmatpush1.msra.mxu0 %v278
    %314 = vmatprep.subr.mxu0 0.0
    %315 = vmatpush1.msra.mxu0 %v277
    %316 = vmatprep.subr.mxu0 0.0
    %317 = vmatpush2.msra.mxu0 0.0
    %318 = vmatprep.subr.mxu0 0.0
    %319 = vmatpush2.msra.mxu0 0.0
    %320 = vmatprep.subr.mxu0 0.0
    %321 = vmatpush2.msra.mxu0 0.0
    %322 = vmatprep.subr.mxu0 0.0
    %323 = vmatpush2.msra.mxu0 0.0
    %324 = vmatprep.subr.mxu0 0.0
    %325 = vmatpush2.msra.mxu0 0.0
    %326 = vmatprep.subr.mxu0 0.0
    %327 = vmatpush2.msra.mxu0 0.0
    %328 = vmatprep.subr.mxu0 0.0
    %329 = vmatpush2.msra.mxu0 0.0
    %330 = vmatprep.subr.mxu0 0.0
    %331 = vmatpush2.msra.mxu0 0.0
    %332 = vmatprep.subr.mxu0 0.0
    %333 = vmatpush2.msra.mxu0 0.0
    %334 = vmatprep.subr.mxu0 0.0
    %335 = vmatpush2.msra.mxu0 0.0
    %336 = vmatprep.subr.mxu0 0.0
    %337 = vmatpush2.msra.mxu0 0.0
    %338 = vmatprep.subr.mxu0 0.0
    %339 = vmatpush2.msra.mxu0 0.0
    %340 = vmatprep.subr.mxu0 0.0
    %341 = vmatpush2.msra.mxu0 0.0
    %342 = vmatprep.subr.mxu0 0.0
    %343 = vmatpush2.msra.mxu0 0.0
    %344 = vmatprep.subr.mxu0 0.0
    %345 = vmatpush2.msra.mxu0 0.0
    %346 = vmatprep.subr.mxu0 0.0
    %347 = vmatpush2.msra.mxu0 0.0
    %348 = vmatprep.mubr.f32.mxu0 0.0
    %349 = vmatmul.mubr.f32.gmra.mxu0 %v44
    %v350 = vpop.f32.mrf.mxu0
    %v351 = vadd.f32 %v283, %v350
    %v352 = vpop.f32.mrf.mxu0
    %353 = vdwg.mxu0
    %v354 = vxor.u32 %v351, 2147483648
    %v355 = vmul.f32 %v354, 1.442695
    %v356 = vpow.pop %v355
    %v357 = vadd.f32 %v356, 1.0
    %v358 = vrcp.pop %v357
    %v359 = vmul.f32 1.0, %v358
    %v360 = vmul.f32 %v359, %v274
    %vm361 = vcmask 64512
    %v363 = vsel %vm361, %v31, 0
    %365 = vmatprep.subr.mxu0 0.0
    %366 = vmatpush1.msra.mxu0 0.0
    %367 = vmatprep.subr.mxu0 0.0
    %368 = vmatpush1.msra.mxu0 0.0
    %369 = vmatprep.subr.mxu0 0.0
    %370 = vmatpush1.msra.mxu0 0.0
    %371 = vmatprep.subr.mxu0 0.0
    %372 = vmatpush1.msra.mxu0 0.0
    %373 = vmatprep.subr.mxu0 0.0
    %374 = vmatpush1.msra.mxu0 0.0
    %375 = vmatprep.subr.mxu0 0.0
    %376 = vmatpush1.msra.mxu0 0.0
    %377 = vmatprep.subr.mxu0 0.0
    %378 = vmatpush1.msra.mxu0 0.0
    %379 = vmatprep.subr.mxu0 0.0
    %380 = vmatpush1.msra.mxu0 0.0
    %381 = vmatprep.subr.mxu0 0.0
    %382 = vmatpush1.msra.mxu0 0.0
    %383 = vmatprep.subr.mxu0 0.0
    %384 = vmatpush1.msra.mxu0 0.0
    %385 = vmatprep.subr.mxu0 0.0
    %386 = vmatpush1.msra.mxu0 0.0
    %387 = vmatprep.subr.mxu0 0.0
    %388 = vmatpush1.msra.mxu0 0.0
    %389 = vmatprep.subr.mxu0 0.0
    %390 = vmatpush1.msra.mxu0 0.0
    %391 = vmatprep.subr.mxu0 0.0
    %392 = vmatpush1.msra.mxu0 0.0
    %393 = vmatprep.subr.mxu0 0.0
    %394 = vmatpush1.msra.mxu0 0.0
    %395 = vmatprep.subr.mxu0 0.0
    %396 = vmatpush1.msra.mxu0 %v360
    %397 = vmatprep.subr.mxu0 0.0
    %398 = vmatpush2.msra.mxu0 0.0
    %399 = vmatprep.subr.mxu0 0.0
    %400 = vmatpush2.msra.mxu0 0.0
    %401 = vmatprep.subr.mxu0 0.0
    %402 = vmatpush2.msra.mxu0 0.0
    %403 = vmatprep.subr.mxu0 0.0
    %404 = vmatpush2.msra.mxu0 0.0
    %405 = vmatprep.subr.mxu0 0.0
    %406 = vmatpush2.msra.mxu0 0.0
    %407 = vmatprep.subr.mxu0 0.0
    %408 = vmatpush2.msra.mxu0 0.0
    %409 = vmatprep.subr.mxu0 0.0
    %410 = vmatpush2.msra.mxu0 0.0
    %411 = vmatprep.subr.mxu0 0.0
    %412 = vmatpush2.msra.mxu0 0.0
    %413 = vmatprep.subr.mxu0 0.0
    %414 = vmatpush2.msra.mxu0 0.0
    %415 = vmatprep.subr.mxu0 0.0
    %416 = vmatpush2.msra.mxu0 0.0
    %417 = vmatprep.subr.mxu0 0.0
    %418 = vmatpush2.msra.mxu0 0.0
    %419 = vmatprep.subr.mxu0 0.0
    %420 = vmatpush2.msra.mxu0 0.0
    %421 = vmatprep.subr.mxu0 0.0
    %422 = vmatpush2.msra.mxu0 0.0
    %423 = vmatprep.subr.mxu0 0.0
    %424 = vmatpush2.msra.mxu0 0.0
    %425 = vmatprep.subr.mxu0 0.0
    %426 = vmatpush2.msra.mxu0 0.0
    %427 = vmatprep.subr.mxu0 0.0
    %428 = vmatpush2.msra.mxu0 0.0
    %429 = vmatprep.mubr.f32.mxu0 0.0
    %430 = vmatmul.mubr.f32.gmra.mxu0 %v363
    %v431 = vpop.f32.mrf.mxu0
    %v432 = vadd.f32 0.0, %v431
    %v433 = vpop.f32.mrf.mxu0
    %434 = vdwg.mxu0
    %v436 = vsel %vm361, %v29, 0
    %438 = vmatprep.subr.mxu0 0.0
    %439 = vmatpush1.msra.mxu0 0.0
    %440 = vmatprep.subr.mxu0 0.0
    %441 = vmatpush1.msra.mxu0 0.0
    %442 = vmatprep.subr.mxu0 0.0
    %443 = vmatpush1.msra.mxu0 0.0
    %444 = vmatprep.subr.mxu0 0.0
    %445 = vmatpush1.msra.mxu0 0.0
    %446 = vmatprep.subr.mxu0 0.0
    %447 = vmatpush1.msra.mxu0 0.0
    %448 = vmatprep.subr.mxu0 0.0
    %449 = vmatpush1.msra.mxu0 0.0
    %450 = vmatprep.subr.mxu0 0.0
    %451 = vmatpush1.msra.mxu0 0.0
    %452 = vmatprep.subr.mxu0 0.0
    %453 = vmatpush1.msra.mxu0 0.0
    %454 = vmatprep.subr.mxu0 0.0
    %455 = vmatpush1.msra.mxu0 0.0
    %456 = vmatprep.subr.mxu0 0.0
    %457 = vmatpush1.msra.mxu0 0.0
    %458 = vmatprep.subr.mxu0 0.0
    %459 = vmatpush1.msra.mxu0 0.0
    %460 = vmatprep.subr.mxu0 0.0
    %461 = vmatpush1.msra.mxu0 0.0
    %462 = vmatprep.subr.mxu0 0.0
    %463 = vmatpush1.msra.mxu0 0.0
    %464 = vmatprep.subr.mxu0 0.0
    %465 = vmatpush1.msra.mxu0 0.0
    %466 = vmatprep.subr.mxu0 0.0
    %467 = vmatpush1.msra.mxu0 0.0
    %468 = vmatprep.subr.mxu0 0.0
    %469 = vmatpush1.msra.mxu0 %v199
    %470 = vmatprep.subr.mxu0 0.0
    %471 = vmatpush2.msra.mxu0 0.0
    %472 = vmatprep.subr.mxu0 0.0
    %473 = vmatpush2.msra.mxu0 0.0
    %474 = vmatprep.subr.mxu0 0.0
    %475 = vmatpush2.msra.mxu0 0.0
    %476 = vmatprep.subr.mxu0 0.0
    %477 = vmatpush2.msra.mxu0 0.0
    %478 = vmatprep.subr.mxu0 0.0
    %479 = vmatpush2.msra.mxu0 0.0
    %480 = vmatprep.subr.mxu0 0.0
    %481 = vmatpush2.msra.mxu0 0.0
    %482 = vmatprep.subr.mxu0 0.0
    %483 = vmatpush2.msra.mxu0 0.0
    %484 = vmatprep.subr.mxu0 0.0
    %485 = vmatpush2.msra.mxu0 0.0
    %486 = vmatprep.subr.mxu0 0.0
    %487 = vmatpush2.msra.mxu0 0.0
    %488 = vmatprep.subr.mxu0 0.0
    %489 = vmatpush2.msra.mxu0 0.0
    %490 = vmatprep.subr.mxu0 0.0
    %491 = vmatpush2.msra.mxu0 0.0
    %492 = vmatprep.subr.mxu0 0.0
    %493 = vmatpush2.msra.mxu0 0.0
    %494 = vmatprep.subr.mxu0 0.0
    %495 = vmatpush2.msra.mxu0 0.0
    %496 = vmatprep.subr.mxu0 0.0
    %497 = vmatpush2.msra.mxu0 0.0
    %498 = vmatprep.subr.mxu0 0.0
    %499 = vmatpush2.msra.mxu0 0.0
    %500 = vmatprep.subr.mxu0 0.0
    %501 = vmatpush2.msra.mxu0 0.0
    %502 = vmatprep.mubr.f32.mxu0 0.0
    %503 = vmatmul.mubr.f32.gmra.mxu0 %v436
    %v504 = vpop.f32.mrf.mxu0
    %v505 = vadd.f32 %v432, %v504
    %v506 = vpop.f32.mrf.mxu0
    %507 = vdwg.mxu0
    %v508 = vld [vmem:[#allocation2 + $0x20] sm:$0xff]
    %v509 = vld [vmem:[#allocation2 + $0x28] sm:$0xff]
    %v510 = vld [vmem:[#allocation2 + $0x70] sm:$0x1]
    %v511 = vlaneseq
    %v512 = vshrl.u32 %v511, 7
    %v513 = vsub.s32 0, %v512
    %v514 = vrot.slane %v510, %v513
    %515 = vmatprep.subr.mxu0 0.0
    %516 = vmatpush1.msra.mxu0 0.0
    %517 = vmatprep.subr.mxu0 0.0
    %518 = vmatpush1.msra.mxu0 0.0
    %519 = vmatprep.subr.mxu0 0.0
    %520 = vmatpush1.msra.mxu0 0.0
    %521 = vmatprep.subr.mxu0 0.0
    %522 = vmatpush1.msra.mxu0 0.0
    %523 = vmatprep.subr.mxu0 0.0
    %524 = vmatpush1.msra.mxu0 0.0
    %525 = vmatprep.subr.mxu0 0.0
    %526 = vmatpush1.msra.mxu0 0.0
    %527 = vmatprep.subr.mxu0 0.0
    %528 = vmatpush1.msra.mxu0 0.0
    %529 = vmatprep.subr.mxu0 0.0
    %530 = vmatpush1.msra.mxu0 0.0
    %531 = vmatprep.subr.mxu0 0.0
    %532 = vmatpush1.msra.mxu0 0.0
    %533 = vmatprep.subr.mxu0 0.0
    %534 = vmatpush1.msra.mxu0 0.0
    %535 = vmatprep.subr.mxu0 0.0
    %536 = vmatpush1.msra.mxu0 0.0
    %537 = vmatprep.subr.mxu0 0.0
    %538 = vmatpush1.msra.mxu0 0.0
    %539 = vmatprep.subr.mxu0 0.0
    %540 = vmatpush1.msra.mxu0 0.0
    %541 = vmatprep.subr.mxu0 0.0
    %542 = vmatpush1.msra.mxu0 0.0
    %543 = vmatprep.subr.mxu0 0.0
    %544 = vmatpush1.msra.mxu0 %v509
    %545 = vmatprep.subr.mxu0 0.0
    %546 = vmatpush1.msra.mxu0 %v508
    %547 = vmatprep.subr.mxu0 0.0
    %548 = vmatpush2.msra.mxu0 0.0
    %549 = vmatprep.subr.mxu0 0.0
    %550 = vmatpush2.msra.mxu0 0.0
    %551 = vmatprep.subr.mxu0 0.0
    %552 = vmatpush2.msra.mxu0 0.0
    %553 = vmatprep.subr.mxu0 0.0
    %554 = vmatpush2.msra.mxu0 0.0
    %555 = vmatprep.subr.mxu0 0.0
    %556 = vmatpush2.msra.mxu0 0.0
    %557 = vmatprep.subr.mxu0 0.0
    %558 = vmatpush2.msra.mxu0 0.0
    %559 = vmatprep.subr.mxu0 0.0
    %560 = vmatpush2.msra.mxu0 0.0
    %561 = vmatprep.subr.mxu0 0.0
    %562 = vmatpush2.msra.mxu0 0.0
    %563 = vmatprep.subr.mxu0 0.0
    %564 = vmatpush2.msra.mxu0 0.0
    %565 = vmatprep.subr.mxu0 0.0
    %566 = vmatpush2.msra.mxu0 0.0
    %567 = vmatprep.subr.mxu0 0.0
    %568 = vmatpush2.msra.mxu0 0.0
    %569 = vmatprep.subr.mxu0 0.0
    %570 = vmatpush2.msra.mxu0 0.0
    %571 = vmatprep.subr.mxu0 0.0
    %572 = vmatpush2.msra.mxu0 0.0
    %573 = vmatprep.subr.mxu0 0.0
    %574 = vmatpush2.msra.mxu0 0.0
    %575 = vmatprep.subr.mxu0 0.0
    %576 = vmatpush2.msra.mxu0 0.0
    %577 = vmatprep.subr.mxu0 0.0
    %578 = vmatpush2.msra.mxu0 0.0
    %579 = vmatprep.mubr.f32.mxu0 0.0
    %580 = vmatmul.mubr.f32.gmra.mxu0 %v44
    %v581 = vpop.f32.mrf.mxu0
    %v582 = vadd.f32 %v514, %v581
    %v583 = vpop.f32.mrf.mxu0
    %584 = vdwg.mxu0
    %v585 = vld [vmem:[#allocation2 + $0x50] sm:$0xff]
    %v586 = vld [vmem:[#allocation2 + $0x58] sm:$0xff]
    %v587 = vld [vmem:[#allocation2 + $0x88] sm:$0x1]
    %v588 = vlaneseq
    %v589 = vshrl.u32 %v588, 7
    %v590 = vsub.s32 0, %v589
    %v591 = vrot.slane %v587, %v590
    %592 = vmatprep.subr.mxu0 0.0
    %593 = vmatpush1.msra.mxu0 0.0
    %594 = vmatprep.subr.mxu0 0.0
    %595 = vmatpush1.msra.mxu0 0.0
    %596 = vmatprep.subr.mxu0 0.0
    %597 = vmatpush1.msra.mxu0 0.0
    %598 = vmatprep.subr.mxu0 0.0
    %599 = vmatpush1.msra.mxu0 0.0
    %600 = vmatprep.subr.mxu0 0.0
    %601 = vmatpush1.msra.mxu0 0.0
    %602 = vmatprep.subr.mxu0 0.0
    %603 = vmatpush1.msra.mxu0 0.0
    %604 = vmatprep.subr.mxu0 0.0
    %605 = vmatpush1.msra.mxu0 0.0
    %606 = vmatprep.subr.mxu0 0.0
    %607 = vmatpush1.msra.mxu0 0.0
    %608 = vmatprep.subr.mxu0 0.0
    %609 = vmatpush1.msra.mxu0 0.0
    %610 = vmatprep.subr.mxu0 0.0
    %611 = vmatpush1.msra.mxu0 0.0
    %612 = vmatprep.subr.mxu0 0.0
    %613 = vmatpush1.msra.mxu0 0.0
    %614 = vmatprep.subr.mxu0 0.0
    %615 = vmatpush1.msra.mxu0 0.0
    %616 = vmatprep.subr.mxu0 0.0
    %617 = vmatpush1.msra.mxu0 0.0
    %618 = vmatprep.subr.mxu0 0.0
    %619 = vmatpush1.msra.mxu0 0.0
    %620 = vmatprep.subr.mxu0 0.0
    %621 = vmatpush1.msra.mxu0 %v586
    %622 = vmatprep.subr.mxu0 0.0
    %623 = vmatpush1.msra.mxu0 %v585
    %624 = vmatprep.subr.mxu0 0.0
    %625 = vmatpush2.msra.mxu0 0.0
    %626 = vmatprep.subr.mxu0 0.0
    %627 = vmatpush2.msra.mxu0 0.0
    %628 = vmatprep.subr.mxu0 0.0
    %629 = vmatpush2.msra.mxu0 0.0
    %630 = vmatprep.subr.mxu0 0.0
    %631 = vmatpush2.msra.mxu0 0.0
    %632 = vmatprep.subr.mxu0 0.0
    %633 = vmatpush2.msra.mxu0 0.0
    %634 = vmatprep.subr.mxu0 0.0
    %635 = vmatpush2.msra.mxu0 0.0
    %636 = vmatprep.subr.mxu0 0.0
    %637 = vmatpush2.msra.mxu0 0.0
    %638 = vmatprep.subr.mxu0 0.0
    %639 = vmatpush2.msra.mxu0 0.0
    %640 = vmatprep.subr.mxu0 0.0
    %641 = vmatpush2.msra.mxu0 0.0
    %642 = vmatprep.subr.mxu0 0.0
    %643 = vmatpush2.msra.mxu0 0.0
    %644 = vmatprep.subr.mxu0 0.0
    %645 = vmatpush2.msra.mxu0 0.0
    %646 = vmatprep.subr.mxu0 0.0
    %647 = vmatpush2.msra.mxu0 0.0
    %648 = vmatprep.subr.mxu0 0.0
    %649 = vmatpush2.msra.mxu0 0.0
    %650 = vmatprep.subr.mxu0 0.0
    %651 = vmatpush2.msra.mxu0 0.0
    %652 = vmatprep.subr.mxu0 0.0
    %653 = vmatpush2.msra.mxu0 0.0
    %654 = vmatprep.subr.mxu0 0.0
    %655 = vmatpush2.msra.mxu0 0.0
    %656 = vmatprep.mubr.f32.mxu0 0.0
    %657 = vmatmul.mubr.f32.gmra.mxu0 %v44
    %v658 = vpop.f32.mrf.mxu0
    %v659 = vadd.f32 %v591, %v658
    %v660 = vpop.f32.mrf.mxu0
    %661 = vdwg.mxu0
    %v662 = vxor.u32 %v659, 2147483648
    %v663 = vmul.f32 %v662, 1.442695
    %v664 = vpow.pop %v663
    %v665 = vadd.f32 %v664, 1.0
    %v666 = vrcp.pop %v665
    %v667 = vmul.f32 1.0, %v666
    %v668 = vmul.f32 %v667, %v582
    %v670 = vsel %vm361, %v33, 0
    %672 = vmatprep.subr.mxu0 0.0
    %673 = vmatpush1.msra.mxu0 0.0
    %674 = vmatprep.subr.mxu0 0.0
    %675 = vmatpush1.msra.mxu0 0.0
    %676 = vmatprep.subr.mxu0 0.0
    %677 = vmatpush1.msra.mxu0 0.0
    %678 = vmatprep.subr.mxu0 0.0
    %679 = vmatpush1.msra.mxu0 0.0
    %680 = vmatprep.subr.mxu0 0.0
    %681 = vmatpush1.msra.mxu0 0.0
    %682 = vmatprep.subr.mxu0 0.0
    %683 = vmatpush1.msra.mxu0 0.0
    %684 = vmatprep.subr.mxu0 0.0
    %685 = vmatpush1.msra.mxu0 0.0
    %686 = vmatprep.subr.mxu0 0.0
    %687 = vmatpush1.msra.mxu0 0.0
    %688 = vmatprep.subr.mxu0 0.0
    %689 = vmatpush1.msra.mxu0 0.0
    %690 = vmatprep.subr.mxu0 0.0
    %691 = vmatpush1.msra.mxu0 0.0
    %692 = vmatprep.subr.mxu0 0.0
    %693 = vmatpush1.msra.mxu0 0.0
    %694 = vmatprep.subr.mxu0 0.0
    %695 = vmatpush1.msra.mxu0 0.0
    %696 = vmatprep.subr.mxu0 0.0
    %697 = vmatpush1.msra.mxu0 0.0
    %698 = vmatprep.subr.mxu0 0.0
    %699 = vmatpush1.msra.mxu0 0.0
    %700 = vmatprep.subr.mxu0 0.0
    %701 = vmatpush1.msra.mxu0 0.0
    %702 = vmatprep.subr.mxu0 0.0
    %703 = vmatpush1.msra.mxu0 %v668
    %704 = vmatprep.subr.mxu0 0.0
    %705 = vmatpush2.msra.mxu0 0.0
    %706 = vmatprep.subr.mxu0 0.0
    %707 = vmatpush2.msra.mxu0 0.0
    %708 = vmatprep.subr.mxu0 0.0
    %709 = vmatpush2.msra.mxu0 0.0
    %710 = vmatprep.subr.mxu0 0.0
    %711 = vmatpush2.msra.mxu0 0.0
    %712 = vmatprep.subr.mxu0 0.0
    %713 = vmatpush2.msra.mxu0 0.0
    %714 = vmatprep.subr.mxu0 0.0
    %715 = vmatpush2.msra.mxu0 0.0
    %716 = vmatprep.subr.mxu0 0.0
    %717 = vmatpush2.msra.mxu0 0.0
    %718 = vmatprep.subr.mxu0 0.0
    %719 = vmatpush2.msra.mxu0 0.0
    %720 = vmatprep.subr.mxu0 0.0
    %721 = vmatpush2.msra.mxu0 0.0
    %722 = vmatprep.subr.mxu0 0.0
    %723 = vmatpush2.msra.mxu0 0.0
    %724 = vmatprep.subr.mxu0 0.0
    %725 = vmatpush2.msra.mxu0 0.0
    %726 = vmatprep.subr.mxu0 0.0
    %727 = vmatpush2.msra.mxu0 0.0
    %728 = vmatprep.subr.mxu0 0.0
    %729 = vmatpush2.msra.mxu0 0.0
    %730 = vmatprep.subr.mxu0 0.0
    %731 = vmatpush2.msra.mxu0 0.0
    %732 = vmatprep.subr.mxu0 0.0
    %733 = vmatpush2.msra.mxu0 0.0
    %734 = vmatprep.subr.mxu0 0.0
    %735 = vmatpush2.msra.mxu0 0.0
    %736 = vmatprep.mubr.f32.mxu0 0.0
    %737 = vmatmul.mubr.f32.gmra.mxu0 %v670
    %v738 = vpop.f32.mrf.mxu0
    %v739 = vadd.f32 0.0, %v738
    %v740 = vpop.f32.mrf.mxu0
    %741 = vdwg.mxu0
    %v742 = vadd.f32 %v505, %v739
    %v743 = vmax.f32 %v742, 0.0
    %v744 = vld [vmem:[#allocation2 + $0x90] sm:$0xff]
    %v745 = vld [vmem:[#allocation2 + $0x98] sm:$0xff]
    %v746 = vld [vmem:[#allocation2 + $0xa0] sm:$0xff]
    %v747 = vld [vmem:[#allocation2 + $0xa8] sm:$0xff]
    %v748 = vld [vmem:[#allocation2 + $0x150] sm:$0x1]
    %v749 = vlaneseq
    %v750 = vshrl.u32 %v749, 7
    %v751 = vsub.s32 0, %v750
    %v752 = vrot.slane %v748, %v751
    %vm753 = vcmask 261120
    %v755 = vsel %vm753, %v743, 0
    %757 = vmatprep.subr.mxu0 0.0
    %758 = vmatpush1.msra.mxu0 0.0
    %759 = vmatprep.subr.mxu0 0.0
    %760 = vmatpush1.msra.mxu0 0.0
    %761 = vmatprep.subr.mxu0 0.0
    %762 = vmatpush1.msra.mxu0 0.0
    %763 = vmatprep.subr.mxu0 0.0
    %764 = vmatpush1.msra.mxu0 0.0
    %765 = vmatprep.subr.mxu0 0.0
    %766 = vmatpush1.msra.mxu0 0.0
    %767 = vmatprep.subr.mxu0 0.0
    %768 = vmatpush1.msra.mxu0 0.0
    %769 = vmatprep.subr.mxu0 0.0
    %770 = vmatpush1.msra.mxu0 0.0
    %771 = vmatprep.subr.mxu0 0.0
    %772 = vmatpush1.msra.mxu0 0.0
    %773 = vmatprep.subr.mxu0 0.0
    %774 = vmatpush1.msra.mxu0 0.0
    %775 = vmatprep.subr.mxu0 0.0
    %776 = vmatpush1.msra.mxu0 0.0
    %777 = vmatprep.subr.mxu0 0.0
    %778 = vmatpush1.msra.mxu0 0.0
    %779 = vmatprep.subr.mxu0 0.0
    %780 = vmatpush1.msra.mxu0 0.0
    %781 = vmatprep.subr.mxu0 0.0
    %782 = vmatpush1.msra.mxu0 %v747
    %783 = vmatprep.subr.mxu0 0.0
    %784 = vmatpush1.msra.mxu0 %v746
    %785 = vmatprep.subr.mxu0 0.0
    %786 = vmatpush1.msra.mxu0 %v745
    %787 = vmatprep.subr.mxu0 0.0
    %788 = vmatpush1.msra.mxu0 %v744
    %789 = vmatprep.subr.mxu0 0.0
    %790 = vmatpush2.msra.mxu0 0.0
    %791 = vmatprep.subr.mxu0 0.0
    %792 = vmatpush2.msra.mxu0 0.0
    %793 = vmatprep.subr.mxu0 0.0
    %794 = vmatpush2.msra.mxu0 0.0
    %795 = vmatprep.subr.mxu0 0.0
    %796 = vmatpush2.msra.mxu0 0.0
    %797 = vmatprep.subr.mxu0 0.0
    %798 = vmatpush2.msra.mxu0 0.0
    %799 = vmatprep.subr.mxu0 0.0
    %800 = vmatpush2.msra.mxu0 0.0
    %801 = vmatprep.subr.mxu0 0.0
    %802 = vmatpush2.msra.mxu0 0.0
    %803 = vmatprep.subr.mxu0 0.0
    %804 = vmatpush2.msra.mxu0 0.0
    %805 = vmatprep.subr.mxu0 0.0
    %806 = vmatpush2.msra.mxu0 0.0
    %807 = vmatprep.subr.mxu0 0.0
    %808 = vmatpush2.msra.mxu0 0.0
    %809 = vmatprep.subr.mxu0 0.0
    %810 = vmatpush2.msra.mxu0 0.0
    %811 = vmatprep.subr.mxu0 0.0
    %812 = vmatpush2.msra.mxu0 0.0
    %813 = vmatprep.subr.mxu0 0.0
    %814 = vmatpush2.msra.mxu0 0.0
    %815 = vmatprep.subr.mxu0 0.0
    %816 = vmatpush2.msra.mxu0 0.0
    %817 = vmatprep.subr.mxu0 0.0
    %818 = vmatpush2.msra.mxu0 0.0
    %819 = vmatprep.subr.mxu0 0.0
    %820 = vmatpush2.msra.mxu0 0.0
    %821 = vmatprep.mubr.f32.mxu0 0.0
    %822 = vmatmul.mubr.f32.gmra.mxu0 %v755
    %v823 = vpop.f32.mrf.mxu0
    %v824 = vadd.f32 %v752, %v823
    %v825 = vpop.f32.mrf.mxu0
    %826 = vdwg.mxu0
    %v827 = vld [vmem:[#allocation2 + $0xf0] sm:$0xff]
    %v828 = vld [vmem:[#allocation2 + $0xf8] sm:$0xff]
    %v829 = vld [vmem:[#allocation2 + $0x100] sm:$0xff]
    %v830 = vld [vmem:[#allocation2 + $0x108] sm:$0xff]
    %v831 = vld [vmem:[#allocation2 + $0x168] sm:$0x1]
    %v832 = vlaneseq
    %v833 = vshrl.u32 %v832, 7
    %v834 = vsub.s32 0, %v833
    %v835 = vrot.slane %v831, %v834
    %836 = vmatprep.subr.mxu0 0.0
    %837 = vmatpush1.msra.mxu0 0.0
    %838 = vmatprep.subr.mxu0 0.0
    %839 = vmatpush1.msra.mxu0 0.0
    %840 = vmatprep.subr.mxu0 0.0
    %841 = vmatpush1.msra.mxu0 0.0
    %842 = vmatprep.subr.mxu0 0.0
    %843 = vmatpush1.msra.mxu0 0.0
    %844 = vmatprep.subr.mxu0 0.0
    %845 = vmatpush1.msra.mxu0 0.0
    %846 = vmatprep.subr.mxu0 0.0
    %847 = vmatpush1.msra.mxu0 0.0
    %848 = vmatprep.subr.mxu0 0.0
    %849 = vmatpush1.msra.mxu0 0.0
    %850 = vmatprep.subr.mxu0 0.0
    %851 = vmatpush1.msra.mxu0 0.0
    %852 = vmatprep.subr.mxu0 0.0
    %853 = vmatpush1.msra.mxu0 0.0
    %854 = vmatprep.subr.mxu0 0.0
    %855 = vmatpush1.msra.mxu0 0.0
    %856 = vmatprep.subr.mxu0 0.0
    %857 = vmatpush1.msra.mxu0 0.0
    %858 = vmatprep.subr.mxu0 0.0
    %859 = vmatpush1.msra.mxu0 0.0
    %860 = vmatprep.subr.mxu0 0.0
    %861 = vmatpush1.msra.mxu0 %v830
    %862 = vmatprep.subr.mxu0 0.0
    %863 = vmatpush1.msra.mxu0 %v829
    %864 = vmatprep.subr.mxu0 0.0
    %865 = vmatpush1.msra.mxu0 %v828
    %866 = vmatprep.subr.mxu0 0.0
    %867 = vmatpush1.msra.mxu0 %v827
    %868 = vmatprep.subr.mxu0 0.0
    %869 = vmatpush2.msra.mxu0 0.0
    %870 = vmatprep.subr.mxu0 0.0
    %871 = vmatpush2.msra.mxu0 0.0
    %872 = vmatprep.subr.mxu0 0.0
    %873 = vmatpush2.msra.mxu0 0.0
    %874 = vmatprep.subr.mxu0 0.0
    %875 = vmatpush2.msra.mxu0 0.0
    %876 = vmatprep.subr.mxu0 0.0
    %877 = vmatpush2.msra.mxu0 0.0
    %878 = vmatprep.subr.mxu0 0.0
    %879 = vmatpush2.msra.mxu0 0.0
    %880 = vmatprep.subr.mxu0 0.0
    %881 = vmatpush2.msra.mxu0 0.0
    %882 = vmatprep.subr.mxu0 0.0
    %883 = vmatpush2.msra.mxu0 0.0
    %884 = vmatprep.subr.mxu0 0.0
    %885 = vmatpush2.msra.mxu0 0.0
    %886 = vmatprep.subr.mxu0 0.0
    %887 = vmatpush2.msra.mxu0 0.0
    %888 = vmatprep.subr.mxu0 0.0
    %889 = vmatpush2.msra.mxu0 0.0
    %890 = vmatprep.subr.mxu0 0.0
    %891 = vmatpush2.msra.mxu0 0.0
    %892 = vmatprep.subr.mxu0 0.0
    %893 = vmatpush2.msra.mxu0 0.0
    %894 = vmatprep.subr.mxu0 0.0
    %895 = vmatpush2.msra.mxu0 0.0
    %896 = vmatprep.subr.mxu0 0.0
    %897 = vmatpush2.msra.mxu0 0.0
    %898 = vmatprep.subr.mxu0 0.0
    %899 = vmatpush2.msra.mxu0 0.0
    %900 = vmatprep.mubr.f32.mxu0 0.0
    %901 = vmatmul.mubr.f32.gmra.mxu0 %v755
    %v902 = vpop.f32.mrf.mxu0
    %v903 = vadd.f32 %v835, %v902
    %v904 = vpop.f32.mrf.mxu0
    %905 = vdwg.mxu0
    %v906 = vxor.u32 %v903, 2147483648
    %v907 = vmul.f32 %v906, 1.442695
    %v908 = vpow.pop %v907
    %v909 = vadd.f32 %v908, 1.0
    %v910 = vrcp.pop %v909
    %v911 = vmul.f32 1.0, %v910
    %v912 = vmul.f32 %v911, %v824
    %v913 = vld [vmem:[#allocation2 + $0xb0] sm:$0xff]
    %v914 = vld [vmem:[#allocation2 + $0xb8] sm:$0xff]
    %v915 = vld [vmem:[#allocation2 + $0xc0] sm:$0xff]
    %v916 = vld [vmem:[#allocation2 + $0xc8] sm:$0xff]
    %v917 = vld [vmem:[#allocation2 + $0x158] sm:$0x1]
    %v918 = vlaneseq
    %v919 = vshrl.u32 %v918, 7
    %v920 = vsub.s32 0, %v919
    %v921 = vrot.slane %v917, %v920
    %922 = vmatprep.subr.mxu0 0.0
    %923 = vmatpush1.msra.mxu0 0.0
    %924 = vmatprep.subr.mxu0 0.0
    %925 = vmatpush1.msra.mxu0 0.0
    %926 = vmatprep.subr.mxu0 0.0
    %927 = vmatpush1.msra.mxu0 0.0
    %928 = vmatprep.subr.mxu0 0.0
    %929 = vmatpush1.msra.mxu0 0.0
    %930 = vmatprep.subr.mxu0 0.0
    %931 = vmatpush1.msra.mxu0 0.0
    %932 = vmatprep.subr.mxu0 0.0
    %933 = vmatpush1.msra.mxu0 0.0
    %934 = vmatprep.subr.mxu0 0.0
    %935 = vmatpush1.msra.mxu0 0.0
    %936 = vmatprep.subr.mxu0 0.0
    %937 = vmatpush1.msra.mxu0 0.0
    %938 = vmatprep.subr.mxu0 0.0
    %939 = vmatpush1.msra.mxu0 0.0
    %940 = vmatprep.subr.mxu0 0.0
    %941 = vmatpush1.msra.mxu0 0.0
    %942 = vmatprep.subr.mxu0 0.0
    %943 = vmatpush1.msra.mxu0 0.0
    %944 = vmatprep.subr.mxu0 0.0
    %945 = vmatpush1.msra.mxu0 0.0
    %946 = vmatprep.subr.mxu0 0.0
    %947 = vmatpush1.msra.mxu0 %v916
    %948 = vmatprep.subr.mxu0 0.0
    %949 = vmatpush1.msra.mxu0 %v915
    %950 = vmatprep.subr.mxu0 0.0
    %951 = vmatpush1.msra.mxu0 %v914
    %952 = vmatprep.subr.mxu0 0.0
    %953 = vmatpush1.msra.mxu0 %v913
    %954 = vmatprep.subr.mxu0 0.0
    %955 = vmatpush2.msra.mxu0 0.0
    %956 = vmatprep.subr.mxu0 0.0
    %957 = vmatpush2.msra.mxu0 0.0
    %958 = vmatprep.subr.mxu0 0.0
    %959 = vmatpush2.msra.mxu0 0.0
    %960 = vmatprep.subr.mxu0 0.0
    %961 = vmatpush2.msra.mxu0 0.0
    %962 = vmatprep.subr.mxu0 0.0
    %963 = vmatpush2.msra.mxu0 0.0
    %964 = vmatprep.subr.mxu0 0.0
    %965 = vmatpush2.msra.mxu0 0.0
    %966 = vmatprep.subr.mxu0 0.0
    %967 = vmatpush2.msra.mxu0 0.0
    %968 = vmatprep.subr.mxu0 0.0
    %969 = vmatpush2.msra.mxu0 0.0
    %970 = vmatprep.subr.mxu0 0.0
    %971 = vmatpush2.msra.mxu0 0.0
    %972 = vmatprep.subr.mxu0 0.0
    %973 = vmatpush2.msra.mxu0 0.0
    %974 = vmatprep.subr.mxu0 0.0
    %975 = vmatpush2.msra.mxu0 0.0
    %976 = vmatprep.subr.mxu0 0.0
    %977 = vmatpush2.msra.mxu0 0.0
    %978 = vmatprep.subr.mxu0 0.0
    %979 = vmatpush2.msra.mxu0 0.0
    %980 = vmatprep.subr.mxu0 0.0
    %981 = vmatpush2.msra.mxu0 0.0
    %982 = vmatprep.subr.mxu0 0.0
    %983 = vmatpush2.msra.mxu0 0.0
    %984 = vmatprep.subr.mxu0 0.0
    %985 = vmatpush2.msra.mxu0 0.0
    %986 = vmatprep.mubr.f32.mxu0 0.0
    %987 = vmatmul.mubr.f32.gmra.mxu0 %v755
    %v988 = vpop.f32.mrf.mxu0
    %v989 = vadd.f32 %v921, %v988
    %v990 = vpop.f32.mrf.mxu0
    %991 = vdwg.mxu0
    %v992 = vld [vmem:[#allocation2 + $0x110] sm:$0xff]
    %v993 = vld [vmem:[#allocation2 + $0x118] sm:$0xff]
    %v994 = vld [vmem:[#allocation2 + $0x120] sm:$0xff]
    %v995 = vld [vmem:[#allocation2 + $0x128] sm:$0xff]
    %v996 = vld [vmem:[#allocation2 + $0x170] sm:$0x1]
    %v997 = vlaneseq
    %v998 = vshrl.u32 %v997, 7
    %v999 = vsub.s32 0, %v998
    %v1000 = vrot.slane %v996, %v999
    %1001 = vmatprep.subr.mxu0 0.0
    %1002 = vmatpush1.msra.mxu0 0.0
    %1003 = vmatprep.subr.mxu0 0.0
    %1004 = vmatpush1.msra.mxu0 0.0
    %1005 = vmatprep.subr.mxu0 0.0
    %1006 = vmatpush1.msra.mxu0 0.0
    %1007 = vmatprep.subr.mxu0 0.0
    %1008 = vmatpush1.msra.mxu0 0.0
    %1009 = vmatprep.subr.mxu0 0.0
    %1010 = vmatpush1.msra.mxu0 0.0
    %1011 = vmatprep.subr.mxu0 0.0
    %1012 = vmatpush1.msra.mxu0 0.0
    %1013 = vmatprep.subr.mxu0 0.0
    %1014 = vmatpush1.msra.mxu0 0.0
    %1015 = vmatprep.subr.mxu0 0.0
    %1016 = vmatpush1.msra.mxu0 0.0
    %1017 = vmatprep.subr.mxu0 0.0
    %1018 = vmatpush1.msra.mxu0 0.0
    %1019 = vmatprep.subr.mxu0 0.0
    %1020 = vmatpush1.msra.mxu0 0.0
    %1021 = vmatprep.subr.mxu0 0.0
    %1022 = vmatpush1.msra.mxu0 0.0
    %1023 = vmatprep.subr.mxu0 0.0
    %1024 = vmatpush1.msra.mxu0 0.0
    %1025 = vmatprep.subr.mxu0 0.0
    %1026 = vmatpush1.msra.mxu0 %v995
    %1027 = vmatprep.subr.mxu0 0.0
    %1028 = vmatpush1.msra.mxu0 %v994
    %1029 = vmatprep.subr.mxu0 0.0
    %1030 = vmatpush1.msra.mxu0 %v993
    %1031 = vmatprep.subr.mxu0 0.0
    %1032 = vmatpush1.msra.mxu0 %v992
    %1033 = vmatprep.subr.mxu0 0.0
    %1034 = vmatpush2.msra.mxu0 0.0
    %1035 = vmatprep.subr.mxu0 0.0
    %1036 = vmatpush2.msra.mxu0 0.0
    %1037 = vmatprep.subr.mxu0 0.0
    %1038 = vmatpush2.msra.mxu0 0.0
    %1039 = vmatprep.subr.mxu0 0.0
    %1040 = vmatpush2.msra.mxu0 0.0
    %1041 = vmatprep.subr.mxu0 0.0
    %1042 = vmatpush2.msra.mxu0 0.0
    %1043 = vmatprep.subr.mxu0 0.0
    %1044 = vmatpush2.msra.mxu0 0.0
    %1045 = vmatprep.subr.mxu0 0.0
    %1046 = vmatpush2.msra.mxu0 0.0
    %1047 = vmatprep.subr.mxu0 0.0
    %1048 = vmatpush2.msra.mxu0 0.0
    %1049 = vmatprep.subr.mxu0 0.0
    %1050 = vmatpush2.msra.mxu0 0.0
    %1051 = vmatprep.subr.mxu0 0.0
    %1052 = vmatpush2.msra.mxu0 0.0
    %1053 = vmatprep.subr.mxu0 0.0
    %1054 = vmatpush2.msra.mxu0 0.0
    %1055 = vmatprep.subr.mxu0 0.0
    %1056 = vmatpush2.msra.mxu0 0.0
    %1057 = vmatprep.subr.mxu0 0.0
    %1058 = vmatpush2.msra.mxu0 0.0
    %1059 = vmatprep.subr.mxu0 0.0
    %1060 = vmatpush2.msra.mxu0 0.0
    %1061 = vmatprep.subr.mxu0 0.0
    %1062 = vmatpush2.msra.mxu0 0.0
    %1063 = vmatprep.subr.mxu0 0.0
    %1064 = vmatpush2.msra.mxu0 0.0
    %1065 = vmatprep.mubr.f32.mxu0 0.0
    %1066 = vmatmul.mubr.f32.gmra.mxu0 %v755
    %v1067 = vpop.f32.mrf.mxu0
    %v1068 = vadd.f32 %v1000, %v1067
    %v1069 = vpop.f32.mrf.mxu0
    %1070 = vdwg.mxu0
    %v1071 = vxor.u32 %v1068, 2147483648
    %v1072 = vmul.f32 %v1071, 1.442695
    %v1073 = vpow.pop %v1072
    %v1074 = vadd.f32 %v1073, 1.0
    %v1075 = vrcp.pop %v1074
    %v1076 = vmul.f32 1.0, %v1075
    %v1077 = vmul.f32 %v1076, %v989
    %1078 = vmatprep.subr.mxu0 0.0
    %1079 = vmatpush1.msra.mxu0 0.0
    %1080 = vmatprep.subr.mxu0 0.0
    %1081 = vmatpush1.msra.mxu0 0.0
    %1082 = vmatprep.subr.mxu0 0.0
    %1083 = vmatpush1.msra.mxu0 0.0
    %1084 = vmatprep.subr.mxu0 0.0
    %1085 = vmatpush1.msra.mxu0 0.0
    %1086 = vmatprep.subr.mxu0 0.0
    %1087 = vmatpush1.msra.mxu0 0.0
    %1088 = vmatprep.subr.mxu0 0.0
    %1089 = vmatpush1.msra.mxu0 0.0
    %1090 = vmatprep.subr.mxu0 0.0
    %1091 = vmatpush1.msra.mxu0 0.0
    %1092 = vmatprep.subr.mxu0 0.0
    %1093 = vmatpush1.msra.mxu0 0.0
    %1094 = vmatprep.subr.mxu0 0.0
    %1095 = vmatpush1.msra.mxu0 0.0
    %1096 = vmatprep.subr.mxu0 0.0
    %1097 = vmatpush1.msra.mxu0 0.0
    %1098 = vmatprep.subr.mxu0 0.0
    %1099 = vmatpush1.msra.mxu0 0.0
    %1100 = vmatprep.subr.mxu0 0.0
    %1101 = vmatpush1.msra.mxu0 0.0
    %1102 = vmatprep.subr.mxu0 0.0
    %1103 = vmatpush1.msra.mxu0 0.0
    %1104 = vmatprep.subr.mxu0 0.0
    %1105 = vmatpush1.msra.mxu0 0.0
    %1106 = vmatprep.subr.mxu0 0.0
    %1107 = vmatpush1.msra.mxu0 0.0
    %1108 = vmatprep.subr.mxu0 0.0
    %1109 = vmatpush1.msra.mxu0 %v1077
    %1110 = vmatprep.subr.mxu0 0.0
    %1111 = vmatpush2.msra.mxu0 0.0
    %1112 = vmatprep.subr.mxu0 0.0
    %1113 = vmatpush2.msra.mxu0 0.0
    %1114 = vmatprep.subr.mxu0 0.0
    %1115 = vmatpush2.msra.mxu0 0.0
    %1116 = vmatprep.subr.mxu0 0.0
    %1117 = vmatpush2.msra.mxu0 0.0
    %1118 = vmatprep.subr.mxu0 0.0
    %1119 = vmatpush2.msra.mxu0 0.0
    %1120 = vmatprep.subr.mxu0 0.0
    %1121 = vmatpush2.msra.mxu0 0.0
    %1122 = vmatprep.subr.mxu0 0.0
    %1123 = vmatpush2.msra.mxu0 0.0
    %1124 = vmatprep.subr.mxu0 0.0
    %1125 = vmatpush2.msra.mxu0 0.0
    %1126 = vmatprep.subr.mxu0 0.0
    %1127 = vmatpush2.msra.mxu0 0.0
    %1128 = vmatprep.subr.mxu0 0.0
    %1129 = vmatpush2.msra.mxu0 0.0
    %1130 = vmatprep.subr.mxu0 0.0
    %1131 = vmatpush2.msra.mxu0 0.0
    %1132 = vmatprep.subr.mxu0 0.0
    %1133 = vmatpush2.msra.mxu0 0.0
    %1134 = vmatprep.subr.mxu0 0.0
    %1135 = vmatpush2.msra.mxu0 0.0
    %1136 = vmatprep.subr.mxu0 0.0
    %1137 = vmatpush2.msra.mxu0 0.0
    %1138 = vmatprep.subr.mxu0 0.0
    %1139 = vmatpush2.msra.mxu0 0.0
    %1140 = vmatprep.subr.mxu0 0.0
    %1141 = vmatpush2.msra.mxu0 0.0
    %1142 = vmatprep.mubr.f32.mxu0 0.0
    %1143 = vmatmul.mubr.f32.gmra.mxu0 %v363
    %v1144 = vpop.f32.mrf.mxu0
    %v1145 = vadd.f32 0.0, %v1144
    %v1146 = vpop.f32.mrf.mxu0
    %1147 = vdwg.mxu0
    %1148 = vmatprep.subr.mxu0 0.0
    %1149 = vmatpush1.msra.mxu0 0.0
    %1150 = vmatprep.subr.mxu0 0.0
    %1151 = vmatpush1.msra.mxu0 0.0
    %1152 = vmatprep.subr.mxu0 0.0
    %1153 = vmatpush1.msra.mxu0 0.0
    %1154 = vmatprep.subr.mxu0 0.0
    %1155 = vmatpush1.msra.mxu0 0.0
    %1156 = vmatprep.subr.mxu0 0.0
    %1157 = vmatpush1.msra.mxu0 0.0
    %1158 = vmatprep.subr.mxu0 0.0
    %1159 = vmatpush1.msra.mxu0 0.0
    %1160 = vmatprep.subr.mxu0 0.0
    %1161 = vmatpush1.msra.mxu0 0.0
    %1162 = vmatprep.subr.mxu0 0.0
    %1163 = vmatpush1.msra.mxu0 0.0
    %1164 = vmatprep.subr.mxu0 0.0
    %1165 = vmatpush1.msra.mxu0 0.0
    %1166 = vmatprep.subr.mxu0 0.0
    %1167 = vmatpush1.msra.mxu0 0.0
    %1168 = vmatprep.subr.mxu0 0.0
    %1169 = vmatpush1.msra.mxu0 0.0
    %1170 = vmatprep.subr.mxu0 0.0
    %1171 = vmatpush1.msra.mxu0 0.0
    %1172 = vmatprep.subr.mxu0 0.0
    %1173 = vmatpush1.msra.mxu0 0.0
    %1174 = vmatprep.subr.mxu0 0.0
    %1175 = vmatpush1.msra.mxu0 0.0
    %1176 = vmatprep.subr.mxu0 0.0
    %1177 = vmatpush1.msra.mxu0 0.0
    %1178 = vmatprep.subr.mxu0 0.0
    %1179 = vmatpush1.msra.mxu0 %v912
    %1180 = vmatprep.subr.mxu0 0.0
    %1181 = vmatpush2.msra.mxu0 0.0
    %1182 = vmatprep.subr.mxu0 0.0
    %1183 = vmatpush2.msra.mxu0 0.0
    %1184 = vmatprep.subr.mxu0 0.0
    %1185 = vmatpush2.msra.mxu0 0.0
    %1186 = vmatprep.subr.mxu0 0.0
    %1187 = vmatpush2.msra.mxu0 0.0
    %1188 = vmatprep.subr.mxu0 0.0
    %1189 = vmatpush2.msra.mxu0 0.0
    %1190 = vmatprep.subr.mxu0 0.0
    %1191 = vmatpush2.msra.mxu0 0.0
    %1192 = vmatprep.subr.mxu0 0.0
    %1193 = vmatpush2.msra.mxu0 0.0
    %1194 = vmatprep.subr.mxu0 0.0
    %1195 = vmatpush2.msra.mxu0 0.0
    %1196 = vmatprep.subr.mxu0 0.0
    %1197 = vmatpush2.msra.mxu0 0.0
    %1198 = vmatprep.subr.mxu0 0.0
    %1199 = vmatpush2.msra.mxu0 0.0
    %1200 = vmatprep.subr.mxu0 0.0
    %1201 = vmatpush2.msra.mxu0 0.0
    %1202 = vmatprep.subr.mxu0 0.0
    %1203 = vmatpush2.msra.mxu0 0.0
    %1204 = vmatprep.subr.mxu0 0.0
    %1205 = vmatpush2.msra.mxu0 0.0
    %1206 = vmatprep.subr.mxu0 0.0
    %1207 = vmatpush2.msra.mxu0 0.0
    %1208 = vmatprep.subr.mxu0 0.0
    %1209 = vmatpush2.msra.mxu0 0.0
    %1210 = vmatprep.subr.mxu0 0.0
    %1211 = vmatpush2.msra.mxu0 0.0
    %1212 = vmatprep.mubr.f32.mxu0 0.0
    %1213 = vmatmul.mubr.f32.gmra.mxu0 %v436
    %v1214 = vpop.f32.mrf.mxu0
    %v1215 = vadd.f32 %v1145, %v1214
    %v1216 = vpop.f32.mrf.mxu0
    %1217 = vdwg.mxu0
    %v1218 = vld [vmem:[#allocation2 + $0xd0] sm:$0xff]
    %v1219 = vld [vmem:[#allocation2 + $0xd8] sm:$0xff]
    %v1220 = vld [vmem:[#allocation2 + $0xe0] sm:$0xff]
    %v1221 = vld [vmem:[#allocation2 + $0xe8] sm:$0xff]
    %v1222 = vld [vmem:[#allocation2 + $0x160] sm:$0x1]
    %v1223 = vlaneseq
    %v1224 = vshrl.u32 %v1223, 7
    %v1225 = vsub.s32 0, %v1224
    %v1226 = vrot.slane %v1222, %v1225
    %1227 = vmatprep.subr.mxu0 0.0
    %1228 = vmatpush1.msra.mxu0 0.0
    %1229 = vmatprep.subr.mxu0 0.0
    %1230 = vmatpush1.msra.mxu0 0.0
    %1231 = vmatprep.subr.mxu0 0.0
    %1232 = vmatpush1.msra.mxu0 0.0
    %1233 = vmatprep.subr.mxu0 0.0
    %1234 = vmatpush1.msra.mxu0 0.0
    %1235 = vmatprep.subr.mxu0 0.0
    %1236 = vmatpush1.msra.mxu0 0.0
    %1237 = vmatprep.subr.mxu0 0.0
    %1238 = vmatpush1.msra.mxu0 0.0
    %1239 = vmatprep.subr.mxu0 0.0
    %1240 = vmatpush1.msra.mxu0 0.0
    %1241 = vmatprep.subr.mxu0 0.0
    %1242 = vmatpush1.msra.mxu0 0.0
    %1243 = vmatprep.subr.mxu0 0.0
    %1244 = vmatpush1.msra.mxu0 0.0
    %1245 = vmatprep.subr.mxu0 0.0
    %1246 = vmatpush1.msra.mxu0 0.0
    %1247 = vmatprep.subr.mxu0 0.0
    %1248 = vmatpush1.msra.mxu0 0.0
    %1249 = vmatprep.subr.mxu0 0.0
    %1250 = vmatpush1.msra.mxu0 0.0
    %1251 = vmatprep.subr.mxu0 0.0
    %1252 = vmatpush1.msra.mxu0 %v1221
    %1253 = vmatprep.subr.mxu0 0.0
    %1254 = vmatpush1.msra.mxu0 %v1220
    %1255 = vmatprep.subr.mxu0 0.0
    %1256 = vmatpush1.msra.mxu0 %v1219
    %1257 = vmatprep.subr.mxu0 0.0
    %1258 = vmatpush1.msra.mxu0 %v1218
    %1259 = vmatprep.subr.mxu0 0.0
    %1260 = vmatpush2.msra.mxu0 0.0
    %1261 = vmatprep.subr.mxu0 0.0
    %1262 = vmatpush2.msra.mxu0 0.0
    %1263 = vmatprep.subr.mxu0 0.0
    %1264 = vmatpush2.msra.mxu0 0.0
    %1265 = vmatprep.subr.mxu0 0.0
    %1266 = vmatpush2.msra.mxu0 0.0
    %1267 = vmatprep.subr.mxu0 0.0
    %1268 = vmatpush2.msra.mxu0 0.0
    %1269 = vmatprep.subr.mxu0 0.0
    %1270 = vmatpush2.msra.mxu0 0.0
    %1271 = vmatprep.subr.mxu0 0.0
    %1272 = vmatpush2.msra.mxu0 0.0
    %1273 = vmatprep.subr.mxu0 0.0
    %1274 = vmatpush2.msra.mxu0 0.0
    %1275 = vmatprep.subr.mxu0 0.0
    %1276 = vmatpush2.msra.mxu0 0.0
    %1277 = vmatprep.subr.mxu0 0.0
    %1278 = vmatpush2.msra.mxu0 0.0
    %1279 = vmatprep.subr.mxu0 0.0
    %1280 = vmatpush2.msra.mxu0 0.0
    %1281 = vmatprep.subr.mxu0 0.0
    %1282 = vmatpush2.msra.mxu0 0.0
    %1283 = vmatprep.subr.mxu0 0.0
    %1284 = vmatpush2.msra.mxu0 0.0
    %1285 = vmatprep.subr.mxu0 0.0
    %1286 = vmatpush2.msra.mxu0 0.0
    %1287 = vmatprep.subr.mxu0 0.0
    %1288 = vmatpush2.msra.mxu0 0.0
    %1289 = vmatprep.subr.mxu0 0.0
    %1290 = vmatpush2.msra.mxu0 0.0
    %1291 = vmatprep.mubr.f32.mxu0 0.0
    %1292 = vmatmul.mubr.f32.gmra.mxu0 %v755
    %v1293 = vpop.f32.mrf.mxu0
    %v1294 = vadd.f32 %v1226, %v1293
    %v1295 = vpop.f32.mrf.mxu0
    %1296 = vdwg.mxu0
    %v1297 = vld [vmem:[#allocation2 + $0x130] sm:$0xff]
    %v1298 = vld [vmem:[#allocation2 + $0x138] sm:$0xff]
    %v1299 = vld [vmem:[#allocation2 + $0x140] sm:$0xff]
    %v1300 = vld [vmem:[#allocation2 + $0x148] sm:$0xff]
    %v1301 = vld [vmem:[#allocation2 + $0x178] sm:$0x1]
    %v1302 = vlaneseq
    %v1303 = vshrl.u32 %v1302, 7
    %v1304 = vsub.s32 0, %v1303
    %v1305 = vrot.slane %v1301, %v1304
    %1306 = vmatprep.subr.mxu0 0.0
    %1307 = vmatpush1.msra.mxu0 0.0
    %1308 = vmatprep.subr.mxu0 0.0
    %1309 = vmatpush1.msra.mxu0 0.0
    %1310 = vmatprep.subr.mxu0 0.0
    %1311 = vmatpush1.msra.mxu0 0.0
    %1312 = vmatprep.subr.mxu0 0.0
    %1313 = vmatpush1.msra.mxu0 0.0
    %1314 = vmatprep.subr.mxu0 0.0
    %1315 = vmatpush1.msra.mxu0 0.0
    %1316 = vmatprep.subr.mxu0 0.0
    %1317 = vmatpush1.msra.mxu0 0.0
    %1318 = vmatprep.subr.mxu0 0.0
    %1319 = vmatpush1.msra.mxu0 0.0
    %1320 = vmatprep.subr.mxu0 0.0
    %1321 = vmatpush1.msra.mxu0 0.0
    %1322 = vmatprep.subr.mxu0 0.0
    %1323 = vmatpush1.msra.mxu0 0.0
    %1324 = vmatprep.subr.mxu0 0.0
    %1325 = vmatpush1.msra.mxu0 0.0
    %1326 = vmatprep.subr.mxu0 0.0
    %1327 = vmatpush1.msra.mxu0 0.0
    %1328 = vmatprep.subr.mxu0 0.0
    %1329 = vmatpush1.msra.mxu0 0.0
    %1330 = vmatprep.subr.mxu0 0.0
    %1331 = vmatpush1.msra.mxu0 %v1300
    %1332 = vmatprep.subr.mxu0 0.0
    %1333 = vmatpush1.msra.mxu0 %v1299
    %1334 = vmatprep.subr.mxu0 0.0
    %1335 = vmatpush1.msra.mxu0 %v1298
    %1336 = vmatprep.subr.mxu0 0.0
    %1337 = vmatpush1.msra.mxu0 %v1297
    %1338 = vmatprep.subr.mxu0 0.0
    %1339 = vmatpush2.msra.mxu0 0.0
    %1340 = vmatprep.subr.mxu0 0.0
    %1341 = vmatpush2.msra.mxu0 0.0
    %1342 = vmatprep.subr.mxu0 0.0
    %1343 = vmatpush2.msra.mxu0 0.0
    %1344 = vmatprep.subr.mxu0 0.0
    %1345 = vmatpush2.msra.mxu0 0.0
    %1346 = vmatprep.subr.mxu0 0.0
    %1347 = vmatpush2.msra.mxu0 0.0
    %1348 = vmatprep.subr.mxu0 0.0
    %1349 = vmatpush2.msra.mxu0 0.0
    %1350 = vmatprep.subr.mxu0 0.0
    %1351 = vmatpush2.msra.mxu0 0.0
    %1352 = vmatprep.subr.mxu0 0.0
    %1353 = vmatpush2.msra.mxu0 0.0
    %1354 = vmatprep.subr.mxu0 0.0
    %1355 = vmatpush2.msra.mxu0 0.0
    %1356 = vmatprep.subr.mxu0 0.0
    %1357 = vmatpush2.msra.mxu0 0.0
    %1358 = vmatprep.subr.mxu0 0.0
    %1359 = vmatpush2.msra.mxu0 0.0
    %1360 = vmatprep.subr.mxu0 0.0
    %1361 = vmatpush2.msra.mxu0 0.0
    %1362 = vmatprep.subr.mxu0 0.0
    %1363 = vmatpush2.msra.mxu0 0.0
    %1364 = vmatprep.subr.mxu0 0.0
    %1365 = vmatpush2.msra.mxu0 0.0
    %1366 = vmatprep.subr.mxu0 0.0
    %1367 = vmatpush2.msra.mxu0 0.0
    %1368 = vmatprep.subr.mxu0 0.0
    %1369 = vmatpush2.msra.mxu0 0.0
    %1370 = vmatprep.mubr.f32.mxu0 0.0
    %1371 = vmatmul.mubr.f32.gmra.mxu0 %v755
    %v1372 = vpop.f32.mrf.mxu0
    %v1373 = vadd.f32 %v1305, %v1372
    %v1374 = vpop.f32.mrf.mxu0
    %1375 = vdwg.mxu0
    %v1376 = vxor.u32 %v1373, 2147483648
    %v1377 = vmul.f32 %v1376, 1.442695
    %v1378 = vpow.pop %v1377
    %v1379 = vadd.f32 %v1378, 1.0
    %v1380 = vrcp.pop %v1379
    %v1381 = vmul.f32 1.0, %v1380
    %v1382 = vmul.f32 %v1381, %v1294
    %1383 = vmatprep.subr.mxu0 0.0
    %1384 = vmatpush1.msra.mxu0 0.0
    %1385 = vmatprep.subr.mxu0 0.0
    %1386 = vmatpush1.msra.mxu0 0.0
    %1387 = vmatprep.subr.mxu0 0.0
    %1388 = vmatpush1.msra.mxu0 0.0
    %1389 = vmatprep.subr.mxu0 0.0
    %1390 = vmatpush1.msra.mxu0 0.0
    %1391 = vmatprep.subr.mxu0 0.0
    %1392 = vmatpush1.msra.mxu0 0.0
    %1393 = vmatprep.subr.mxu0 0.0
    %1394 = vmatpush1.msra.mxu0 0.0
    %1395 = vmatprep.subr.mxu0 0.0
    %1396 = vmatpush1.msra.mxu0 0.0
    %1397 = vmatprep.subr.mxu0 0.0
    %1398 = vmatpush1.msra.mxu0 0.0
    %1399 = vmatprep.subr.mxu0 0.0
    %1400 = vmatpush1.msra.mxu0 0.0
    %1401 = vmatprep.subr.mxu0 0.0
    %1402 = vmatpush1.msra.mxu0 0.0
    %1403 = vmatprep.subr.mxu0 0.0
    %1404 = vmatpush1.msra.mxu0 0.0
    %1405 = vmatprep.subr.mxu0 0.0
    %1406 = vmatpush1.msra.mxu0 0.0
    %1407 = vmatprep.subr.mxu0 0.0
    %1408 = vmatpush1.msra.mxu0 0.0
    %1409 = vmatprep.subr.mxu0 0.0
    %1410 = vmatpush1.msra.mxu0 0.0
    %1411 = vmatprep.subr.mxu0 0.0
    %1412 = vmatpush1.msra.mxu0 0.0
    %1413 = vmatprep.subr.mxu0 0.0
    %1414 = vmatpush1.msra.mxu0 %v1382
    %1415 = vmatprep.subr.mxu0 0.0
    %1416 = vmatpush2.msra.mxu0 0.0
    %1417 = vmatprep.subr.mxu0 0.0
    %1418 = vmatpush2.msra.mxu0 0.0
    %1419 = vmatprep.subr.mxu0 0.0
    %1420 = vmatpush2.msra.mxu0 0.0
    %1421 = vmatprep.subr.mxu0 0.0
    %1422 = vmatpush2.msra.mxu0 0.0
    %1423 = vmatprep.subr.mxu0 0.0
    %1424 = vmatpush2.msra.mxu0 0.0
    %1425 = vmatprep.subr.mxu0 0.0
    %1426 = vmatpush2.msra.mxu0 0.0
    %1427 = vmatprep.subr.mxu0 0.0
    %1428 = vmatpush2.msra.mxu0 0.0
    %1429 = vmatprep.subr.mxu0 0.0
    %1430 = vmatpush2.msra.mxu0 0.0
    %1431 = vmatprep.subr.mxu0 0.0
    %1432 = vmatpush2.msra.mxu0 0.0
    %1433 = vmatprep.subr.mxu0 0.0
    %1434 = vmatpush2.msra.mxu0 0.0
    %1435 = vmatprep.subr.mxu0 0.0
    %1436 = vmatpush2.msra.mxu0 0.0
    %1437 = vmatprep.subr.mxu0 0.0
    %1438 = vmatpush2.msra.mxu0 0.0
    %1439 = vmatprep.subr.mxu0 0.0
    %1440 = vmatpush2.msra.mxu0 0.0
    %1441 = vmatprep.subr.mxu0 0.0
    %1442 = vmatpush2.msra.mxu0 0.0
    %1443 = vmatprep.subr.mxu0 0.0
    %1444 = vmatpush2.msra.mxu0 0.0
    %1445 = vmatprep.subr.mxu0 0.0
    %1446 = vmatpush2.msra.mxu0 0.0
    %1447 = vmatprep.mubr.f32.mxu0 0.0
    %1448 = vmatmul.mubr.f32.gmra.mxu0 %v670
    %v1449 = vpop.f32.mrf.mxu0
    %v1450 = vadd.f32 0.0, %v1449
    %v1451 = vpop.f32.mrf.mxu0
    %1452 = vdwg.mxu0
    %v1453 = vadd.f32 %v1215, %v1450
    %v1454 = vmax.f32 %v1453, 0.0
    %v1455 = vld [vmem:[#allocation2 + $0x180] sm:$0xff]
    %v1456 = vld [vmem:[#allocation2 + $0x188] sm:$0xff]
    %v1457 = vld [vmem:[#allocation2 + $0x190] sm:$0xff]
    %v1458 = vld [vmem:[#allocation2 + $0x198] sm:$0xff]
    %v1459 = vld [vmem:[#allocation2 + $0x240] sm:$0x1]
    %v1460 = vlaneseq
    %v1461 = vshrl.u32 %v1460, 7
    %v1462 = vsub.s32 0, %v1461
    %v1463 = vrot.slane %v1459, %v1462
    %v1465 = vsel %vm753, %v1454, 0
    %1467 = vmatprep.subr.mxu0 0.0
    %1468 = vmatpush1.msra.mxu0 0.0
    %1469 = vmatprep.subr.mxu0 0.0
    %1470 = vmatpush1.msra.mxu0 0.0
    %1471 = vmatprep.subr.mxu0 0.0
    %1472 = vmatpush1.msra.mxu0 0.0
    %1473 = vmatprep.subr.mxu0 0.0
    %1474 = vmatpush1.msra.mxu0 0.0
    %1475 = vmatprep.subr.mxu0 0.0
    %1476 = vmatpush1.msra.mxu0 0.0
    %1477 = vmatprep.subr.mxu0 0.0
    %1478 = vmatpush1.msra.mxu0 0.0
    %1479 = vmatprep.subr.mxu0 0.0
    %1480 = vmatpush1.msra.mxu0 0.0
    %1481 = vmatprep.subr.mxu0 0.0
    %1482 = vmatpush1.msra.mxu0 0.0
    %1483 = vmatprep.subr.mxu0 0.0
    %1484 = vmatpush1.msra.mxu0 0.0
    %1485 = vmatprep.subr.mxu0 0.0
    %1486 = vmatpush1.msra.mxu0 0.0
    %1487 = vmatprep.subr.mxu0 0.0
    %1488 = vmatpush1.msra.mxu0 0.0
    %1489 = vmatprep.subr.mxu0 0.0
    %1490 = vmatpush1.msra.mxu0 0.0
    %1491 = vmatprep.subr.mxu0 0.0
    %1492 = vmatpush1.msra.mxu0 %v1458
    %1493 = vmatprep.subr.mxu0 0.0
    %1494 = vmatpush1.msra.mxu0 %v1457
    %1495 = vmatprep.subr.mxu0 0.0
    %1496 = vmatpush1.msra.mxu0 %v1456
    %1497 = vmatprep.subr.mxu0 0.0
    %1498 = vmatpush1.msra.mxu0 %v1455
    %1499 = vmatprep.subr.mxu0 0.0
    %1500 = vmatpush2.msra.mxu0 0.0
    %1501 = vmatprep.subr.mxu0 0.0
    %1502 = vmatpush2.msra.mxu0 0.0
    %1503 = vmatprep.subr.mxu0 0.0
    %1504 = vmatpush2.msra.mxu0 0.0
    %1505 = vmatprep.subr.mxu0 0.0
    %1506 = vmatpush2.msra.mxu0 0.0
    %1507 = vmatprep.subr.mxu0 0.0
    %1508 = vmatpush2.msra.mxu0 0.0
    %1509 = vmatprep.subr.mxu0 0.0
    %1510 = vmatpush2.msra.mxu0 0.0
    %1511 = vmatprep.subr.mxu0 0.0
    %1512 = vmatpush2.msra.mxu0 0.0
    %1513 = vmatprep.subr.mxu0 0.0
    %1514 = vmatpush2.msra.mxu0 0.0
    %1515 = vmatprep.subr.mxu0 0.0
    %1516 = vmatpush2.msra.mxu0 0.0
    %1517 = vmatprep.subr.mxu0 0.0
    %1518 = vmatpush2.msra.mxu0 0.0
    %1519 = vmatprep.subr.mxu0 0.0
    %1520 = vmatpush2.msra.mxu0 0.0
    %1521 = vmatprep.subr.mxu0 0.0
    %1522 = vmatpush2.msra.mxu0 0.0
    %1523 = vmatprep.subr.mxu0 0.0
    %1524 = vmatpush2.msra.mxu0 0.0
    %1525 = vmatprep.subr.mxu0 0.0
    %1526 = vmatpush2.msra.mxu0 0.0
    %1527 = vmatprep.subr.mxu0 0.0
    %1528 = vmatpush2.msra.mxu0 0.0
    %1529 = vmatprep.subr.mxu0 0.0
    %1530 = vmatpush2.msra.mxu0 0.0
    %1531 = vmatprep.mubr.f32.mxu0 0.0
    %1532 = vmatmul.mubr.f32.gmra.mxu0 %v1465
    %v1533 = vpop.f32.mrf.mxu0
    %v1534 = vadd.f32 %v1463, %v1533
    %v1535 = vpop.f32.mrf.mxu0
    %1536 = vdwg.mxu0
    %v1537 = vld [vmem:[#allocation2 + $0x1e0] sm:$0xff]
    %v1538 = vld [vmem:[#allocation2 + $0x1e8] sm:$0xff]
    %v1539 = vld [vmem:[#allocation2 + $0x1f0] sm:$0xff]
    %v1540 = vld [vmem:[#allocation2 + $0x1f8] sm:$0xff]
    %v1541 = vld [vmem:[#allocation2 + $0x258] sm:$0x1]
    %v1542 = vlaneseq
    %v1543 = vshrl.u32 %v1542, 7
    %v1544 = vsub.s32 0, %v1543
    %v1545 = vrot.slane %v1541, %v1544
    %1546 = vmatprep.subr.mxu0 0.0
    %1547 = vmatpush1.msra.mxu0 0.0
    %1548 = vmatprep.subr.mxu0 0.0
    %1549 = vmatpush1.msra.mxu0 0.0
    %1550 = vmatprep.subr.mxu0 0.0
    %1551 = vmatpush1.msra.mxu0 0.0
    %1552 = vmatprep.subr.mxu0 0.0
    %1553 = vmatpush1.msra.mxu0 0.0
    %1554 = vmatprep.subr.mxu0 0.0
    %1555 = vmatpush1.msra.mxu0 0.0
    %1556 = vmatprep.subr.mxu0 0.0
    %1557 = vmatpush1.msra.mxu0 0.0
    %1558 = vmatprep.subr.mxu0 0.0
    %1559 = vmatpush1.msra.mxu0 0.0
    %1560 = vmatprep.subr.mxu0 0.0
    %1561 = vmatpush1.msra.mxu0 0.0
    %1562 = vmatprep.subr.mxu0 0.0
    %1563 = vmatpush1.msra.mxu0 0.0
    %1564 = vmatprep.subr.mxu0 0.0
    %1565 = vmatpush1.msra.mxu0 0.0
    %1566 = vmatprep.subr.mxu0 0.0
    %1567 = vmatpush1.msra.mxu0 0.0
    %1568 = vmatprep.subr.mxu0 0.0
    %1569 = vmatpush1.msra.mxu0 0.0
    %1570 = vmatprep.subr.mxu0 0.0
    %1571 = vmatpush1.msra.mxu0 %v1540
    %1572 = vmatprep.subr.mxu0 0.0
    %1573 = vmatpush1.msra.mxu0 %v1539
    %1574 = vmatprep.subr.mxu0 0.0
    %1575 = vmatpush1.msra.mxu0 %v1538
    %1576 = vmatprep.subr.mxu0 0.0
    %1577 = vmatpush1.msra.mxu0 %v1537
    %1578 = vmatprep.subr.mxu0 0.0
    %1579 = vmatpush2.msra.mxu0 0.0
    %1580 = vmatprep.subr.mxu0 0.0
    %1581 = vmatpush2.msra.mxu0 0.0
    %1582 = vmatprep.subr.mxu0 0.0
    %1583 = vmatpush2.msra.mxu0 0.0
    %1584 = vmatprep.subr.mxu0 0.0
    %1585 = vmatpush2.msra.mxu0 0.0
    %1586 = vmatprep.subr.mxu0 0.0
    %1587 = vmatpush2.msra.mxu0 0.0
    %1588 = vmatprep.subr.mxu0 0.0
    %1589 = vmatpush2.msra.mxu0 0.0
    %1590 = vmatprep.subr.mxu0 0.0
    %1591 = vmatpush2.msra.mxu0 0.0
    %1592 = vmatprep.subr.mxu0 0.0
    %1593 = vmatpush2.msra.mxu0 0.0
    %1594 = vmatprep.subr.mxu0 0.0
    %1595 = vmatpush2.msra.mxu0 0.0
    %1596 = vmatprep.subr.mxu0 0.0
    %1597 = vmatpush2.msra.mxu0 0.0
    %1598 = vmatprep.subr.mxu0 0.0
    %1599 = vmatpush2.msra.mxu0 0.0
    %1600 = vmatprep.subr.mxu0 0.0
    %1601 = vmatpush2.msra.mxu0 0.0
    %1602 = vmatprep.subr.mxu0 0.0
    %1603 = vmatpush2.msra.mxu0 0.0
    %1604 = vmatprep.subr.mxu0 0.0
    %1605 = vmatpush2.msra.mxu0 0.0
    %1606 = vmatprep.subr.mxu0 0.0
    %1607 = vmatpush2.msra.mxu0 0.0
    %1608 = vmatprep.subr.mxu0 0.0
    %1609 = vmatpush2.msra.mxu0 0.0
    %1610 = vmatprep.mubr.f32.mxu0 0.0
    %1611 = vmatmul.mubr.f32.gmra.mxu0 %v1465
    %v1612 = vpop.f32.mrf.mxu0
    %v1613 = vadd.f32 %v1545, %v1612
    %v1614 = vpop.f32.mrf.mxu0
    %1615 = vdwg.mxu0
    %v1616 = vxor.u32 %v1613, 2147483648
    %v1617 = vmul.f32 %v1616, 1.442695
    %v1618 = vpow.pop %v1617
    %v1619 = vadd.f32 %v1618, 1.0
    %v1620 = vrcp.pop %v1619
    %v1621 = vmul.f32 1.0, %v1620
    %v1622 = vmul.f32 %v1621, %v1534
    %v1623 = vld [vmem:[#allocation2 + $0x1a0] sm:$0xff]
    %v1624 = vld [vmem:[#allocation2 + $0x1a8] sm:$0xff]
    %v1625 = vld [vmem:[#allocation2 + $0x1b0] sm:$0xff]
    %v1626 = vld [vmem:[#allocation2 + $0x1b8] sm:$0xff]
    %v1627 = vld [vmem:[#allocation2 + $0x248] sm:$0x1]
    %v1628 = vlaneseq
    %v1629 = vshrl.u32 %v1628, 7
    %v1630 = vsub.s32 0, %v1629
    %v1631 = vrot.slane %v1627, %v1630
    %1632 = vmatprep.subr.mxu0 0.0
    %1633 = vmatpush1.msra.mxu0 0.0
    %1634 = vmatprep.subr.mxu0 0.0
    %1635 = vmatpush1.msra.mxu0 0.0
    %1636 = vmatprep.subr.mxu0 0.0
    %1637 = vmatpush1.msra.mxu0 0.0
    %1638 = vmatprep.subr.mxu0 0.0
    %1639 = vmatpush1.msra.mxu0 0.0
    %1640 = vmatprep.subr.mxu0 0.0
    %1641 = vmatpush1.msra.mxu0 0.0
    %1642 = vmatprep.subr.mxu0 0.0
    %1643 = vmatpush1.msra.mxu0 0.0
    %1644 = vmatprep.subr.mxu0 0.0
    %1645 = vmatpush1.msra.mxu0 0.0
    %1646 = vmatprep.subr.mxu0 0.0
    %1647 = vmatpush1.msra.mxu0 0.0
    %1648 = vmatprep.subr.mxu0 0.0
    %1649 = vmatpush1.msra.mxu0 0.0
    %1650 = vmatprep.subr.mxu0 0.0
    %1651 = vmatpush1.msra.mxu0 0.0
    %1652 = vmatprep.subr.mxu0 0.0
    %1653 = vmatpush1.msra.mxu0 0.0
    %1654 = vmatprep.subr.mxu0 0.0
    %1655 = vmatpush1.msra.mxu0 0.0
    %1656 = vmatprep.subr.mxu0 0.0
    %1657 = vmatpush1.msra.mxu0 %v1626
    %1658 = vmatprep.subr.mxu0 0.0
    %1659 = vmatpush1.msra.mxu0 %v1625
    %1660 = vmatprep.subr.mxu0 0.0
    %1661 = vmatpush1.msra.mxu0 %v1624
    %1662 = vmatprep.subr.mxu0 0.0
    %1663 = vmatpush1.msra.mxu0 %v1623
    %1664 = vmatprep.subr.mxu0 0.0
    %1665 = vmatpush2.msra.mxu0 0.0
    %1666 = vmatprep.subr.mxu0 0.0
    %1667 = vmatpush2.msra.mxu0 0.0
    %1668 = vmatprep.subr.mxu0 0.0
    %1669 = vmatpush2.msra.mxu0 0.0
    %1670 = vmatprep.subr.mxu0 0.0
    %1671 = vmatpush2.msra.mxu0 0.0
    %1672 = vmatprep.subr.mxu0 0.0
    %1673 = vmatpush2.msra.mxu0 0.0
    %1674 = vmatprep.subr.mxu0 0.0
    %1675 = vmatpush2.msra.mxu0 0.0
    %1676 = vmatprep.subr.mxu0 0.0
    %1677 = vmatpush2.msra.mxu0 0.0
    %1678 = vmatprep.subr.mxu0 0.0
    %1679 = vmatpush2.msra.mxu0 0.0
    %1680 = vmatprep.subr.mxu0 0.0
    %1681 = vmatpush2.msra.mxu0 0.0
    %1682 = vmatprep.subr.mxu0 0.0
    %1683 = vmatpush2.msra.mxu0 0.0
    %1684 = vmatprep.subr.mxu0 0.0
    %1685 = vmatpush2.msra.mxu0 0.0
    %1686 = vmatprep.subr.mxu0 0.0
    %1687 = vmatpush2.msra.mxu0 0.0
    %1688 = vmatprep.subr.mxu0 0.0
    %1689 = vmatpush2.msra.mxu0 0.0
    %1690 = vmatprep.subr.mxu0 0.0
    %1691 = vmatpush2.msra.mxu0 0.0
    %1692 = vmatprep.subr.mxu0 0.0
    %1693 = vmatpush2.msra.mxu0 0.0
    %1694 = vmatprep.subr.mxu0 0.0
    %1695 = vmatpush2.msra.mxu0 0.0
    %1696 = vmatprep.mubr.f32.mxu0 0.0
    %1697 = vmatmul.mubr.f32.gmra.mxu0 %v1465
    %v1698 = vpop.f32.mrf.mxu0
    %v1699 = vadd.f32 %v1631, %v1698
    %v1700 = vpop.f32.mrf.mxu0
    %1701 = vdwg.mxu0
    %v1702 = vld [vmem:[#allocation2 + $0x200] sm:$0xff]
    %v1703 = vld [vmem:[#allocation2 + $0x208] sm:$0xff]
    %v1704 = vld [vmem:[#allocation2 + $0x210] sm:$0xff]
    %v1705 = vld [vmem:[#allocation2 + $0x218] sm:$0xff]
    %v1706 = vld [vmem:[#allocation2 + $0x260] sm:$0x1]
    %v1707 = vlaneseq
    %v1708 = vshrl.u32 %v1707, 7
    %v1709 = vsub.s32 0, %v1708
    %v1710 = vrot.slane %v1706, %v1709
    %1711 = vmatprep.subr.mxu0 0.0
    %1712 = vmatpush1.msra.mxu0 0.0
    %1713 = vmatprep.subr.mxu0 0.0
    %1714 = vmatpush1.msra.mxu0 0.0
    %1715 = vmatprep.subr.mxu0 0.0
    %1716 = vmatpush1.msra.mxu0 0.0
    %1717 = vmatprep.subr.mxu0 0.0
    %1718 = vmatpush1.msra.mxu0 0.0
    %1719 = vmatprep.subr.mxu0 0.0
    %1720 = vmatpush1.msra.mxu0 0.0
    %1721 = vmatprep.subr.mxu0 0.0
    %1722 = vmatpush1.msra.mxu0 0.0
    %1723 = vmatprep.subr.mxu0 0.0
    %1724 = vmatpush1.msra.mxu0 0.0
    %1725 = vmatprep.subr.mxu0 0.0
    %1726 = vmatpush1.msra.mxu0 0.0
    %1727 = vmatprep.subr.mxu0 0.0
    %1728 = vmatpush1.msra.mxu0 0.0
    %1729 = vmatprep.subr.mxu0 0.0
    %1730 = vmatpush1.msra.mxu0 0.0
    %1731 = vmatprep.subr.mxu0 0.0
    %1732 = vmatpush1.msra.mxu0 0.0
    %1733 = vmatprep.subr.mxu0 0.0
    %1734 = vmatpush1.msra.mxu0 0.0
    %1735 = vmatprep.subr.mxu0 0.0
    %1736 = vmatpush1.msra.mxu0 %v1705
    %1737 = vmatprep.subr.mxu0 0.0
    %1738 = vmatpush1.msra.mxu0 %v1704
    %1739 = vmatprep.subr.mxu0 0.0
    %1740 = vmatpush1.msra.mxu0 %v1703
    %1741 = vmatprep.subr.mxu0 0.0
    %1742 = vmatpush1.msra.mxu0 %v1702
    %1743 = vmatprep.subr.mxu0 0.0
    %1744 = vmatpush2.msra.mxu0 0.0
    %1745 = vmatprep.subr.mxu0 0.0
    %1746 = vmatpush2.msra.mxu0 0.0
    %1747 = vmatprep.subr.mxu0 0.0
    %1748 = vmatpush2.msra.mxu0 0.0
    %1749 = vmatprep.subr.mxu0 0.0
    %1750 = vmatpush2.msra.mxu0 0.0
    %1751 = vmatprep.subr.mxu0 0.0
    %1752 = vmatpush2.msra.mxu0 0.0
    %1753 = vmatprep.subr.mxu0 0.0
    %1754 = vmatpush2.msra.mxu0 0.0
    %1755 = vmatprep.subr.mxu0 0.0
    %1756 = vmatpush2.msra.mxu0 0.0
    %1757 = vmatprep.subr.mxu0 0.0
    %1758 = vmatpush2.msra.mxu0 0.0
    %1759 = vmatprep.subr.mxu0 0.0
    %1760 = vmatpush2.msra.mxu0 0.0
    %1761 = vmatprep.subr.mxu0 0.0
    %1762 = vmatpush2.msra.mxu0 0.0
    %1763 = vmatprep.subr.mxu0 0.0
    %1764 = vmatpush2.msra.mxu0 0.0
    %1765 = vmatprep.subr.mxu0 0.0
    %1766 = vmatpush2.msra.mxu0 0.0
    %1767 = vmatprep.subr.mxu0 0.0
    %1768 = vmatpush2.msra.mxu0 0.0
    %1769 = vmatprep.subr.mxu0 0.0
    %1770 = vmatpush2.msra.mxu0 0.0
    %1771 = vmatprep.subr.mxu0 0.0
    %1772 = vmatpush2.msra.mxu0 0.0
    %1773 = vmatprep.subr.mxu0 0.0
    %1774 = vmatpush2.msra.mxu0 0.0
    %1775 = vmatprep.mubr.f32.mxu0 0.0
    %1776 = vmatmul.mubr.f32.gmra.mxu0 %v1465
    %v1777 = vpop.f32.mrf.mxu0
    %v1778 = vadd.f32 %v1710, %v1777
    %v1779 = vpop.f32.mrf.mxu0
    %1780 = vdwg.mxu0
    %v1781 = vxor.u32 %v1778, 2147483648
    %v1782 = vmul.f32 %v1781, 1.442695
    %v1783 = vpow.pop %v1782
    %v1784 = vadd.f32 %v1783, 1.0
    %v1785 = vrcp.pop %v1784
    %v1786 = vmul.f32 1.0, %v1785
    %v1787 = vmul.f32 %v1786, %v1699
    %1788 = vmatprep.subr.mxu0 0.0
    %1789 = vmatpush1.msra.mxu0 0.0
    %1790 = vmatprep.subr.mxu0 0.0
    %1791 = vmatpush1.msra.mxu0 0.0
    %1792 = vmatprep.subr.mxu0 0.0
    %1793 = vmatpush1.msra.mxu0 0.0
    %1794 = vmatprep.subr.mxu0 0.0
    %1795 = vmatpush1.msra.mxu0 0.0
    %1796 = vmatprep.subr.mxu0 0.0
    %1797 = vmatpush1.msra.mxu0 0.0
    %1798 = vmatprep.subr.mxu0 0.0
    %1799 = vmatpush1.msra.mxu0 0.0
    %1800 = vmatprep.subr.mxu0 0.0
    %1801 = vmatpush1.msra.mxu0 0.0
    %1802 = vmatprep.subr.mxu0 0.0
    %1803 = vmatpush1.msra.mxu0 0.0
    %1804 = vmatprep.subr.mxu0 0.0
    %1805 = vmatpush1.msra.mxu0 0.0
    %1806 = vmatprep.subr.mxu0 0.0
    %1807 = vmatpush1.msra.mxu0 0.0
    %1808 = vmatprep.subr.mxu0 0.0
    %1809 = vmatpush1.msra.mxu0 0.0
    %1810 = vmatprep.subr.mxu0 0.0
    %1811 = vmatpush1.msra.mxu0 0.0
    %1812 = vmatprep.subr.mxu0 0.0
    %1813 = vmatpush1.msra.mxu0 0.0
    %1814 = vmatprep.subr.mxu0 0.0
    %1815 = vmatpush1.msra.mxu0 0.0
    %1816 = vmatprep.subr.mxu0 0.0
    %1817 = vmatpush1.msra.mxu0 0.0
    %1818 = vmatprep.subr.mxu0 0.0
    %1819 = vmatpush1.msra.mxu0 %v1787
    %1820 = vmatprep.subr.mxu0 0.0
    %1821 = vmatpush2.msra.mxu0 0.0
    %1822 = vmatprep.subr.mxu0 0.0
    %1823 = vmatpush2.msra.mxu0 0.0
    %1824 = vmatprep.subr.mxu0 0.0
    %1825 = vmatpush2.msra.mxu0 0.0
    %1826 = vmatprep.subr.mxu0 0.0
    %1827 = vmatpush2.msra.mxu0 0.0
    %1828 = vmatprep.subr.mxu0 0.0
    %1829 = vmatpush2.msra.mxu0 0.0
    %1830 = vmatprep.subr.mxu0 0.0
    %1831 = vmatpush2.msra.mxu0 0.0
    %1832 = vmatprep.subr.mxu0 0.0
    %1833 = vmatpush2.msra.mxu0 0.0
    %1834 = vmatprep.subr.mxu0 0.0
    %1835 = vmatpush2.msra.mxu0 0.0
    %1836 = vmatprep.subr.mxu0 0.0
    %1837 = vmatpush2.msra.mxu0 0.0
    %1838 = vmatprep.subr.mxu0 0.0
    %1839 = vmatpush2.msra.mxu0 0.0
    %1840 = vmatprep.subr.mxu0 0.0
    %1841 = vmatpush2.msra.mxu0 0.0
    %1842 = vmatprep.subr.mxu0 0.0
    %1843 = vmatpush2.msra.mxu0 0.0
    %1844 = vmatprep.subr.mxu0 0.0
    %1845 = vmatpush2.msra.mxu0 0.0
    %1846 = vmatprep.subr.mxu0 0.0
    %1847 = vmatpush2.msra.mxu0 0.0
    %1848 = vmatprep.subr.mxu0 0.0
    %1849 = vmatpush2.msra.mxu0 0.0
    %1850 = vmatprep.subr.mxu0 0.0
    %1851 = vmatpush2.msra.mxu0 0.0
    %1852 = vmatprep.mubr.f32.mxu0 0.0
    %1853 = vmatmul.mubr.f32.gmra.mxu0 %v363
    %v1854 = vpop.f32.mrf.mxu0
    %v1855 = vadd.f32 0.0, %v1854
    %v1856 = vpop.f32.mrf.mxu0
    %1857 = vdwg.mxu0
    %1858 = vmatprep.subr.mxu0 0.0
    %1859 = vmatpush1.msra.mxu0 0.0
    %1860 = vmatprep.subr.mxu0 0.0
    %1861 = vmatpush1.msra.mxu0 0.0
    %1862 = vmatprep.subr.mxu0 0.0
    %1863 = vmatpush1.msra.mxu0 0.0
    %1864 = vmatprep.subr.mxu0 0.0
    %1865 = vmatpush1.msra.mxu0 0.0
    %1866 = vmatprep.subr.mxu0 0.0
    %1867 = vmatpush1.msra.mxu0 0.0
    %1868 = vmatprep.subr.mxu0 0.0
    %1869 = vmatpush1.msra.mxu0 0.0
    %1870 = vmatprep.subr.mxu0 0.0
    %1871 = vmatpush1.msra.mxu0 0.0
    %1872 = vmatprep.subr.mxu0 0.0
    %1873 = vmatpush1.msra.mxu0 0.0
    %1874 = vmatprep.subr.mxu0 0.0
    %1875 = vmatpush1.msra.mxu0 0.0
    %1876 = vmatprep.subr.mxu0 0.0
    %1877 = vmatpush1.msra.mxu0 0.0
    %1878 = vmatprep.subr.mxu0 0.0
    %1879 = vmatpush1.msra.mxu0 0.0
    %1880 = vmatprep.subr.mxu0 0.0
    %1881 = vmatpush1.msra.mxu0 0.0
    %1882 = vmatprep.subr.mxu0 0.0
    %1883 = vmatpush1.msra.mxu0 0.0
    %1884 = vmatprep.subr.mxu0 0.0
    %1885 = vmatpush1.msra.mxu0 0.0
    %1886 = vmatprep.subr.mxu0 0.0
    %1887 = vmatpush1.msra.mxu0 0.0
    %1888 = vmatprep.subr.mxu0 0.0
    %1889 = vmatpush1.msra.mxu0 %v1622
    %1890 = vmatprep.subr.mxu0 0.0
    %1891 = vmatpush2.msra.mxu0 0.0
    %1892 = vmatprep.subr.mxu0 0.0
    %1893 = vmatpush2.msra.mxu0 0.0
    %1894 = vmatprep.subr.mxu0 0.0
    %1895 = vmatpush2.msra.mxu0 0.0
    %1896 = vmatprep.subr.mxu0 0.0
    %1897 = vmatpush2.msra.mxu0 0.0
    %1898 = vmatprep.subr.mxu0 0.0
    %1899 = vmatpush2.msra.mxu0 0.0
    %1900 = vmatprep.subr.mxu0 0.0
    %1901 = vmatpush2.msra.mxu0 0.0
    %1902 = vmatprep.subr.mxu0 0.0
    %1903 = vmatpush2.msra.mxu0 0.0
    %1904 = vmatprep.subr.mxu0 0.0
    %1905 = vmatpush2.msra.mxu0 0.0
    %1906 = vmatprep.subr.mxu0 0.0
    %1907 = vmatpush2.msra.mxu0 0.0
    %1908 = vmatprep.subr.mxu0 0.0
    %1909 = vmatpush2.msra.mxu0 0.0
    %1910 = vmatprep.subr.mxu0 0.0
    %1911 = vmatpush2.msra.mxu0 0.0
    %1912 = vmatprep.subr.mxu0 0.0
    %1913 = vmatpush2.msra.mxu0 0.0
    %1914 = vmatprep.subr.mxu0 0.0
    %1915 = vmatpush2.msra.mxu0 0.0
    %1916 = vmatprep.subr.mxu0 0.0
    %1917 = vmatpush2.msra.mxu0 0.0
    %1918 = vmatprep.subr.mxu0 0.0
    %1919 = vmatpush2.msra.mxu0 0.0
    %1920 = vmatprep.subr.mxu0 0.0
    %1921 = vmatpush2.msra.mxu0 0.0
    %1922 = vmatprep.mubr.f32.mxu0 0.0
    %1923 = vmatmul.mubr.f32.gmra.mxu0 %v436
    %v1924 = vpop.f32.mrf.mxu0
    %v1925 = vadd.f32 %v1855, %v1924
    %v1926 = vpop.f32.mrf.mxu0
    %1927 = vdwg.mxu0
    %v1928 = vld [vmem:[#allocation2 + $0x1c0] sm:$0xff]
    %v1929 = vld [vmem:[#allocation2 + $0x1c8] sm:$0xff]
    %v1930 = vld [vmem:[#allocation2 + $0x1d0] sm:$0xff]
    %v1931 = vld [vmem:[#allocation2 + $0x1d8] sm:$0xff]
    %v1932 = vld [vmem:[#allocation2 + $0x250] sm:$0x1]
    %v1933 = vlaneseq
    %v1934 = vshrl.u32 %v1933, 7
    %v1935 = vsub.s32 0, %v1934
    %v1936 = vrot.slane %v1932, %v1935
    %1937 = vmatprep.subr.mxu0 0.0
    %1938 = vmatpush1.msra.mxu0 0.0
    %1939 = vmatprep.subr.mxu0 0.0
    %1940 = vmatpush1.msra.mxu0 0.0
    %1941 = vmatprep.subr.mxu0 0.0
    %1942 = vmatpush1.msra.mxu0 0.0
    %1943 = vmatprep.subr.mxu0 0.0
    %1944 = vmatpush1.msra.mxu0 0.0
    %1945 = vmatprep.subr.mxu0 0.0
    %1946 = vmatpush1.msra.mxu0 0.0
    %1947 = vmatprep.subr.mxu0 0.0
    %1948 = vmatpush1.msra.mxu0 0.0
    %1949 = vmatprep.subr.mxu0 0.0
    %1950 = vmatpush1.msra.mxu0 0.0
    %1951 = vmatprep.subr.mxu0 0.0
    %1952 = vmatpush1.msra.mxu0 0.0
    %1953 = vmatprep.subr.mxu0 0.0
    %1954 = vmatpush1.msra.mxu0 0.0
    %1955 = vmatprep.subr.mxu0 0.0
    %1956 = vmatpush1.msra.mxu0 0.0
    %1957 = vmatprep.subr.mxu0 0.0
    %1958 = vmatpush1.msra.mxu0 0.0
    %1959 = vmatprep.subr.mxu0 0.0
    %1960 = vmatpush1.msra.mxu0 0.0
    %1961 = vmatprep.subr.mxu0 0.0
    %1962 = vmatpush1.msra.mxu0 %v1931
    %1963 = vmatprep.subr.mxu0 0.0
    %1964 = vmatpush1.msra.mxu0 %v1930
    %1965 = vmatprep.subr.mxu0 0.0
    %1966 = vmatpush1.msra.mxu0 %v1929
    %1967 = vmatprep.subr.mxu0 0.0
    %1968 = vmatpush1.msra.mxu0 %v1928
    %1969 = vmatprep.subr.mxu0 0.0
    %1970 = vmatpush2.msra.mxu0 0.0
    %1971 = vmatprep.subr.mxu0 0.0
    %1972 = vmatpush2.msra.mxu0 0.0
    %1973 = vmatprep.subr.mxu0 0.0
    %1974 = vmatpush2.msra.mxu0 0.0
    %1975 = vmatprep.subr.mxu0 0.0
    %1976 = vmatpush2.msra.mxu0 0.0
    %1977 = vmatprep.subr.mxu0 0.0
    %1978 = vmatpush2.msra.mxu0 0.0
    %1979 = vmatprep.subr.mxu0 0.0
    %1980 = vmatpush2.msra.mxu0 0.0
    %1981 = vmatprep.subr.mxu0 0.0
    %1982 = vmatpush2.msra.mxu0 0.0
    %1983 = vmatprep.subr.mxu0 0.0
    %1984 = vmatpush2.msra.mxu0 0.0
    %1985 = vmatprep.subr.mxu0 0.0
    %1986 = vmatpush2.msra.mxu0 0.0
    %1987 = vmatprep.subr.mxu0 0.0
    %1988 = vmatpush2.msra.mxu0 0.0
    %1989 = vmatprep.subr.mxu0 0.0
    %1990 = vmatpush2.msra.mxu0 0.0
    %1991 = vmatprep.subr.mxu0 0.0
    %1992 = vmatpush2.msra.mxu0 0.0
    %1993 = vmatprep.subr.mxu0 0.0
    %1994 = vmatpush2.msra.mxu0 0.0
    %1995 = vmatprep.subr.mxu0 0.0
    %1996 = vmatpush2.msra.mxu0 0.0
    %1997 = vmatprep.subr.mxu0 0.0
    %1998 = vmatpush2.msra.mxu0 0.0
    %1999 = vmatprep.subr.mxu0 0.0
    %2000 = vmatpush2.msra.mxu0 0.0
    %2001 = vmatprep.mubr.f32.mxu0 0.0
    %2002 = vmatmul.mubr.f32.gmra.mxu0 %v1465
    %v2003 = vpop.f32.mrf.mxu0
    %v2004 = vadd.f32 %v1936, %v2003
    %v2005 = vpop.f32.mrf.mxu0
    %2006 = vdwg.mxu0
    %v2007 = vld [vmem:[#allocation2 + $0x220] sm:$0xff]
    %v2008 = vld [vmem:[#allocation2 + $0x228] sm:$0xff]
    %v2009 = vld [vmem:[#allocation2 + $0x230] sm:$0xff]
    %v2010 = vld [vmem:[#allocation2 + $0x238] sm:$0xff]
    %v2011 = vld [vmem:[#allocation2 + $0x268] sm:$0x1]
    %v2012 = vlaneseq
    %v2013 = vshrl.u32 %v2012, 7
    %v2014 = vsub.s32 0, %v2013
    %v2015 = vrot.slane %v2011, %v2014
    %2016 = vmatprep.subr.mxu0 0.0
    %2017 = vmatpush1.msra.mxu0 0.0
    %2018 = vmatprep.subr.mxu0 0.0
    %2019 = vmatpush1.msra.mxu0 0.0
    %2020 = vmatprep.subr.mxu0 0.0
    %2021 = vmatpush1.msra.mxu0 0.0
    %2022 = vmatprep.subr.mxu0 0.0
    %2023 = vmatpush1.msra.mxu0 0.0
    %2024 = vmatprep.subr.mxu0 0.0
    %2025 = vmatpush1.msra.mxu0 0.0
    %2026 = vmatprep.subr.mxu0 0.0
    %2027 = vmatpush1.msra.mxu0 0.0
    %2028 = vmatprep.subr.mxu0 0.0
    %2029 = vmatpush1.msra.mxu0 0.0
    %2030 = vmatprep.subr.mxu0 0.0
    %2031 = vmatpush1.msra.mxu0 0.0
    %2032 = vmatprep.subr.mxu0 0.0
    %2033 = vmatpush1.msra.mxu0 0.0
    %2034 = vmatprep.subr.mxu0 0.0
    %2035 = vmatpush1.msra.mxu0 0.0
    %2036 = vmatprep.subr.mxu0 0.0
    %2037 = vmatpush1.msra.mxu0 0.0
    %2038 = vmatprep.subr.mxu0 0.0
    %2039 = vmatpush1.msra.mxu0 0.0
    %2040 = vmatprep.subr.mxu0 0.0
    %2041 = vmatpush1.msra.mxu0 %v2010
    %2042 = vmatprep.subr.mxu0 0.0
    %2043 = vmatpush1.msra.mxu0 %v2009
    %2044 = vmatprep.subr.mxu0 0.0
    %2045 = vmatpush1.msra.mxu0 %v2008
    %2046 = vmatprep.subr.mxu0 0.0
    %2047 = vmatpush1.msra.mxu0 %v2007
    %2048 = vmatprep.subr.mxu0 0.0
    %2049 = vmatpush2.msra.mxu0 0.0
    %2050 = vmatprep.subr.mxu0 0.0
    %2051 = vmatpush2.msra.mxu0 0.0
    %2052 = vmatprep.subr.mxu0 0.0
    %2053 = vmatpush2.msra.mxu0 0.0
    %2054 = vmatprep.subr.mxu0 0.0
    %2055 = vmatpush2.msra.mxu0 0.0
    %2056 = vmatprep.subr.mxu0 0.0
    %2057 = vmatpush2.msra.mxu0 0.0
    %2058 = vmatprep.subr.mxu0 0.0
    %2059 = vmatpush2.msra.mxu0 0.0
    %2060 = vmatprep.subr.mxu0 0.0
    %2061 = vmatpush2.msra.mxu0 0.0
    %2062 = vmatprep.subr.mxu0 0.0
    %2063 = vmatpush2.msra.mxu0 0.0
    %2064 = vmatprep.subr.mxu0 0.0
    %2065 = vmatpush2.msra.mxu0 0.0
    %2066 = vmatprep.subr.mxu0 0.0
    %2067 = vmatpush2.msra.mxu0 0.0
    %2068 = vmatprep.subr.mxu0 0.0
    %2069 = vmatpush2.msra.mxu0 0.0
    %2070 = vmatprep.subr.mxu0 0.0
    %2071 = vmatpush2.msra.mxu0 0.0
    %2072 = vmatprep.subr.mxu0 0.0
    %2073 = vmatpush2.msra.mxu0 0.0
    %2074 = vmatprep.subr.mxu0 0.0
    %2075 = vmatpush2.msra.mxu0 0.0
    %2076 = vmatprep.subr.mxu0 0.0
    %2077 = vmatpush2.msra.mxu0 0.0
    %2078 = vmatprep.subr.mxu0 0.0
    %2079 = vmatpush2.msra.mxu0 0.0
    %2080 = vmatprep.mubr.f32.mxu0 0.0
    %2081 = vmatmul.mubr.f32.gmra.mxu0 %v1465
    %v2082 = vpop.f32.mrf.mxu0
    %v2083 = vadd.f32 %v2015, %v2082
    %v2084 = vpop.f32.mrf.mxu0
    %2085 = vdwg.mxu0
    %v2086 = vxor.u32 %v2083, 2147483648
    %v2087 = vmul.f32 %v2086, 1.442695
    %v2088 = vpow.pop %v2087
    %v2089 = vadd.f32 %v2088, 1.0
    %v2090 = vrcp.pop %v2089
    %v2091 = vmul.f32 1.0, %v2090
    %v2092 = vmul.f32 %v2091, %v2004
    %2093 = vmatprep.subr.mxu0 0.0
    %2094 = vmatpush1.msra.mxu0 0.0
    %2095 = vmatprep.subr.mxu0 0.0
    %2096 = vmatpush1.msra.mxu0 0.0
    %2097 = vmatprep.subr.mxu0 0.0
    %2098 = vmatpush1.msra.mxu0 0.0
    %2099 = vmatprep.subr.mxu0 0.0
    %2100 = vmatpush1.msra.mxu0 0.0
    %2101 = vmatprep.subr.mxu0 0.0
    %2102 = vmatpush1.msra.mxu0 0.0
    %2103 = vmatprep.subr.mxu0 0.0
    %2104 = vmatpush1.msra.mxu0 0.0
    %2105 = vmatprep.subr.mxu0 0.0
    %2106 = vmatpush1.msra.mxu0 0.0
    %2107 = vmatprep.subr.mxu0 0.0
    %2108 = vmatpush1.msra.mxu0 0.0
    %2109 = vmatprep.subr.mxu0 0.0
    %2110 = vmatpush1.msra.mxu0 0.0
    %2111 = vmatprep.subr.mxu0 0.0
    %2112 = vmatpush1.msra.mxu0 0.0
    %2113 = vmatprep.subr.mxu0 0.0
    %2114 = vmatpush1.msra.mxu0 0.0
    %2115 = vmatprep.subr.mxu0 0.0
    %2116 = vmatpush1.msra.mxu0 0.0
    %2117 = vmatprep.subr.mxu0 0.0
    %2118 = vmatpush1.msra.mxu0 0.0
    %2119 = vmatprep.subr.mxu0 0.0
    %2120 = vmatpush1.msra.mxu0 0.0
    %2121 = vmatprep.subr.mxu0 0.0
    %2122 = vmatpush1.msra.mxu0 0.0
    %2123 = vmatprep.subr.mxu0 0.0
    %2124 = vmatpush1.msra.mxu0 %v2092
    %2125 = vmatprep.subr.mxu0 0.0
    %2126 = vmatpush2.msra.mxu0 0.0
    %2127 = vmatprep.subr.mxu0 0.0
    %2128 = vmatpush2.msra.mxu0 0.0
    %2129 = vmatprep.subr.mxu0 0.0
    %2130 = vmatpush2.msra.mxu0 0.0
    %2131 = vmatprep.subr.mxu0 0.0
    %2132 = vmatpush2.msra.mxu0 0.0
    %2133 = vmatprep.subr.mxu0 0.0
    %2134 = vmatpush2.msra.mxu0 0.0
    %2135 = vmatprep.subr.mxu0 0.0
    %2136 = vmatpush2.msra.mxu0 0.0
    %2137 = vmatprep.subr.mxu0 0.0
    %2138 = vmatpush2.msra.mxu0 0.0
    %2139 = vmatprep.subr.mxu0 0.0
    %2140 = vmatpush2.msra.mxu0 0.0
    %2141 = vmatprep.subr.mxu0 0.0
    %2142 = vmatpush2.msra.mxu0 0.0
    %2143 = vmatprep.subr.mxu0 0.0
    %2144 = vmatpush2.msra.mxu0 0.0
    %2145 = vmatprep.subr.mxu0 0.0
    %2146 = vmatpush2.msra.mxu0 0.0
    %2147 = vmatprep.subr.mxu0 0.0
    %2148 = vmatpush2.msra.mxu0 0.0
    %2149 = vmatprep.subr.mxu0 0.0
    %2150 = vmatpush2.msra.mxu0 0.0
    %2151 = vmatprep.subr.mxu0 0.0
    %2152 = vmatpush2.msra.mxu0 0.0
    %2153 = vmatprep.subr.mxu0 0.0
    %2154 = vmatpush2.msra.mxu0 0.0
    %2155 = vmatprep.subr.mxu0 0.0
    %2156 = vmatpush2.msra.mxu0 0.0
    %2157 = vmatprep.mubr.f32.mxu0 0.0
    %2158 = vmatmul.mubr.f32.gmra.mxu0 %v670
    %v2159 = vpop.f32.mrf.mxu0
    %v2160 = vadd.f32 0.0, %v2159
    %v2161 = vpop.f32.mrf.mxu0
    %2162 = vdwg.mxu0
    %v2163 = vadd.f32 %v1925, %v2160
    %v2164 = vmax.f32 %v2163, 0.0
    %v2165 = vld [vmem:[%s1 + $0x8] sm:$0x1]
    %v2166 = vld [vmem:[%s1 + $0x10] sm:$0x1]
    %v2167 = vld [vmem:[#allocation2 + $0x370] sm:$0xff]
    %v2168 = vld [vmem:[#allocation2 + $0x378] sm:$0xff]
    %v2169 = vld [vmem:[#allocation2 + $0x380] sm:$0xff]
    %v2170 = vld [vmem:[#allocation2 + $0x388] sm:$0xff]
    %v2172 = vsel %vm42, %v2166, 0
    %2174 = vmatprep.subr.mxu0 0.0
    %2175 = vmatpush1.msra.mxu0 0.0
    %2176 = vmatprep.subr.mxu0 0.0
    %2177 = vmatpush1.msra.mxu0 0.0
    %2178 = vmatprep.subr.mxu0 0.0
    %2179 = vmatpush1.msra.mxu0 0.0
    %2180 = vmatprep.subr.mxu0 0.0
    %2181 = vmatpush1.msra.mxu0 0.0
    %2182 = vmatprep.subr.mxu0 0.0
    %2183 = vmatpush1.msra.mxu0 0.0
    %2184 = vmatprep.subr.mxu0 0.0
    %2185 = vmatpush1.msra.mxu0 0.0
    %2186 = vmatprep.subr.mxu0 0.0
    %2187 = vmatpush1.msra.mxu0 0.0
    %2188 = vmatprep.subr.mxu0 0.0
    %2189 = vmatpush1.msra.mxu0 0.0
    %2190 = vmatprep.subr.mxu0 0.0
    %2191 = vmatpush1.msra.mxu0 0.0
    %2192 = vmatprep.subr.mxu0 0.0
    %2193 = vmatpush1.msra.mxu0 0.0
    %2194 = vmatprep.subr.mxu0 0.0
    %2195 = vmatpush1.msra.mxu0 0.0
    %2196 = vmatprep.subr.mxu0 0.0
    %2197 = vmatpush1.msra.mxu0 0.0
    %2198 = vmatprep.subr.mxu0 0.0
    %2199 = vmatpush1.msra.mxu0 0.0
    %2200 = vmatprep.subr.mxu0 0.0
    %2201 = vmatpush1.msra.mxu0 0.0
    %2202 = vmatprep.subr.mxu0 0.0
    %2203 = vmatpush1.msra.mxu0 %v2170
    %2204 = vmatprep.subr.mxu0 0.0
    %2205 = vmatpush1.msra.mxu0 %v2169
    %2206 = vmatprep.subr.mxu0 0.0
    %2207 = vmatpush2.msra.mxu0 0.0
    %2208 = vmatprep.subr.mxu0 0.0
    %2209 = vmatpush2.msra.mxu0 0.0
    %2210 = vmatprep.subr.mxu0 0.0
    %2211 = vmatpush2.msra.mxu0 0.0
    %2212 = vmatprep.subr.mxu0 0.0
    %2213 = vmatpush2.msra.mxu0 0.0
    %2214 = vmatprep.subr.mxu0 0.0
    %2215 = vmatpush2.msra.mxu0 0.0
    %2216 = vmatprep.subr.mxu0 0.0
    %2217 = vmatpush2.msra.mxu0 0.0
    %2218 = vmatprep.subr.mxu0 0.0
    %2219 = vmatpush2.msra.mxu0 0.0
    %2220 = vmatprep.subr.mxu0 0.0
    %2221 = vmatpush2.msra.mxu0 0.0
    %2222 = vmatprep.subr.mxu0 0.0
    %2223 = vmatpush2.msra.mxu0 0.0
    %2224 = vmatprep.subr.mxu0 0.0
    %2225 = vmatpush2.msra.mxu0 0.0
    %2226 = vmatprep.subr.mxu0 0.0
    %2227 = vmatpush2.msra.mxu0 0.0
    %2228 = vmatprep.subr.mxu0 0.0
    %2229 = vmatpush2.msra.mxu0 0.0
    %2230 = vmatprep.subr.mxu0 0.0
    %2231 = vmatpush2.msra.mxu0 0.0
    %2232 = vmatprep.subr.mxu0 0.0
    %2233 = vmatpush2.msra.mxu0 0.0
    %2234 = vmatprep.subr.mxu0 0.0
    %2235 = vmatpush2.msra.mxu0 0.0
    %2236 = vmatprep.subr.mxu0 0.0
    %2237 = vmatpush2.msra.mxu0 0.0
    %2238 = vmatprep.mubr.f32.mxu0 0.0
    %2239 = vmatmul.mubr.f32.gmra.mxu0 %v2172
    %v2240 = vpop.f32.mrf.mxu0
    %v2241 = vadd.f32 0.0, %v2240
    %v2242 = vpop.f32.mrf.mxu0
    %2243 = vdwg.mxu0
    %v2245 = vsel %vm42, %v2165, 0
    %2247 = vmatprep.subr.mxu0 0.0
    %2248 = vmatpush1.msra.mxu0 0.0
    %2249 = vmatprep.subr.mxu0 0.0
    %2250 = vmatpush1.msra.mxu0 0.0
    %2251 = vmatprep.subr.mxu0 0.0
    %2252 = vmatpush1.msra.mxu0 0.0
    %2253 = vmatprep.subr.mxu0 0.0
    %2254 = vmatpush1.msra.mxu0 0.0
    %2255 = vmatprep.subr.mxu0 0.0
    %2256 = vmatpush1.msra.mxu0 0.0
    %2257 = vmatprep.subr.mxu0 0.0
    %2258 = vmatpush1.msra.mxu0 0.0
    %2259 = vmatprep.subr.mxu0 0.0
    %2260 = vmatpush1.msra.mxu0 0.0
    %2261 = vmatprep.subr.mxu0 0.0
    %2262 = vmatpush1.msra.mxu0 0.0
    %2263 = vmatprep.subr.mxu0 0.0
    %2264 = vmatpush1.msra.mxu0 0.0
    %2265 = vmatprep.subr.mxu0 0.0
    %2266 = vmatpush1.msra.mxu0 0.0
    %2267 = vmatprep.subr.mxu0 0.0
    %2268 = vmatpush1.msra.mxu0 0.0
    %2269 = vmatprep.subr.mxu0 0.0
    %2270 = vmatpush1.msra.mxu0 0.0
    %2271 = vmatprep.subr.mxu0 0.0
    %2272 = vmatpush1.msra.mxu0 0.0
    %2273 = vmatprep.subr.mxu0 0.0
    %2274 = vmatpush1.msra.mxu0 0.0
    %2275 = vmatprep.subr.mxu0 0.0
    %2276 = vmatpush1.msra.mxu0 %v2168
    %2277 = vmatprep.subr.mxu0 0.0
    %2278 = vmatpush1.msra.mxu0 %v2167
    %2279 = vmatprep.subr.mxu0 0.0
    %2280 = vmatpush2.msra.mxu0 0.0
    %2281 = vmatprep.subr.mxu0 0.0
    %2282 = vmatpush2.msra.mxu0 0.0
    %2283 = vmatprep.subr.mxu0 0.0
    %2284 = vmatpush2.msra.mxu0 0.0
    %2285 = vmatprep.subr.mxu0 0.0
    %2286 = vmatpush2.msra.mxu0 0.0
    %2287 = vmatprep.subr.mxu0 0.0
    %2288 = vmatpush2.msra.mxu0 0.0
    %2289 = vmatprep.subr.mxu0 0.0
    %2290 = vmatpush2.msra.mxu0 0.0
    %2291 = vmatprep.subr.mxu0 0.0
    %2292 = vmatpush2.msra.mxu0 0.0
    %2293 = vmatprep.subr.mxu0 0.0
    %2294 = vmatpush2.msra.mxu0 0.0
    %2295 = vmatprep.subr.mxu0 0.0
    %2296 = vmatpush2.msra.mxu0 0.0
    %2297 = vmatprep.subr.mxu0 0.0
    %2298 = vmatpush2.msra.mxu0 0.0
    %2299 = vmatprep.subr.mxu0 0.0
    %2300 = vmatpush2.msra.mxu0 0.0
    %2301 = vmatprep.subr.mxu0 0.0
    %2302 = vmatpush2.msra.mxu0 0.0
    %2303 = vmatprep.subr.mxu0 0.0
    %2304 = vmatpush2.msra.mxu0 0.0
    %2305 = vmatprep.subr.mxu0 0.0
    %2306 = vmatpush2.msra.mxu0 0.0
    %2307 = vmatprep.subr.mxu0 0.0
    %2308 = vmatpush2.msra.mxu0 0.0
    %2309 = vmatprep.subr.mxu0 0.0
    %2310 = vmatpush2.msra.mxu0 0.0
    %2311 = vmatprep.mubr.f32.mxu0 0.0
    %2312 = vmatmul.mubr.f32.gmra.mxu0 %v2245
    %v2313 = vpop.f32.mrf.mxu0
    %v2314 = vadd.f32 %v2241, %v2313
    %v2315 = vpop.f32.mrf.mxu0
    %2316 = vdwg.mxu0
    %v2317 = vld [vmem:[#allocation2 + $0x390] sm:$0x1]
    %v2318 = vadd.f32 %v2314, %v2317
    %v2319 = vld [vmem:[#allocation2 + $0x270] sm:$0xff]
    %v2320 = vld [vmem:[#allocation2 + $0x278] sm:$0xff]
    %v2321 = vld [vmem:[#allocation2 + $0x280] sm:$0xff]
    %v2322 = vld [vmem:[#allocation2 + $0x288] sm:$0xff]
    %v2324 = vsel %vm753, %v2164, 0
    %2326 = vmatprep.subr.mxu0 0.0
    %2327 = vmatpush1.msra.mxu0 0.0
    %2328 = vmatprep.subr.mxu0 0.0
    %2329 = vmatpush1.msra.mxu0 0.0
    %2330 = vmatprep.subr.mxu0 0.0
    %2331 = vmatpush1.msra.mxu0 0.0
    %2332 = vmatprep.subr.mxu0 0.0
    %2333 = vmatpush1.msra.mxu0 0.0
    %2334 = vmatprep.subr.mxu0 0.0
    %2335 = vmatpush1.msra.mxu0 0.0
    %2336 = vmatprep.subr.mxu0 0.0
    %2337 = vmatpush1.msra.mxu0 0.0
    %2338 = vmatprep.subr.mxu0 0.0
    %2339 = vmatpush1.msra.mxu0 0.0
    %2340 = vmatprep.subr.mxu0 0.0
    %2341 = vmatpush1.msra.mxu0 0.0
    %2342 = vmatprep.subr.mxu0 0.0
    %2343 = vmatpush1.msra.mxu0 0.0
    %2344 = vmatprep.subr.mxu0 0.0
    %2345 = vmatpush1.msra.mxu0 0.0
    %2346 = vmatprep.subr.mxu0 0.0
    %2347 = vmatpush1.msra.mxu0 0.0
    %2348 = vmatprep.subr.mxu0 0.0
    %2349 = vmatpush1.msra.mxu0 0.0
    %2350 = vmatprep.subr.mxu0 0.0
    %2351 = vmatpush1.msra.mxu0 %v2322
    %2352 = vmatprep.subr.mxu0 0.0
    %2353 = vmatpush1.msra.mxu0 %v2321
    %2354 = vmatprep.subr.mxu0 0.0
    %2355 = vmatpush1.msra.mxu0 %v2320
    %2356 = vmatprep.subr.mxu0 0.0
    %2357 = vmatpush1.msra.mxu0 %v2319
    %2358 = vmatprep.subr.mxu0 0.0
    %2359 = vmatpush2.msra.mxu0 0.0
    %2360 = vmatprep.subr.mxu0 0.0
    %2361 = vmatpush2.msra.mxu0 0.0
    %2362 = vmatprep.subr.mxu0 0.0
    %2363 = vmatpush2.msra.mxu0 0.0
    %2364 = vmatprep.subr.mxu0 0.0
    %2365 = vmatpush2.msra.mxu0 0.0
    %2366 = vmatprep.subr.mxu0 0.0
    %2367 = vmatpush2.msra.mxu0 0.0
    %2368 = vmatprep.subr.mxu0 0.0
    %2369 = vmatpush2.msra.mxu0 0.0
    %2370 = vmatprep.subr.mxu0 0.0
    %2371 = vmatpush2.msra.mxu0 0.0
    %2372 = vmatprep.subr.mxu0 0.0
    %2373 = vmatpush2.msra.mxu0 0.0
    %2374 = vmatprep.subr.mxu0 0.0
    %2375 = vmatpush2.msra.mxu0 0.0
    %2376 = vmatprep.subr.mxu0 0.0
    %2377 = vmatpush2.msra.mxu0 0.0
    %2378 = vmatprep.subr.mxu0 0.0
    %2379 = vmatpush2.msra.mxu0 0.0
    %2380 = vmatprep.subr.mxu0 0.0
    %2381 = vmatpush2.msra.mxu0 0.0
    %2382 = vmatprep.subr.mxu0 0.0
    %2383 = vmatpush2.msra.mxu0 0.0
    %2384 = vmatprep.subr.mxu0 0.0
    %2385 = vmatpush2.msra.mxu0 0.0
    %2386 = vmatprep.subr.mxu0 0.0
    %2387 = vmatpush2.msra.mxu0 0.0
    %2388 = vmatprep.subr.mxu0 0.0
    %2389 = vmatpush2.msra.mxu0 0.0
    %2390 = vmatprep.mubr.f32.mxu0 0.0
    %2391 = vmatmul.mubr.f32.gmra.mxu0 %v2324
    %v2392 = vpop.f32.mrf.mxu0
    %v2393 = vadd.f32 0.0, %v2392
    %v2394 = vpop.f32.mrf.mxu0
    %2395 = vdwg.mxu0
    %v2396 = vadd.f32 %v2318, %v2393
    %v2397 = vld [vmem:[#allocation2 + $0x290] sm:$0xff]
    %v2398 = vld [vmem:[#allocation2 + $0x298] sm:$0xff]
    %v2399 = vld [vmem:[#allocation2 + $0x2a0] sm:$0xff]
    %v2400 = vld [vmem:[#allocation2 + $0x2a8] sm:$0xff]
    %v2401 = vrot.slane %v2164, 1
    %v2402 = vsel %vm753, %v2401, 0
    %2404 = vmatprep.subr.mxu0 0.0
    %2405 = vmatpush1.msra.mxu0 0.0
    %2406 = vmatprep.subr.mxu0 0.0
    %2407 = vmatpush1.msra.mxu0 0.0
    %2408 = vmatprep.subr.mxu0 0.0
    %2409 = vmatpush1.msra.mxu0 0.0
    %2410 = vmatprep.subr.mxu0 0.0
    %2411 = vmatpush1.msra.mxu0 0.0
    %2412 = vmatprep.subr.mxu0 0.0
    %2413 = vmatpush1.msra.mxu0 0.0
    %2414 = vmatprep.subr.mxu0 0.0
    %2415 = vmatpush1.msra.mxu0 0.0
    %2416 = vmatprep.subr.mxu0 0.0
    %2417 = vmatpush1.msra.mxu0 0.0
    %2418 = vmatprep.subr.mxu0 0.0
    %2419 = vmatpush1.msra.mxu0 0.0
    %2420 = vmatprep.subr.mxu0 0.0
    %2421 = vmatpush1.msra.mxu0 0.0
    %2422 = vmatprep.subr.mxu0 0.0
    %2423 = vmatpush1.msra.mxu0 0.0
    %2424 = vmatprep.subr.mxu0 0.0
    %2425 = vmatpush1.msra.mxu0 0.0
    %2426 = vmatprep.subr.mxu0 0.0
    %2427 = vmatpush1.msra.mxu0 0.0
    %2428 = vmatprep.subr.mxu0 0.0
    %2429 = vmatpush1.msra.mxu0 %v2400
    %2430 = vmatprep.subr.mxu0 0.0
    %2431 = vmatpush1.msra.mxu0 %v2399
    %2432 = vmatprep.subr.mxu0 0.0
    %2433 = vmatpush1.msra.mxu0 %v2398
    %2434 = vmatprep.subr.mxu0 0.0
    %2435 = vmatpush1.msra.mxu0 %v2397
    %2436 = vmatprep.subr.mxu0 0.0
    %2437 = vmatpush2.msra.mxu0 0.0
    %2438 = vmatprep.subr.mxu0 0.0
    %2439 = vmatpush2.msra.mxu0 0.0
    %2440 = vmatprep.subr.mxu0 0.0
    %2441 = vmatpush2.msra.mxu0 0.0
    %2442 = vmatprep.subr.mxu0 0.0
    %2443 = vmatpush2.msra.mxu0 0.0
    %2444 = vmatprep.subr.mxu0 0.0
    %2445 = vmatpush2.msra.mxu0 0.0
    %2446 = vmatprep.subr.mxu0 0.0
    %2447 = vmatpush2.msra.mxu0 0.0
    %2448 = vmatprep.subr.mxu0 0.0
    %2449 = vmatpush2.msra.mxu0 0.0
    %2450 = vmatprep.subr.mxu0 0.0
    %2451 = vmatpush2.msra.mxu0 0.0
    %2452 = vmatprep.subr.mxu0 0.0
    %2453 = vmatpush2.msra.mxu0 0.0
    %2454 = vmatprep.subr.mxu0 0.0
    %2455 = vmatpush2.msra.mxu0 0.0
    %2456 = vmatprep.subr.mxu0 0.0
    %2457 = vmatpush2.msra.mxu0 0.0
    %2458 = vmatprep.subr.mxu0 0.0
    %2459 = vmatpush2.msra.mxu0 0.0
    %2460 = vmatprep.subr.mxu0 0.0
    %2461 = vmatpush2.msra.mxu0 0.0
    %2462 = vmatprep.subr.mxu0 0.0
    %2463 = vmatpush2.msra.mxu0 0.0
    %2464 = vmatprep.subr.mxu0 0.0
    %2465 = vmatpush2.msra.mxu0 0.0
    %2466 = vmatprep.subr.mxu0 0.0
    %2467 = vmatpush2.msra.mxu0 0.0
    %2468 = vmatprep.mubr.f32.mxu0 0.0
    %2469 = vmatmul.mubr.f32.gmra.mxu0 %v2402
    %v2470 = vpop.f32.mrf.mxu0
    %v2471 = vadd.f32 0.0, %v2470
    %v2472 = vpop.f32.mrf.mxu0
    %2473 = vdwg.mxu0
    %v2474 = vadd.f32 %v2396, %v2471
    %v2475 = vld [vmem:[#allocation2 + $0x2b0] sm:$0xff]
    %v2476 = vld [vmem:[#allocation2 + $0x2b8] sm:$0xff]
    %v2477 = vld [vmem:[#allocation2 + $0x2c0] sm:$0xff]
    %v2478 = vld [vmem:[#allocation2 + $0x2c8] sm:$0xff]
    %v2479 = vrot.slane %v2164, 2
    %v2480 = vsel %vm753, %v2479, 0
    %2482 = vmatprep.subr.mxu0 0.0
    %2483 = vmatpush1.msra.mxu0 0.0
    %2484 = vmatprep.subr.mxu0 0.0
    %2485 = vmatpush1.msra.mxu0 0.0
    %2486 = vmatprep.subr.mxu0 0.0
    %2487 = vmatpush1.msra.mxu0 0.0
    %2488 = vmatprep.subr.mxu0 0.0
    %2489 = vmatpush1.msra.mxu0 0.0
    %2490 = vmatprep.subr.mxu0 0.0
    %2491 = vmatpush1.msra.mxu0 0.0
    %2492 = vmatprep.subr.mxu0 0.0
    %2493 = vmatpush1.msra.mxu0 0.0
    %2494 = vmatprep.subr.mxu0 0.0
    %2495 = vmatpush1.msra.mxu0 0.0
    %2496 = vmatprep.subr.mxu0 0.0
    %2497 = vmatpush1.msra.mxu0 0.0
    %2498 = vmatprep.subr.mxu0 0.0
    %2499 = vmatpush1.msra.mxu0 0.0
    %2500 = vmatprep.subr.mxu0 0.0
    %2501 = vmatpush1.msra.mxu0 0.0
    %2502 = vmatprep.subr.mxu0 0.0
    %2503 = vmatpush1.msra.mxu0 0.0
    %2504 = vmatprep.subr.mxu0 0.0
    %2505 = vmatpush1.msra.mxu0 0.0
    %2506 = vmatprep.subr.mxu0 0.0
    %2507 = vmatpush1.msra.mxu0 %v2478
    %2508 = vmatprep.subr.mxu0 0.0
    %2509 = vmatpush1.msra.mxu0 %v2477
    %2510 = vmatprep.subr.mxu0 0.0
    %2511 = vmatpush1.msra.mxu0 %v2476
    %2512 = vmatprep.subr.mxu0 0.0
    %2513 = vmatpush1.msra.mxu0 %v2475
    %2514 = vmatprep.subr.mxu0 0.0
    %2515 = vmatpush2.msra.mxu0 0.0
    %2516 = vmatprep.subr.mxu0 0.0
    %2517 = vmatpush2.msra.mxu0 0.0
    %2518 = vmatprep.subr.mxu0 0.0
    %2519 = vmatpush2.msra.mxu0 0.0
    %2520 = vmatprep.subr.mxu0 0.0
    %2521 = vmatpush2.msra.mxu0 0.0
    %2522 = vmatprep.subr.mxu0 0.0
    %2523 = vmatpush2.msra.mxu0 0.0
    %2524 = vmatprep.subr.mxu0 0.0
    %2525 = vmatpush2.msra.mxu0 0.0
    %2526 = vmatprep.subr.mxu0 0.0
    %2527 = vmatpush2.msra.mxu0 0.0
    %2528 = vmatprep.subr.mxu0 0.0
    %2529 = vmatpush2.msra.mxu0 0.0
    %2530 = vmatprep.subr.mxu0 0.0
    %2531 = vmatpush2.msra.mxu0 0.0
    %2532 = vmatprep.subr.mxu0 0.0
    %2533 = vmatpush2.msra.mxu0 0.0
    %2534 = vmatprep.subr.mxu0 0.0
    %2535 = vmatpush2.msra.mxu0 0.0
    %2536 = vmatprep.subr.mxu0 0.0
    %2537 = vmatpush2.msra.mxu0 0.0
    %2538 = vmatprep.subr.mxu0 0.0
    %2539 = vmatpush2.msra.mxu0 0.0
    %2540 = vmatprep.subr.mxu0 0.0
    %2541 = vmatpush2.msra.mxu0 0.0
    %2542 = vmatprep.subr.mxu0 0.0
    %2543 = vmatpush2.msra.mxu0 0.0
    %2544 = vmatprep.subr.mxu0 0.0
    %2545 = vmatpush2.msra.mxu0 0.0
    %2546 = vmatprep.mubr.f32.mxu0 0.0
    %2547 = vmatmul.mubr.f32.gmra.mxu0 %v2480
    %v2548 = vpop.f32.mrf.mxu0
    %v2549 = vadd.f32 0.0, %v2548
    %v2550 = vpop.f32.mrf.mxu0
    %2551 = vdwg.mxu0
    %v2552 = vadd.f32 %v2474, %v2549
    %v2553 = vld [vmem:[#allocation2 + $0x2d0] sm:$0xff]
    %v2554 = vld [vmem:[#allocation2 + $0x2d8] sm:$0xff]
    %v2555 = vld [vmem:[#allocation2 + $0x2e0] sm:$0xff]
    %v2556 = vld [vmem:[#allocation2 + $0x2e8] sm:$0xff]
    %v2557 = vrot.slane %v2164, 3
    %v2558 = vsel %vm753, %v2557, 0
    %2560 = vmatprep.subr.mxu0 0.0
    %2561 = vmatpush1.msra.mxu0 0.0
    %2562 = vmatprep.subr.mxu0 0.0
    %2563 = vmatpush1.msra.mxu0 0.0
    %2564 = vmatprep.subr.mxu0 0.0
    %2565 = vmatpush1.msra.mxu0 0.0
    %2566 = vmatprep.subr.mxu0 0.0
    %2567 = vmatpush1.msra.mxu0 0.0
    %2568 = vmatprep.subr.mxu0 0.0
    %2569 = vmatpush1.msra.mxu0 0.0
    %2570 = vmatprep.subr.mxu0 0.0
    %2571 = vmatpush1.msra.mxu0 0.0
    %2572 = vmatprep.subr.mxu0 0.0
    %2573 = vmatpush1.msra.mxu0 0.0
    %2574 = vmatprep.subr.mxu0 0.0
    %2575 = vmatpush1.msra.mxu0 0.0
    %2576 = vmatprep.subr.mxu0 0.0
    %2577 = vmatpush1.msra.mxu0 0.0
    %2578 = vmatprep.subr.mxu0 0.0
    %2579 = vmatpush1.msra.mxu0 0.0
    %2580 = vmatprep.subr.mxu0 0.0
    %2581 = vmatpush1.msra.mxu0 0.0
    %2582 = vmatprep.subr.mxu0 0.0
    %2583 = vmatpush1.msra.mxu0 0.0
    %2584 = vmatprep.subr.mxu0 0.0
    %2585 = vmatpush1.msra.mxu0 %v2556
    %2586 = vmatprep.subr.mxu0 0.0
    %2587 = vmatpush1.msra.mxu0 %v2555
    %2588 = vmatprep.subr.mxu0 0.0
    %2589 = vmatpush1.msra.mxu0 %v2554
    %2590 = vmatprep.subr.mxu0 0.0
    %2591 = vmatpush1.msra.mxu0 %v2553
    %2592 = vmatprep.subr.mxu0 0.0
    %2593 = vmatpush2.msra.mxu0 0.0
    %2594 = vmatprep.subr.mxu0 0.0
    %2595 = vmatpush2.msra.mxu0 0.0
    %2596 = vmatprep.subr.mxu0 0.0
    %2597 = vmatpush2.msra.mxu0 0.0
    %2598 = vmatprep.subr.mxu0 0.0
    %2599 = vmatpush2.msra.mxu0 0.0
    %2600 = vmatprep.subr.mxu0 0.0
    %2601 = vmatpush2.msra.mxu0 0.0
    %2602 = vmatprep.subr.mxu0 0.0
    %2603 = vmatpush2.msra.mxu0 0.0
    %2604 = vmatprep.subr.mxu0 0.0
    %2605 = vmatpush2.msra.mxu0 0.0
    %2606 = vmatprep.subr.mxu0 0.0
    %2607 = vmatpush2.msra.mxu0 0.0
    %2608 = vmatprep.subr.mxu0 0.0
    %2609 = vmatpush2.msra.mxu0 0.0
    %2610 = vmatprep.subr.mxu0 0.0
    %2611 = vmatpush2.msra.mxu0 0.0
    %2612 = vmatprep.subr.mxu0 0.0
    %2613 = vmatpush2.msra.mxu0 0.0
    %2614 = vmatprep.subr.mxu0 0.0
    %2615 = vmatpush2.msra.mxu0 0.0
    %2616 = vmatprep.subr.mxu0 0.0
    %2617 = vmatpush2.msra.mxu0 0.0
    %2618 = vmatprep.subr.mxu0 0.0
    %2619 = vmatpush2.msra.mxu0 0.0
    %2620 = vmatprep.subr.mxu0 0.0
    %2621 = vmatpush2.msra.mxu0 0.0
    %2622 = vmatprep.subr.mxu0 0.0
    %2623 = vmatpush2.msra.mxu0 0.0
    %2624 = vmatprep.mubr.f32.mxu0 0.0
    %2625 = vmatmul.mubr.f32.gmra.mxu0 %v2558
    %v2626 = vpop.f32.mrf.mxu0
    %v2627 = vadd.f32 0.0, %v2626
    %v2628 = vpop.f32.mrf.mxu0
    %2629 = vdwg.mxu0
    %v2630 = vadd.f32 %v2552, %v2627
    %v2631 = vld [vmem:[#allocation2 + $0x2f0] sm:$0xff]
    %v2632 = vld [vmem:[#allocation2 + $0x2f8] sm:$0xff]
    %v2633 = vld [vmem:[#allocation2 + $0x300] sm:$0xff]
    %v2634 = vld [vmem:[#allocation2 + $0x308] sm:$0xff]
    %v2635 = vrot.slane %v2164, 4
    %v2636 = vsel %vm753, %v2635, 0
    %2638 = vmatprep.subr.mxu0 0.0
    %2639 = vmatpush1.msra.mxu0 0.0
    %2640 = vmatprep.subr.mxu0 0.0
    %2641 = vmatpush1.msra.mxu0 0.0
    %2642 = vmatprep.subr.mxu0 0.0
    %2643 = vmatpush1.msra.mxu0 0.0
    %2644 = vmatprep.subr.mxu0 0.0
    %2645 = vmatpush1.msra.mxu0 0.0
    %2646 = vmatprep.subr.mxu0 0.0
    %2647 = vmatpush1.msra.mxu0 0.0
    %2648 = vmatprep.subr.mxu0 0.0
    %2649 = vmatpush1.msra.mxu0 0.0
    %2650 = vmatprep.subr.mxu0 0.0
    %2651 = vmatpush1.msra.mxu0 0.0
    %2652 = vmatprep.subr.mxu0 0.0
    %2653 = vmatpush1.msra.mxu0 0.0
    %2654 = vmatprep.subr.mxu0 0.0
    %2655 = vmatpush1.msra.mxu0 0.0
    %2656 = vmatprep.subr.mxu0 0.0
    %2657 = vmatpush1.msra.mxu0 0.0
    %2658 = vmatprep.subr.mxu0 0.0
    %2659 = vmatpush1.msra.mxu0 0.0
    %2660 = vmatprep.subr.mxu0 0.0
    %2661 = vmatpush1.msra.mxu0 0.0
    %2662 = vmatprep.subr.mxu0 0.0
    %2663 = vmatpush1.msra.mxu0 %v2634
    %2664 = vmatprep.subr.mxu0 0.0
    %2665 = vmatpush1.msra.mxu0 %v2633
    %2666 = vmatprep.subr.mxu0 0.0
    %2667 = vmatpush1.msra.mxu0 %v2632
    %2668 = vmatprep.subr.mxu0 0.0
    %2669 = vmatpush1.msra.mxu0 %v2631
    %2670 = vmatprep.subr.mxu0 0.0
    %2671 = vmatpush2.msra.mxu0 0.0
    %2672 = vmatprep.subr.mxu0 0.0
    %2673 = vmatpush2.msra.mxu0 0.0
    %2674 = vmatprep.subr.mxu0 0.0
    %2675 = vmatpush2.msra.mxu0 0.0
    %2676 = vmatprep.subr.mxu0 0.0
    %2677 = vmatpush2.msra.mxu0 0.0
    %2678 = vmatprep.subr.mxu0 0.0
    %2679 = vmatpush2.msra.mxu0 0.0
    %2680 = vmatprep.subr.mxu0 0.0
    %2681 = vmatpush2.msra.mxu0 0.0
    %2682 = vmatprep.subr.mxu0 0.0
    %2683 = vmatpush2.msra.mxu0 0.0
    %2684 = vmatprep.subr.mxu0 0.0
    %2685 = vmatpush2.msra.mxu0 0.0
    %2686 = vmatprep.subr.mxu0 0.0
    %2687 = vmatpush2.msra.mxu0 0.0
    %2688 = vmatprep.subr.mxu0 0.0
    %2689 = vmatpush2.msra.mxu0 0.0
    %2690 = vmatprep.subr.mxu0 0.0
    %2691 = vmatpush2.msra.mxu0 0.0
    %2692 = vmatprep.subr.mxu0 0.0
    %2693 = vmatpush2.msra.mxu0 0.0
    %2694 = vmatprep.subr.mxu0 0.0
    %2695 = vmatpush2.msra.mxu0 0.0
    %2696 = vmatprep.subr.mxu0 0.0
    %2697 = vmatpush2.msra.mxu0 0.0
    %2698 = vmatprep.subr.mxu0 0.0
    %2699 = vmatpush2.msra.mxu0 0.0
    %2700 = vmatprep.subr.mxu0 0.0
    %2701 = vmatpush2.msra.mxu0 0.0
    %2702 = vmatprep.mubr.f32.mxu0 0.0
    %2703 = vmatmul.mubr.f32.gmra.mxu0 %v2636
    %v2704 = vpop.f32.mrf.mxu0
    %v2705 = vadd.f32 0.0, %v2704
    %v2706 = vpop.f32.mrf.mxu0
    %2707 = vdwg.mxu0
    %v2708 = vadd.f32 %v2630, %v2705
    %v2709 = vld [vmem:[#allocation2 + $0x310] sm:$0xff]
    %v2710 = vld [vmem:[#allocation2 + $0x318] sm:$0xff]
    %v2711 = vld [vmem:[#allocation2 + $0x320] sm:$0xff]
    %v2712 = vld [vmem:[#allocation2 + $0x328] sm:$0xff]
    %v2713 = vrot.slane %v2164, 5
    %v2714 = vsel %vm753, %v2713, 0
    %2716 = vmatprep.subr.mxu0 0.0
    %2717 = vmatpush1.msra.mxu0 0.0
    %2718 = vmatprep.subr.mxu0 0.0
    %2719 = vmatpush1.msra.mxu0 0.0
    %2720 = vmatprep.subr.mxu0 0.0
    %2721 = vmatpush1.msra.mxu0 0.0
    %2722 = vmatprep.subr.mxu0 0.0
    %2723 = vmatpush1.msra.mxu0 0.0
    %2724 = vmatprep.subr.mxu0 0.0
    %2725 = vmatpush1.msra.mxu0 0.0
    %2726 = vmatprep.subr.mxu0 0.0
    %2727 = vmatpush1.msra.mxu0 0.0
    %2728 = vmatprep.subr.mxu0 0.0
    %2729 = vmatpush1.msra.mxu0 0.0
    %2730 = vmatprep.subr.mxu0 0.0
    %2731 = vmatpush1.msra.mxu0 0.0
    %2732 = vmatprep.subr.mxu0 0.0
    %2733 = vmatpush1.msra.mxu0 0.0
    %2734 = vmatprep.subr.mxu0 0.0
    %2735 = vmatpush1.msra.mxu0 0.0
    %2736 = vmatprep.subr.mxu0 0.0
    %2737 = vmatpush1.msra.mxu0 0.0
    %2738 = vmatprep.subr.mxu0 0.0
    %2739 = vmatpush1.msra.mxu0 0.0
    %2740 = vmatprep.subr.mxu0 0.0
    %2741 = vmatpush1.msra.mxu0 %v2712
    %2742 = vmatprep.subr.mxu0 0.0
    %2743 = vmatpush1.msra.mxu0 %v2711
    %2744 = vmatprep.subr.mxu0 0.0
    %2745 = vmatpush1.msra.mxu0 %v2710
    %2746 = vmatprep.subr.mxu0 0.0
    %2747 = vmatpush1.msra.mxu0 %v2709
    %2748 = vmatprep.subr.mxu0 0.0
    %2749 = vmatpush2.msra.mxu0 0.0
    %2750 = vmatprep.subr.mxu0 0.0
    %2751 = vmatpush2.msra.mxu0 0.0
    %2752 = vmatprep.subr.mxu0 0.0
    %2753 = vmatpush2.msra.mxu0 0.0
    %2754 = vmatprep.subr.mxu0 0.0
    %2755 = vmatpush2.msra.mxu0 0.0
    %2756 = vmatprep.subr.mxu0 0.0
    %2757 = vmatpush2.msra.mxu0 0.0
    %2758 = vmatprep.subr.mxu0 0.0
    %2759 = vmatpush2.msra.mxu0 0.0
    %2760 = vmatprep.subr.mxu0 0.0
    %2761 = vmatpush2.msra.mxu0 0.0
    %2762 = vmatprep.subr.mxu0 0.0
    %2763 = vmatpush2.msra.mxu0 0.0
    %2764 = vmatprep.subr.mxu0 0.0
    %2765 = vmatpush2.msra.mxu0 0.0
    %2766 = vmatprep.subr.mxu0 0.0
    %2767 = vmatpush2.msra.mxu0 0.0
    %2768 = vmatprep.subr.mxu0 0.0
    %2769 = vmatpush2.msra.mxu0 0.0
    %2770 = vmatprep.subr.mxu0 0.0
    %2771 = vmatpush2.msra.mxu0 0.0
    %2772 = vmatprep.subr.mxu0 0.0
    %2773 = vmatpush2.msra.mxu0 0.0
    %2774 = vmatprep.subr.mxu0 0.0
    %2775 = vmatpush2.msra.mxu0 0.0
    %2776 = vmatprep.subr.mxu0 0.0
    %2777 = vmatpush2.msra.mxu0 0.0
    %2778 = vmatprep.subr.mxu0 0.0
    %2779 = vmatpush2.msra.mxu0 0.0
    %2780 = vmatprep.mubr.f32.mxu0 0.0
    %2781 = vmatmul.mubr.f32.gmra.mxu0 %v2714
    %v2782 = vpop.f32.mrf.mxu0
    %v2783 = vadd.f32 0.0, %v2782
    %v2784 = vpop.f32.mrf.mxu0
    %2785 = vdwg.mxu0
    %v2786 = vadd.f32 %v2708, %v2783
    %v2787 = vld [vmem:[#allocation2 + $0x330] sm:$0xff]
    %v2788 = vld [vmem:[#allocation2 + $0x338] sm:$0xff]
    %v2789 = vld [vmem:[#allocation2 + $0x340] sm:$0xff]
    %v2790 = vld [vmem:[#allocation2 + $0x348] sm:$0xff]
    %v2791 = vrot.slane %v2164, 6
    %v2792 = vsel %vm753, %v2791, 0
    %2794 = vmatprep.subr.mxu0 0.0
    %2795 = vmatpush1.msra.mxu0 0.0
    %2796 = vmatprep.subr.mxu0 0.0
    %2797 = vmatpush1.msra.mxu0 0.0
    %2798 = vmatprep.subr.mxu0 0.0
    %2799 = vmatpush1.msra.mxu0 0.0
    %2800 = vmatprep.subr.mxu0 0.0
    %2801 = vmatpush1.msra.mxu0 0.0
    %2802 = vmatprep.subr.mxu0 0.0
    %2803 = vmatpush1.msra.mxu0 0.0
    %2804 = vmatprep.subr.mxu0 0.0
    %2805 = vmatpush1.msra.mxu0 0.0
    %2806 = vmatprep.subr.mxu0 0.0
    %2807 = vmatpush1.msra.mxu0 0.0
    %2808 = vmatprep.subr.mxu0 0.0
    %2809 = vmatpush1.msra.mxu0 0.0
    %2810 = vmatprep.subr.mxu0 0.0
    %2811 = vmatpush1.msra.mxu0 0.0
    %2812 = vmatprep.subr.mxu0 0.0
    %2813 = vmatpush1.msra.mxu0 0.0
    %2814 = vmatprep.subr.mxu0 0.0
    %2815 = vmatpush1.msra.mxu0 0.0
    %2816 = vmatprep.subr.mxu0 0.0
    %2817 = vmatpush1.msra.mxu0 0.0
    %2818 = vmatprep.subr.mxu0 0.0
    %2819 = vmatpush1.msra.mxu0 %v2790
    %2820 = vmatprep.subr.mxu0 0.0
    %2821 = vmatpush1.msra.mxu0 %v2789
    %2822 = vmatprep.subr.mxu0 0.0
    %2823 = vmatpush1.msra.mxu0 %v2788
    %2824 = vmatprep.subr.mxu0 0.0
    %2825 = vmatpush1.msra.mxu0 %v2787
    %2826 = vmatprep.subr.mxu0 0.0
    %2827 = vmatpush2.msra.mxu0 0.0
    %2828 = vmatprep.subr.mxu0 0.0
    %2829 = vmatpush2.msra.mxu0 0.0
    %2830 = vmatprep.subr.mxu0 0.0
    %2831 = vmatpush2.msra.mxu0 0.0
    %2832 = vmatprep.subr.mxu0 0.0
    %2833 = vmatpush2.msra.mxu0 0.0
    %2834 = vmatprep.subr.mxu0 0.0
    %2835 = vmatpush2.msra.mxu0 0.0
    %2836 = vmatprep.subr.mxu0 0.0
    %2837 = vmatpush2.msra.mxu0 0.0
    %2838 = vmatprep.subr.mxu0 0.0
    %2839 = vmatpush2.msra.mxu0 0.0
    %2840 = vmatprep.subr.mxu0 0.0
    %2841 = vmatpush2.msra.mxu0 0.0
    %2842 = vmatprep.subr.mxu0 0.0
    %2843 = vmatpush2.msra.mxu0 0.0
    %2844 = vmatprep.subr.mxu0 0.0
    %2845 = vmatpush2.msra.mxu0 0.0
    %2846 = vmatprep.subr.mxu0 0.0
    %2847 = vmatpush2.msra.mxu0 0.0
    %2848 = vmatprep.subr.mxu0 0.0
    %2849 = vmatpush2.msra.mxu0 0.0
    %2850 = vmatprep.subr.mxu0 0.0
    %2851 = vmatpush2.msra.mxu0 0.0
    %2852 = vmatprep.subr.mxu0 0.0
    %2853 = vmatpush2.msra.mxu0 0.0
    %2854 = vmatprep.subr.mxu0 0.0
    %2855 = vmatpush2.msra.mxu0 0.0
    %2856 = vmatprep.subr.mxu0 0.0
    %2857 = vmatpush2.msra.mxu0 0.0
    %2858 = vmatprep.mubr.f32.mxu0 0.0
    %2859 = vmatmul.mubr.f32.gmra.mxu0 %v2792
    %v2860 = vpop.f32.mrf.mxu0
    %v2861 = vadd.f32 0.0, %v2860
    %v2862 = vpop.f32.mrf.mxu0
    %2863 = vdwg.mxu0
    %v2864 = vadd.f32 %v2786, %v2861
    %v2865 = vld [vmem:[#allocation2 + $0x350] sm:$0xff]
    %v2866 = vld [vmem:[#allocation2 + $0x358] sm:$0xff]
    %v2867 = vld [vmem:[#allocation2 + $0x360] sm:$0xff]
    %v2868 = vld [vmem:[#allocation2 + $0x368] sm:$0xff]
    %v2869 = vrot.slane %v2164, 7
    %v2870 = vsel %vm753, %v2869, 0
    %2872 = vmatprep.subr.mxu0 0.0
    %2873 = vmatpush1.msra.mxu0 0.0
    %2874 = vmatprep.subr.mxu0 0.0
    %2875 = vmatpush1.msra.mxu0 0.0
    %2876 = vmatprep.subr.mxu0 0.0
    %2877 = vmatpush1.msra.mxu0 0.0
    %2878 = vmatprep.subr.mxu0 0.0
    %2879 = vmatpush1.msra.mxu0 0.0
    %2880 = vmatprep.subr.mxu0 0.0
    %2881 = vmatpush1.msra.mxu0 0.0
    %2882 = vmatprep.subr.mxu0 0.0
    %2883 = vmatpush1.msra.mxu0 0.0
    %2884 = vmatprep.subr.mxu0 0.0
    %2885 = vmatpush1.msra.mxu0 0.0
    %2886 = vmatprep.subr.mxu0 0.0
    %2887 = vmatpush1.msra.mxu0 0.0
    %2888 = vmatprep.subr.mxu0 0.0
    %2889 = vmatpush1.msra.mxu0 0.0
    %2890 = vmatprep.subr.mxu0 0.0
    %2891 = vmatpush1.msra.mxu0 0.0
    %2892 = vmatprep.subr.mxu0 0.0
    %2893 = vmatpush1.msra.mxu0 0.0
    %2894 = vmatprep.subr.mxu0 0.0
    %2895 = vmatpush1.msra.mxu0 0.0
    %2896 = vmatprep.subr.mxu0 0.0
    %2897 = vmatpush1.msra.mxu0 %v2868
    %2898 = vmatprep.subr.mxu0 0.0
    %2899 = vmatpush1.msra.mxu0 %v2867
    %2900 = vmatprep.subr.mxu0 0.0
    %2901 = vmatpush1.msra.mxu0 %v2866
    %2902 = vmatprep.subr.mxu0 0.0
    %2903 = vmatpush1.msra.mxu0 %v2865
    %2904 = vmatprep.subr.mxu0 0.0
    %2905 = vmatpush2.msra.mxu0 0.0
    %2906 = vmatprep.subr.mxu0 0.0
    %2907 = vmatpush2.msra.mxu0 0.0
    %2908 = vmatprep.subr.mxu0 0.0
    %2909 = vmatpush2.msra.mxu0 0.0
    %2910 = vmatprep.subr.mxu0 0.0
    %2911 = vmatpush2.msra.mxu0 0.0
    %2912 = vmatprep.subr.mxu0 0.0
    %2913 = vmatpush2.msra.mxu0 0.0
    %2914 = vmatprep.subr.mxu0 0.0
    %2915 = vmatpush2.msra.mxu0 0.0
    %2916 = vmatprep.subr.mxu0 0.0
    %2917 = vmatpush2.msra.mxu0 0.0
    %2918 = vmatprep.subr.mxu0 0.0
    %2919 = vmatpush2.msra.mxu0 0.0
    %2920 = vmatprep.subr.mxu0 0.0
    %2921 = vmatpush2.msra.mxu0 0.0
    %2922 = vmatprep.subr.mxu0 0.0
    %2923 = vmatpush2.msra.mxu0 0.0
    %2924 = vmatprep.subr.mxu0 0.0
    %2925 = vmatpush2.msra.mxu0 0.0
    %2926 = vmatprep.subr.mxu0 0.0
    %2927 = vmatpush2.msra.mxu0 0.0
    %2928 = vmatprep.subr.mxu0 0.0
    %2929 = vmatpush2.msra.mxu0 0.0
    %2930 = vmatprep.subr.mxu0 0.0
    %2931 = vmatpush2.msra.mxu0 0.0
    %2932 = vmatprep.subr.mxu0 0.0
    %2933 = vmatpush2.msra.mxu0 0.0
    %2934 = vmatprep.subr.mxu0 0.0
    %2935 = vmatpush2.msra.mxu0 0.0
    %2936 = vmatprep.mubr.f32.mxu0 0.0
    %2937 = vmatmul.mubr.f32.gmra.mxu0 %v2870
    %v2938 = vpop.f32.mrf.mxu0
    %v2939 = vadd.f32 0.0, %v2938
    %v2940 = vpop.f32.mrf.mxu0
    %2941 = vdwg.mxu0
    %v2942 = vadd.f32 %v2864, %v2939
    %v2943 = vmax.f32 %v2942, 0.0
    %v2944 = vld [vmem:[#allocation2 + $0x398] sm:$0xff]
    %v2945 = vld [vmem:[#allocation2 + $0x3a0] sm:$0xff]
    %v2946 = vld [vmem:[#allocation2 + $0x3a8] sm:$0xff]
    %v2947 = vld [vmem:[#allocation2 + $0x3b0] sm:$0xff]
    %v2948 = vld [vmem:[#allocation2 + $0x3b8] sm:$0x1]
    %v2950 = vsel %vm753, %v2943, 0
    %2952 = vmatprep.subr.mxu0 0.0
    %2953 = vmatpush1.msra.mxu0 0.0
    %2954 = vmatprep.subr.mxu0 0.0
    %2955 = vmatpush1.msra.mxu0 0.0
    %2956 = vmatprep.subr.mxu0 0.0
    %2957 = vmatpush1.msra.mxu0 0.0
    %2958 = vmatprep.subr.mxu0 0.0
    %2959 = vmatpush1.msra.mxu0 0.0
    %2960 = vmatprep.subr.mxu0 0.0
    %2961 = vmatpush1.msra.mxu0 0.0
    %2962 = vmatprep.subr.mxu0 0.0
    %2963 = vmatpush1.msra.mxu0 0.0
    %2964 = vmatprep.subr.mxu0 0.0
    %2965 = vmatpush1.msra.mxu0 0.0
    %2966 = vmatprep.subr.mxu0 0.0
    %2967 = vmatpush1.msra.mxu0 0.0
    %2968 = vmatprep.subr.mxu0 0.0
    %2969 = vmatpush1.msra.mxu0 0.0
    %2970 = vmatprep.subr.mxu0 0.0
    %2971 = vmatpush1.msra.mxu0 0.0
    %2972 = vmatprep.subr.mxu0 0.0
    %2973 = vmatpush1.msra.mxu0 0.0
    %2974 = vmatprep.subr.mxu0 0.0
    %2975 = vmatpush1.msra.mxu0 0.0
    %2976 = vmatprep.subr.mxu0 0.0
    %2977 = vmatpush1.msra.mxu0 %v2947
    %2978 = vmatprep.subr.mxu0 0.0
    %2979 = vmatpush1.msra.mxu0 %v2946
    %2980 = vmatprep.subr.mxu0 0.0
    %2981 = vmatpush1.msra.mxu0 %v2945
    %2982 = vmatprep.subr.mxu0 0.0
    %2983 = vmatpush1.msra.mxu0 %v2944
    %2984 = vmatprep.subr.mxu0 0.0
    %2985 = vmatpush2.msra.mxu0 0.0
    %2986 = vmatprep.subr.mxu0 0.0
    %2987 = vmatpush2.msra.mxu0 0.0
    %2988 = vmatprep.subr.mxu0 0.0
    %2989 = vmatpush2.msra.mxu0 0.0
    %2990 = vmatprep.subr.mxu0 0.0
    %2991 = vmatpush2.msra.mxu0 0.0
    %2992 = vmatprep.subr.mxu0 0.0
    %2993 = vmatpush2.msra.mxu0 0.0
    %2994 = vmatprep.subr.mxu0 0.0
    %2995 = vmatpush2.msra.mxu0 0.0
    %2996 = vmatprep.subr.mxu0 0.0
    %2997 = vmatpush2.msra.mxu0 0.0
    %2998 = vmatprep.subr.mxu0 0.0
    %2999 = vmatpush2.msra.mxu0 0.0
    %3000 = vmatprep.subr.mxu0 0.0
    %3001 = vmatpush2.msra.mxu0 0.0
    %3002 = vmatprep.subr.mxu0 0.0
    %3003 = vmatpush2.msra.mxu0 0.0
    %3004 = vmatprep.subr.mxu0 0.0
    %3005 = vmatpush2.msra.mxu0 0.0
    %3006 = vmatprep.subr.mxu0 0.0
    %3007 = vmatpush2.msra.mxu0 0.0
    %3008 = vmatprep.subr.mxu0 0.0
    %3009 = vmatpush2.msra.mxu0 0.0
    %3010 = vmatprep.subr.mxu0 0.0
    %3011 = vmatpush2.msra.mxu0 0.0
    %3012 = vmatprep.subr.mxu0 0.0
    %3013 = vmatpush2.msra.mxu0 0.0
    %3014 = vmatprep.subr.mxu0 0.0
    %3015 = vmatpush2.msra.mxu0 0.0
    %3016 = vmatprep.mubr.f32.mxu0 0.0
    %3017 = vmatmul.mubr.f32.gmra.mxu0 %v2950
    %v3018 = vpop.f32.mrf.mxu0
    %v3019 = vadd.f32 %v2948, %v3018
    %v3020 = vpop.f32.mrf.mxu0
    %3021 = vdwg.mxu0
    %v3022 = vmax.f32 %v3019, 0.0
    %v3023 = vld [vmem:[#allocation2 + $0x3c0] sm:$0xff]
    %v3024 = vld [vmem:[#allocation2 + $0x3c8] sm:$0xff]
    %v3025 = vld [vmem:[#allocation2 + $0x3d0] sm:$0xff]
    %v3026 = vld [vmem:[#allocation2 + $0x3d8] sm:$0xff]
    %v3027 = vld [vmem:[#allocation2 + $0x3e0] sm:$0x1]
    %v3029 = vsel %vm753, %v3022, 0
    %3031 = vmatprep.subr.mxu0 0.0
    %3032 = vmatpush1.msra.mxu0 0.0
    %3033 = vmatprep.subr.mxu0 0.0
    %3034 = vmatpush1.msra.mxu0 0.0
    %3035 = vmatprep.subr.mxu0 0.0
    %3036 = vmatpush1.msra.mxu0 0.0
    %3037 = vmatprep.subr.mxu0 0.0
    %3038 = vmatpush1.msra.mxu0 0.0
    %3039 = vmatprep.subr.mxu0 0.0
    %3040 = vmatpush1.msra.mxu0 0.0
    %3041 = vmatprep.subr.mxu0 0.0
    %3042 = vmatpush1.msra.mxu0 0.0
    %3043 = vmatprep.subr.mxu0 0.0
    %3044 = vmatpush1.msra.mxu0 0.0
    %3045 = vmatprep.subr.mxu0 0.0
    %3046 = vmatpush1.msra.mxu0 0.0
    %3047 = vmatprep.subr.mxu0 0.0
    %3048 = vmatpush1.msra.mxu0 0.0
    %3049 = vmatprep.subr.mxu0 0.0
    %3050 = vmatpush1.msra.mxu0 0.0
    %3051 = vmatprep.subr.mxu0 0.0
    %3052 = vmatpush1.msra.mxu0 0.0
    %3053 = vmatprep.subr.mxu0 0.0
    %3054 = vmatpush1.msra.mxu0 0.0
    %3055 = vmatprep.subr.mxu0 0.0
    %3056 = vmatpush1.msra.mxu0 %v3026
    %3057 = vmatprep.subr.mxu0 0.0
    %3058 = vmatpush1.msra.mxu0 %v3025
    %3059 = vmatprep.subr.mxu0 0.0
    %3060 = vmatpush1.msra.mxu0 %v3024
    %3061 = vmatprep.subr.mxu0 0.0
    %3062 = vmatpush1.msra.mxu0 %v3023
    %3063 = vmatprep.subr.mxu0 0.0
    %3064 = vmatpush2.msra.mxu0 0.0
    %3065 = vmatprep.subr.mxu0 0.0
    %3066 = vmatpush2.msra.mxu0 0.0
    %3067 = vmatprep.subr.mxu0 0.0
    %3068 = vmatpush2.msra.mxu0 0.0
    %3069 = vmatprep.subr.mxu0 0.0
    %3070 = vmatpush2.msra.mxu0 0.0
    %3071 = vmatprep.subr.mxu0 0.0
    %3072 = vmatpush2.msra.mxu0 0.0
    %3073 = vmatprep.subr.mxu0 0.0
    %3074 = vmatpush2.msra.mxu0 0.0
    %3075 = vmatprep.subr.mxu0 0.0
    %3076 = vmatpush2.msra.mxu0 0.0
    %3077 = vmatprep.subr.mxu0 0.0
    %3078 = vmatpush2.msra.mxu0 0.0
    %3079 = vmatprep.subr.mxu0 0.0
    %3080 = vmatpush2.msra.mxu0 0.0
    %3081 = vmatprep.subr.mxu0 0.0
    %3082 = vmatpush2.msra.mxu0 0.0
    %3083 = vmatprep.subr.mxu0 0.0
    %3084 = vmatpush2.msra.mxu0 0.0
    %3085 = vmatprep.subr.mxu0 0.0
    %3086 = vmatpush2.msra.mxu0 0.0
    %3087 = vmatprep.subr.mxu0 0.0
    %3088 = vmatpush2.msra.mxu0 0.0
    %3089 = vmatprep.subr.mxu0 0.0
    %3090 = vmatpush2.msra.mxu0 0.0
    %3091 = vmatprep.subr.mxu0 0.0
    %3092 = vmatpush2.msra.mxu0 0.0
    %3093 = vmatprep.subr.mxu0 0.0
    %3094 = vmatpush2.msra.mxu0 0.0
    %3095 = vmatprep.mubr.f32.mxu0 0.0
    %3096 = vmatmul.mubr.f32.gmra.mxu0 %v3029
    %v3097 = vpop.f32.mrf.mxu0
    %v3098 = vadd.f32 %v3027, %v3097
    %v3099 = vpop.f32.mrf.mxu0
    %3100 = vdwg.mxu0
    %v3101 = vxor.u32 %v3098, 2147483648
    %v3102 = vmul.f32 %v3101, 1.442695
    %v3103 = vpow.pop %v3102
    %v3104 = vadd.f32 %v3103, 1.0
    %v3105 = vrcp.pop %v3104
    %v3106 = vmul.f32 1.0, %v3105
    %vm3107 = vcmask 24576
    %3108 = vst.msk [vmem:[#allocation5] sm:$0x1] %vm3107, %v3106
    // Predicated region
    $region18: #{forward.1} parent=1 // pred_check
      _
    $region19: #{forward.1} parent=1 // pred_check_branch
      %3110 = sbr.rel (0) target = $region21
    $region20: #{forward.1} parent=1 // pred_region
      %s3112 = ssub.s32 16, 16
      %3113 = vsyncadd [#allocation4], %s3112
      %s3115 = sshll.u32 [#allocation5], 4
      %s3116 = int_to_ptr.vmem [resolvable:$true] %s3115
      %3118 = dma.vmem_to_hbm [thread:$0]  %s3116, 16, %s3, [#allocation4]
    $region21: #{forward.1} parent=1 // pred_fallthru
      _
    // Predicated region
    $region22: #{forward.1} parent=1 // pred_check
      _
    $region23: #{forward.1} parent=1 // pred_check_branch
      %3120 = sbr.rel (0) target = $region25
    $region24: #{forward.1} parent=1 // pred_region
      %3121 = dma.done [#allocation4], 16
    $region25: #{forward.1} parent=1 // pred_fallthru
      _
    %3122 = vsyncpa [#allocation3], 1
    %3123 = vsyncpa [#allocation4], 1

</llo_original>
